<compile_context>
chip_gen: v6e
topology: v6e:2x2x1
jax: 0.10.0
libtpu: 0.0.40
codegen_flags: <defaults>
</compile_context>

<pallas_src>
import functools

import jax
import jax.numpy as jnp
import numpy as np
from jax.experimental import pallas as pl
from jax.experimental.pallas import tpu as pltpu

_LANE = 128
_HIGHEST = jax.lax.Precision.HIGHEST


def _erf(x):
    # Abramowitz & Stegun 7.1.26 rational approximation, |abs err| <= 1.5e-7.
    p = 0.3275911
    a1, a2, a3, a4, a5 = (0.254829592, -0.284496736, 1.421413741,
                          -1.453152027, 1.061405429)
    ax = jnp.abs(x)
    t = 1.0 / (1.0 + p * ax)
    poly = ((((a5 * t + a4) * t + a3) * t + a2) * t + a1) * t
    y = 1.0 - poly * jnp.exp(-(ax * ax))
    return jnp.where(x < 0.0, -y, y)


def _gelu_exact(x):
    # torch.nn.GELU() default: 0.5 * x * (1 + erf(x / sqrt(2)))
    return 0.5 * x * (1.0 + _erf(x * 0.7071067811865476))


def basic_block_kernel(x_ref, s1_ref, t1_ref, w1_ref, s2_ref, t2_ref, w2_ref,
                       out_ref):
    # x_ref / out_ref: (H, W*C) lane-dense view of one image.
    H = x_ref.shape[0]

    # Row-shift operators, built once and reused by both convs:
    #   (s_up @ h)[r] = h[r-1]  (all-zero row 0  -> zero padding above)
    #   (s_dn @ h)[r] = h[r+1]  (all-zero row H-1 -> zero padding below)
    r = jax.lax.broadcasted_iota(jnp.int32, (H, H), 0)
    c = jax.lax.broadcasted_iota(jnp.int32, (H, H), 1)
    s_up = jnp.where(r == c + 1, 1.0, 0.0)
    s_dn = jnp.where(c == r + 1, 1.0, 0.0)

    def conv3x3(h, w_ref):
        # 3x3 / stride-1 / pad-1 conv on the (H, W*C) slab: kh shifts via the
        # tiny shift matmuls, kw shifts + channel mixing inside the banded
        # weight, all fed to ONE main MXU matmul.
        up = jnp.dot(s_up, h, preferred_element_type=jnp.float32,
                     precision=_HIGHEST)
        dn = jnp.dot(s_dn, h, preferred_element_type=jnp.float32,
                     precision=_HIGHEST)
        patches = jnp.concatenate([up, h, dn], axis=1)        # (H, 3*W*C)
        return jnp.dot(patches, w_ref[...], preferred_element_type=jnp.float32,
                       precision=_HIGHEST)

    # bn1 (folded per-lane scale/shift) + exact GELU
    h = _gelu_exact(x_ref[...] * s1_ref[...] + t1_ref[...])
    # conv1
    h = conv3x3(h, w1_ref)
    # bn2 + GELU
    h = _gelu_exact(h * s2_ref[...] + t2_ref[...])
    # conv2
    h = conv3x3(h, w2_ref)
    # residual add: re-read x_ref here (short live range for the identity)
    out_ref[...] = (h + x_ref[...]).astype(out_ref.dtype)


def basic_block_forward(x_nchw, params):
    """Runs the whole BasicBlock forward as one gridded Pallas call."""
    (s1, t1, w1b, s2, t2, w2b) = params
    N, C, H, W = x_nchw.shape
    WC = W * C
    assert WC % _LANE == 0, "lane-dense layout needs W*C to be a multiple of 128"
    assert w1b.shape == (3 * WC, WC) and w2b.shape == (3 * WC, WC)
    assert s1.shape == (1, WC) and t1.shape == (1, WC)
    assert s2.shape == (1, WC) and t2.shape == (1, WC)

    # NCHW -> NHWC -> (N, H, W*C).  Kept at the wrapper boundary to match the
    # PyTorch module's NCHW contract.
    x = jnp.transpose(x_nchw, (0, 2, 3, 1)).reshape(N, H, WC).astype(jnp.float32)

    img_spec = pl.BlockSpec((None, H, WC), lambda n: (n, 0, 0))
    vec_spec = pl.BlockSpec((1, WC), lambda n: (0, 0))
    wgt_spec = pl.BlockSpec((3 * WC, WC), lambda n: (0, 0))

    out = pl.pallas_call(
        basic_block_kernel,
        out_shape=jax.ShapeDtypeStruct((N, H, WC), jnp.float32),
        grid=(N,),
        in_specs=[img_spec, vec_spec, vec_spec, wgt_spec,
                  vec_spec, vec_spec, wgt_spec],
        out_specs=img_spec,
        compiler_params=pltpu.CompilerParams(
            dimension_semantics=("parallel",)),
    )(x, s1, t1, w1b, s2, t2, w2b)

    out = out.reshape(N, H, W, C)
    return jnp.transpose(out, (0, 3, 1, 2))  # NHWC -> NCHW


def make_band_weights(w_oihw, W):
    """OIHW (Cout,Cin,3,3) -> block-banded (3*W*Cin, W*Cout) matmul weight.

    band[kh*W*Cin + wi*Cin + ci, wo*Cout + co] = w[co, ci, kh, kw]
    with wi = wo + kw - 1 (zero outside the band == zero padding along W).
    """
    Cout, Cin = int(w_oihw.shape[0]), int(w_oihw.shape[1])
    w = np.asarray(jnp.transpose(w_oihw, (2, 3, 1, 0)), np.float32)  # (3,3,Cin,Cout)
    band = np.zeros((3, W * Cin, W * Cout), np.float32)
    for kh in range(3):
        for wo in range(W):
            for kw in range(3):
                wi = wo + kw - 1
                if 0 <= wi < W:
                    band[kh,
                         wi * Cin:(wi + 1) * Cin,
                         wo * Cout:(wo + 1) * Cout] = w[kh, kw]
    return jnp.asarray(band.reshape(3 * W * Cin, W * Cout))


def make_params(key, C, W, eps=1e-5):
    """Deterministic synthetic parameters (BasicBlock.__init__ shapes)."""
    ks = jax.random.split(key, 10)
    # conv weights in PyTorch OIHW layout: (planes, inplanes, 3, 3)
    w1_oihw = jax.random.normal(ks[0], (C, C, 3, 3), jnp.float32) * 0.1
    w2_oihw = jax.random.normal(ks[1], (C, C, 3, 3), jnp.float32) * 0.1
    # BatchNorm params / running stats
    g1 = 1.0 + 0.1 * jax.random.normal(ks[2], (C,), jnp.float32)
    b1 = 0.1 * jax.random.normal(ks[3], (C,), jnp.float32)
    m1 = 0.1 * jax.random.normal(ks[4], (C,), jnp.float32)
    v1 = 0.5 + jnp.abs(jax.random.normal(ks[5], (C,), jnp.float32)) * 0.2
    g2 = 1.0 + 0.1 * jax.random.normal(ks[6], (C,), jnp.float32)
    b2 = 0.1 * jax.random.normal(ks[7], (C,), jnp.float32)
    m2 = 0.1 * jax.random.normal(ks[8], (C,), jnp.float32)
    v2 = 0.5 + jnp.abs(jax.random.normal(ks[9], (C,), jnp.float32)) * 0.2

    def fold(g, b, m, v):
        scale = g / jnp.sqrt(v + eps)
        shift = b - m * scale
        # per-channel -> per-lane for the (H, W*C) layout (lane index = w*C + c)
        return (jnp.tile(scale, W).reshape(1, W * C),
                jnp.tile(shift, W).reshape(1, W * C))

    s1, t1 = fold(g1, b1, m1, v1)
    s2, t2 = fold(g2, b2, m2, v2)

    kernel_params = (s1, t1, make_band_weights(w1_oihw, W),
                     s2, t2, make_band_weights(w2_oihw, W))
    raw = (g1, b1, m1, v1, w1_oihw, g2, b2, m2, v2, w2_oihw)
    return kernel_params, raw


def reference_forward(x_nchw, raw, eps=1e-5):
    (g1, b1, m1, v1, w1, g2, b2, m2, v2, w2) = raw

    def bn(v, g, b, m, var):
        return ((v - m[None, :, None, None])
                / jnp.sqrt(var[None, :, None, None] + eps)
                * g[None, :, None, None] + b[None, :, None, None])

    conv = functools.partial(
        jax.lax.conv_general_dilated, window_strides=(1, 1), padding="SAME",
        dimension_numbers=("NCHW", "OIHW", "NCHW"), precision=_HIGHEST)

    out = bn(x_nchw, g1, b1, m1, v1)
    out = jax.nn.gelu(out, approximate=False)
    out = conv(out, w1)
    out = bn(out, g2, b2, m2, v2)
    out = jax.nn.gelu(out, approximate=False)
    out = conv(out, w2)
    return out + x_nchw


if __name__ == "__main__":
    key = jax.random.PRNGKey(0)
    kx, kp = jax.random.split(key)

    N, C, H, W = 2, 8, 16, 16                     # inplanes == planes == 8, W*C = 128
    x = jax.random.normal(kx, (N, C, H, W), jnp.float32)

    kernel_params, raw_params = make_params(kp, C, W)

    out = basic_block_forward(x, kernel_params)
    out = jax.block_until_ready(out)

    ref = reference_forward(x, raw_params)
    np.testing.assert_allclose(np.asarray(out), np.asarray(ref),
                               rtol=1e-3, atol=1e-3)
    print("KERNEL_OK")
</pallas_src>

<mosaic_0001>
module attributes {stable_mosaic.version = 11 : i64} {
  func.func @basic_block_kernel(%arg0: i32, %arg1: memref<1x16x128xf32, #tpu.memory_space<vmem>>, %arg2: memref<1x128xf32, #tpu.memory_space<vmem>>, %arg3: memref<1x128xf32, #tpu.memory_space<vmem>>, %arg4: memref<384x128xf32, #tpu.memory_space<vmem>>, %arg5: memref<1x128xf32, #tpu.memory_space<vmem>>, %arg6: memref<1x128xf32, #tpu.memory_space<vmem>>, %arg7: memref<384x128xf32, #tpu.memory_space<vmem>>, %arg8: memref<1x16x128xf32, #tpu.memory_space<vmem>>) attributes {dimension_semantics = [#tpu.dimension_semantics<parallel>], iteration_bounds = array<i64: 2>, scalar_prefetch = 0 : i64, scratch_operands = 0 : i64, tpu.core_type = #tpu.core_type<tc>, window_params = [{transform_indices = @transform_0, window_bounds = array<i64: 1, 16, 128>}, {pipeline_mode = #tpu.pipeline_mode<synchronous>, transform_indices = @transform_1, window_bounds = array<i64: 1, 128>}, {pipeline_mode = #tpu.pipeline_mode<synchronous>, transform_indices = @transform_2, window_bounds = array<i64: 1, 128>}, {pipeline_mode = #tpu.pipeline_mode<synchronous>, transform_indices = @transform_3, window_bounds = array<i64: 384, 128>}, {pipeline_mode = #tpu.pipeline_mode<synchronous>, transform_indices = @transform_4, window_bounds = array<i64: 1, 128>}, {pipeline_mode = #tpu.pipeline_mode<synchronous>, transform_indices = @transform_5, window_bounds = array<i64: 1, 128>}, {pipeline_mode = #tpu.pipeline_mode<synchronous>, transform_indices = @transform_6, window_bounds = array<i64: 384, 128>}, {transform_indices = @transform_7, window_bounds = array<i64: 1, 16, 128>}]} {
    %0 = tpu.iota {dimensions = array<i32: 0>} : vector<16x16xi32>
    %1 = tpu.iota {dimensions = array<i32: 1>} : vector<16x16xi32>
    %c1_i32 = arith.constant 1 : i32
    %2 = vector.broadcast %c1_i32 : i32 to vector<16x16xi32>
    %3 = arith.addi %1, %2 : vector<16x16xi32>
    %4 = arith.cmpi eq, %0, %3 : vector<16x16xi32>
    %cst = arith.constant 1.000000e+00 : f32
    %cst_0 = arith.constant 0.000000e+00 : f32
    %5 = vector.broadcast %cst : f32 to vector<16x16xf32>
    %6 = vector.broadcast %cst_0 : f32 to vector<16x16xf32>
    %7 = arith.select %4, %5, %6 : vector<16x16xi1>, vector<16x16xf32>
    %c1_i32_1 = arith.constant 1 : i32
    %8 = vector.broadcast %c1_i32_1 : i32 to vector<16x16xi32>
    %9 = arith.addi %0, %8 : vector<16x16xi32>
    %10 = arith.cmpi eq, %1, %9 : vector<16x16xi32>
    %cst_2 = arith.constant 1.000000e+00 : f32
    %cst_3 = arith.constant 0.000000e+00 : f32
    %11 = vector.broadcast %cst_2 : f32 to vector<16x16xf32>
    %12 = vector.broadcast %cst_3 : f32 to vector<16x16xf32>
    %13 = arith.select %10, %11, %12 : vector<16x16xi1>, vector<16x16xf32>
    %c0 = arith.constant 0 : index
    %c0_4 = arith.constant 0 : index
    %c0_5 = arith.constant 0 : index
    %14 = vector.load %arg1[%c0, %c0_4, %c0_5] : memref<1x16x128xf32, #tpu.memory_space<vmem>>, vector<1x16x128xf32>
    %15 = vector.shape_cast %14 : vector<1x16x128xf32> to vector<16x128xf32>
    %c0_6 = arith.constant 0 : index
    %c0_7 = arith.constant 0 : index
    %16 = vector.load %arg2[%c0_6, %c0_7] : memref<1x128xf32, #tpu.memory_space<vmem>>, vector<1x128xf32>
    %17 = vector.broadcast %16 : vector<1x128xf32> to vector<16x128xf32>
    %18 = arith.mulf %15, %17 : vector<16x128xf32>
    %c0_8 = arith.constant 0 : index
    %c0_9 = arith.constant 0 : index
    %19 = vector.load %arg3[%c0_8, %c0_9] : memref<1x128xf32, #tpu.memory_space<vmem>>, vector<1x128xf32>
    %20 = vector.broadcast %19 : vector<1x128xf32> to vector<16x128xf32>
    %21 = arith.addf %18, %20 : vector<16x128xf32>
    %cst_10 = arith.constant 5.000000e-01 : f32
    %22 = vector.broadcast %cst_10 : f32 to vector<16x128xf32>
    %23 = arith.mulf %22, %21 : vector<16x128xf32>
    %cst_11 = arith.constant 0.707106769 : f32
    %24 = vector.broadcast %cst_11 : f32 to vector<16x128xf32>
    %25 = arith.mulf %21, %24 : vector<16x128xf32>
    %26 = math.absf %25 : vector<16x128xf32>
    %cst_12 = arith.constant 0.327591091 : f32
    %27 = vector.broadcast %cst_12 : f32 to vector<16x128xf32>
    %28 = arith.mulf %27, %26 : vector<16x128xf32>
    %cst_13 = arith.constant 1.000000e+00 : f32
    %29 = vector.broadcast %cst_13 : f32 to vector<16x128xf32>
    %30 = arith.addf %29, %28 : vector<16x128xf32>
    %cst_14 = arith.constant 1.000000e+00 : f32
    %31 = vector.broadcast %cst_14 : f32 to vector<16x128xf32>
    %32 = arith.divf %31, %30 : vector<16x128xf32>
    %cst_15 = arith.constant 1.06140542 : f32
    %33 = vector.broadcast %cst_15 : f32 to vector<16x128xf32>
    %34 = arith.mulf %33, %32 : vector<16x128xf32>
    %cst_16 = arith.constant -1.45315206 : f32
    %35 = vector.broadcast %cst_16 : f32 to vector<16x128xf32>
    %36 = arith.addf %34, %35 : vector<16x128xf32>
    %37 = arith.mulf %36, %32 : vector<16x128xf32>
    %cst_17 = arith.constant 1.42141378 : f32
    %38 = vector.broadcast %cst_17 : f32 to vector<16x128xf32>
    %39 = arith.addf %37, %38 : vector<16x128xf32>
    %40 = arith.mulf %39, %32 : vector<16x128xf32>
    %cst_18 = arith.constant -0.284496725 : f32
    %41 = vector.broadcast %cst_18 : f32 to vector<16x128xf32>
    %42 = arith.addf %40, %41 : vector<16x128xf32>
    %43 = arith.mulf %42, %32 : vector<16x128xf32>
    %cst_19 = arith.constant 0.254829586 : f32
    %44 = vector.broadcast %cst_19 : f32 to vector<16x128xf32>
    %45 = arith.addf %43, %44 : vector<16x128xf32>
    %46 = arith.mulf %45, %32 : vector<16x128xf32>
    %47 = arith.mulf %26, %26 : vector<16x128xf32>
    %cst_20 = arith.constant 0.000000e+00 : f32
    %48 = vector.broadcast %cst_20 : f32 to vector<16x128xf32>
    %49 = arith.subf %48, %47 : vector<16x128xf32>
    %50 = math.exp %49 : vector<16x128xf32>
    %51 = arith.mulf %46, %50 : vector<16x128xf32>
    %cst_21 = arith.constant 1.000000e+00 : f32
    %52 = vector.broadcast %cst_21 : f32 to vector<16x128xf32>
    %53 = arith.subf %52, %51 : vector<16x128xf32>
    %cst_22 = arith.constant 0.000000e+00 : f32
    %54 = vector.broadcast %cst_22 : f32 to vector<16x128xf32>
    %55 = arith.cmpf olt, %25, %54 : vector<16x128xf32>
    %cst_23 = arith.constant 0.000000e+00 : f32
    %56 = vector.broadcast %cst_23 : f32 to vector<16x128xf32>
    %57 = arith.subf %56, %53 : vector<16x128xf32>
    %58 = arith.select %55, %57, %53 : vector<16x128xi1>, vector<16x128xf32>
    %cst_24 = arith.constant 1.000000e+00 : f32
    %59 = vector.broadcast %cst_24 : f32 to vector<16x128xf32>
    %60 = arith.addf %59, %58 : vector<16x128xf32>
    %61 = arith.mulf %23, %60 : vector<16x128xf32>
    %cst_25 = arith.constant dense<0.000000e+00> : vector<16x128xf32>
    %62 = tpu.matmul %7, %61, %cst_25 {dimension_numbers = #tpu.dot_dimension_numbers<[1], [0], [0], [1], [0, 0, 1, 1], [], []>, precision = #tpu.contract_precision<fp32>} : vector<16x16xf32>, vector<16x128xf32>, vector<16x128xf32> -> vector<16x128xf32>
    %cst_26 = arith.constant dense<0.000000e+00> : vector<16x128xf32>
    %63 = tpu.matmul %13, %61, %cst_26 {dimension_numbers = #tpu.dot_dimension_numbers<[1], [0], [0], [1], [0, 0, 1, 1], [], []>, precision = #tpu.contract_precision<fp32>} : vector<16x16xf32>, vector<16x128xf32>, vector<16x128xf32> -> vector<16x128xf32>
    %64 = tpu.concatenate %62, %61, %63 in 1 : vector<16x128xf32>, vector<16x128xf32>, vector<16x128xf32> -> vector<16x384xf32>
    %c0_27 = arith.constant 0 : index
    %c0_28 = arith.constant 0 : index
    %65 = vector.load %arg4[%c0_27, %c0_28] : memref<384x128xf32, #tpu.memory_space<vmem>>, vector<384x128xf32>
    %cst_29 = arith.constant dense<0.000000e+00> : vector<16x128xf32>
    %66 = tpu.matmul %64, %65, %cst_29 {dimension_numbers = #tpu.dot_dimension_numbers<[1], [0], [0], [1], [0, 0, 1, 1], [], []>, precision = #tpu.contract_precision<fp32>} : vector<16x384xf32>, vector<384x128xf32>, vector<16x128xf32> -> vector<16x128xf32>
    %c0_30 = arith.constant 0 : index
    %c0_31 = arith.constant 0 : index
    %67 = vector.load %arg5[%c0_30, %c0_31] : memref<1x128xf32, #tpu.memory_space<vmem>>, vector<1x128xf32>
    %68 = vector.broadcast %67 : vector<1x128xf32> to vector<16x128xf32>
    %69 = arith.mulf %66, %68 : vector<16x128xf32>
    %c0_32 = arith.constant 0 : index
    %c0_33 = arith.constant 0 : index
    %70 = vector.load %arg6[%c0_32, %c0_33] : memref<1x128xf32, #tpu.memory_space<vmem>>, vector<1x128xf32>
    %71 = vector.broadcast %70 : vector<1x128xf32> to vector<16x128xf32>
    %72 = arith.addf %69, %71 : vector<16x128xf32>
    %cst_34 = arith.constant 5.000000e-01 : f32
    %73 = vector.broadcast %cst_34 : f32 to vector<16x128xf32>
    %74 = arith.mulf %73, %72 : vector<16x128xf32>
    %cst_35 = arith.constant 0.707106769 : f32
    %75 = vector.broadcast %cst_35 : f32 to vector<16x128xf32>
    %76 = arith.mulf %72, %75 : vector<16x128xf32>
    %77 = math.absf %76 : vector<16x128xf32>
    %cst_36 = arith.constant 0.327591091 : f32
    %78 = vector.broadcast %cst_36 : f32 to vector<16x128xf32>
    %79 = arith.mulf %78, %77 : vector<16x128xf32>
    %cst_37 = arith.constant 1.000000e+00 : f32
    %80 = vector.broadcast %cst_37 : f32 to vector<16x128xf32>
    %81 = arith.addf %80, %79 : vector<16x128xf32>
    %cst_38 = arith.constant 1.000000e+00 : f32
    %82 = vector.broadcast %cst_38 : f32 to vector<16x128xf32>
    %83 = arith.divf %82, %81 : vector<16x128xf32>
    %cst_39 = arith.constant 1.06140542 : f32
    %84 = vector.broadcast %cst_39 : f32 to vector<16x128xf32>
    %85 = arith.mulf %84, %83 : vector<16x128xf32>
    %cst_40 = arith.constant -1.45315206 : f32
    %86 = vector.broadcast %cst_40 : f32 to vector<16x128xf32>
    %87 = arith.addf %85, %86 : vector<16x128xf32>
    %88 = arith.mulf %87, %83 : vector<16x128xf32>
    %cst_41 = arith.constant 1.42141378 : f32
    %89 = vector.broadcast %cst_41 : f32 to vector<16x128xf32>
    %90 = arith.addf %88, %89 : vector<16x128xf32>
    %91 = arith.mulf %90, %83 : vector<16x128xf32>
    %cst_42 = arith.constant -0.284496725 : f32
    %92 = vector.broadcast %cst_42 : f32 to vector<16x128xf32>
    %93 = arith.addf %91, %92 : vector<16x128xf32>
    %94 = arith.mulf %93, %83 : vector<16x128xf32>
    %cst_43 = arith.constant 0.254829586 : f32
    %95 = vector.broadcast %cst_43 : f32 to vector<16x128xf32>
    %96 = arith.addf %94, %95 : vector<16x128xf32>
    %97 = arith.mulf %96, %83 : vector<16x128xf32>
    %98 = arith.mulf %77, %77 : vector<16x128xf32>
    %cst_44 = arith.constant 0.000000e+00 : f32
    %99 = vector.broadcast %cst_44 : f32 to vector<16x128xf32>
    %100 = arith.subf %99, %98 : vector<16x128xf32>
    %101 = math.exp %100 : vector<16x128xf32>
    %102 = arith.mulf %97, %101 : vector<16x128xf32>
    %cst_45 = arith.constant 1.000000e+00 : f32
    %103 = vector.broadcast %cst_45 : f32 to vector<16x128xf32>
    %104 = arith.subf %103, %102 : vector<16x128xf32>
    %cst_46 = arith.constant 0.000000e+00 : f32
    %105 = vector.broadcast %cst_46 : f32 to vector<16x128xf32>
    %106 = arith.cmpf olt, %76, %105 : vector<16x128xf32>
    %cst_47 = arith.constant 0.000000e+00 : f32
    %107 = vector.broadcast %cst_47 : f32 to vector<16x128xf32>
    %108 = arith.subf %107, %104 : vector<16x128xf32>
    %109 = arith.select %106, %108, %104 : vector<16x128xi1>, vector<16x128xf32>
    %cst_48 = arith.constant 1.000000e+00 : f32
    %110 = vector.broadcast %cst_48 : f32 to vector<16x128xf32>
    %111 = arith.addf %110, %109 : vector<16x128xf32>
    %112 = arith.mulf %74, %111 : vector<16x128xf32>
    %cst_49 = arith.constant dense<0.000000e+00> : vector<16x128xf32>
    %113 = tpu.matmul %7, %112, %cst_49 {dimension_numbers = #tpu.dot_dimension_numbers<[1], [0], [0], [1], [0, 0, 1, 1], [], []>, precision = #tpu.contract_precision<fp32>} : vector<16x16xf32>, vector<16x128xf32>, vector<16x128xf32> -> vector<16x128xf32>
    %cst_50 = arith.constant dense<0.000000e+00> : vector<16x128xf32>
    %114 = tpu.matmul %13, %112, %cst_50 {dimension_numbers = #tpu.dot_dimension_numbers<[1], [0], [0], [1], [0, 0, 1, 1], [], []>, precision = #tpu.contract_precision<fp32>} : vector<16x16xf32>, vector<16x128xf32>, vector<16x128xf32> -> vector<16x128xf32>
    %115 = tpu.concatenate %113, %112, %114 in 1 : vector<16x128xf32>, vector<16x128xf32>, vector<16x128xf32> -> vector<16x384xf32>
    %c0_51 = arith.constant 0 : index
    %c0_52 = arith.constant 0 : index
    %116 = vector.load %arg7[%c0_51, %c0_52] : memref<384x128xf32, #tpu.memory_space<vmem>>, vector<384x128xf32>
    %cst_53 = arith.constant dense<0.000000e+00> : vector<16x128xf32>
    %117 = tpu.matmul %115, %116, %cst_53 {dimension_numbers = #tpu.dot_dimension_numbers<[1], [0], [0], [1], [0, 0, 1, 1], [], []>, precision = #tpu.contract_precision<fp32>} : vector<16x384xf32>, vector<384x128xf32>, vector<16x128xf32> -> vector<16x128xf32>
    %c0_54 = arith.constant 0 : index
    %c0_55 = arith.constant 0 : index
    %c0_56 = arith.constant 0 : index
    %118 = vector.load %arg1[%c0_54, %c0_55, %c0_56] : memref<1x16x128xf32, #tpu.memory_space<vmem>>, vector<1x16x128xf32>
    %119 = vector.shape_cast %118 : vector<1x16x128xf32> to vector<16x128xf32>
    %120 = arith.addf %117, %119 : vector<16x128xf32>
    %c0_57 = arith.constant 0 : index
    %c0_58 = arith.constant 0 : index
    %c0_59 = arith.constant 0 : index
    %121 = vector.load %arg8[%c0_57, %c0_58, %c0_59] : memref<1x16x128xf32, #tpu.memory_space<vmem>>, vector<1x16x128xf32>
    %122 = vector.shape_cast %121 : vector<1x16x128xf32> to vector<16x128xf32>
    %123 = vector.shape_cast %120 : vector<16x128xf32> to vector<1x16x128xf32>
    tpu.vector_store %arg8[%c0_57, %c0_58, %c0_59], %123 {strides = array<i32>} : memref<1x16x128xf32, #tpu.memory_space<vmem>>, vector<1x16x128xf32>,
    return
  }
  func.func @transform_0(%arg0: i32) -> (i32, i32, i32) {
    %c0_i32 = arith.constant 0 : i32
    %c0_i32_0 = arith.constant 0 : i32
    %c0_i32_1 = arith.constant 0 : i32
    return %arg0, %c0_i32, %c0_i32_0 : i32, i32, i32
  }
  func.func @transform_1(%arg0: i32) -> (i32, i32) {
    %c0_i32 = arith.constant 0 : i32
    %c0_i32_0 = arith.constant 0 : i32
    %c0_i32_1 = arith.constant 0 : i32
    return %c0_i32, %c0_i32_0 : i32, i32
  }
  func.func @transform_2(%arg0: i32) -> (i32, i32) {
    %c0_i32 = arith.constant 0 : i32
    %c0_i32_0 = arith.constant 0 : i32
    %c0_i32_1 = arith.constant 0 : i32
    return %c0_i32, %c0_i32_0 : i32, i32
  }
  func.func @transform_3(%arg0: i32) -> (i32, i32) {
    %c0_i32 = arith.constant 0 : i32
    %c0_i32_0 = arith.constant 0 : i32
    %c0_i32_1 = arith.constant 0 : i32
    return %c0_i32, %c0_i32_0 : i32, i32
  }
  func.func @transform_4(%arg0: i32) -> (i32, i32) {
    %c0_i32 = arith.constant 0 : i32
    %c0_i32_0 = arith.constant 0 : i32
    %c0_i32_1 = arith.constant 0 : i32
    return %c0_i32, %c0_i32_0 : i32, i32
  }
  func.func @transform_5(%arg0: i32) -> (i32, i32) {
    %c0_i32 = arith.constant 0 : i32
    %c0_i32_0 = arith.constant 0 : i32
    %c0_i32_1 = arith.constant 0 : i32
    return %c0_i32, %c0_i32_0 : i32, i32
  }
  func.func @transform_6(%arg0: i32) -> (i32, i32) {
    %c0_i32 = arith.constant 0 : i32
    %c0_i32_0 = arith.constant 0 : i32
    %c0_i32_1 = arith.constant 0 : i32
    return %c0_i32, %c0_i32_0 : i32, i32
  }
  func.func @transform_7(%arg0: i32) -> (i32, i32, i32) {
    %c0_i32 = arith.constant 0 : i32
    %c0_i32_0 = arith.constant 0 : i32
    %c0_i32_1 = arith.constant 0 : i32
    return %arg0, %c0_i32, %c0_i32_0 : i32, i32, i32
  }
}

</mosaic_0001>

<llo_original>
// kernel: tpu_custom_call.1
$region0: #{tpu_custom_call.1}
  #allocation0 [shape = 'u32[]', space=smem, size = 0x4, offset = 0x4, fixed_abs, tag = 'smem constant byte address 0x4 - core index']
  #allocation1 [shape = 'u32[144,128]{1,0:T(1,128)}', space=vmem, size = 0x12000, scoped, tag = 'internal scratch']
  %s0 = inlined_call_operand.hbm [shape: f32[2,16,128], index: 0, kind: input, shape index: {}]
  %s1 = inlined_call_operand.vmem [shape: f32[1,128], index: 1, kind: input, shape index: {}]
  %s2 = inlined_call_operand.vmem [shape: f32[1,128], index: 2, kind: input, shape index: {}]
  %s3 = inlined_call_operand.hbm [shape: f32[384,128], index: 3, kind: input, shape index: {}]
  %s4 = inlined_call_operand.vmem [shape: f32[1,128], index: 4, kind: input, shape index: {}]
  %s5 = inlined_call_operand.vmem [shape: f32[1,128], index: 5, kind: input, shape index: {}]
  %s6 = inlined_call_operand.hbm [shape: f32[384,128], index: 6, kind: input, shape index: {}]
  %s7 = inlined_call_operand.hbm [shape: f32[2,16,128], index: 7, kind: output, shape index: {}]
  %s8 = sld [smem:[#allocation0]]
  $region73: #{tpu_custom_call.1} parent=0
    _
  %s10 = ssub.s32 1, %s8
  %s11 = scalar_select 0, %s10, %s8
  $region1: #{tpu_custom_call.1} parent=0
    #allocation2 [shape = 'u8[16384]{0}', space=vmem, size = 0x4000, scoped, tag = 'input window, operand 0']
    #allocation3 [shape = 's32[2]{0}', space=sflag, size = 0x8, scoped, tag = 'scoped memory for tpu_custom_call.1']
    #allocation4 [shape = 's32[2]{0}', space=sflag, size = 0x8, scoped, tag = 'scoped memory for tpu_custom_call.1']
    #allocation5 [shape = 'u8[196608]{0}', space=vmem, size = 0x30000, scoped, tag = 'input window, operand 3, single buffered']
    #allocation6 [shape = 's32[1]{0}', space=sflag, size = 0x4, scoped, tag = 'scoped memory for tpu_custom_call.1']
    #allocation7 [shape = 'u8[196608]{0}', space=vmem, size = 0x30000, scoped, tag = 'input window, operand 6, single buffered']
    #allocation8 [shape = 'u8[16384]{0}', space=vmem, size = 0x4000, scoped, tag = 'output window, operand 0']
    %12 = vsyncpa [#allocation3], 0
    %s13 = scalar_lea.sflag [#allocation3], 1
    %14 = vsyncpa %s13, 0
    %15 = vsyncpa [#allocation6], 0
    %16 = vsyncpa [#allocation4], 0
    %s17 = scalar_lea.sflag [#allocation4], 1
    %18 = vsyncpa %s17, 0
    loop: start=0, step=1, limit=4
    $region2: #{tpu_custom_call.1} parent=1 // loop_pre_header
      _
    $region3: #{tpu_custom_call.1} parent=1 // loop_header
      %s20 = sphi 0, %s24
      %p21 = scmp.ge.s32.totalorder %s20, 4
      %s30 = sphi 0, %s32
      %s33 = sphi 0, %s30
      %s34 = sphi 0, %s33
      %s50 = sphi 0, %s34
      %s54 = sphi 0, %s54
      %s56 = sphi 0, %s54
      %s57 = sphi 0, %s56
      %s71 = sphi 0, %s57
      %s75 = sphi 0, %s75
      %s77 = sphi 0, %s75
      %s78 = sphi 0, %s77
      %s92 = sphi 0, %s78
      %s96 = sphi 0, %s96
      %s98 = sphi 0, %s96
      %s99 = sphi 0, %s98
      %s113 = sphi 0, %s99
      %s117 = sphi 0, %s117
      %s119 = sphi 0, %s117
      %s120 = sphi 0, %s119
      %s134 = sphi 0, %s120
      %s138 = sphi 0, %s138
      %s140 = sphi 0, %s138
      %s141 = sphi 0, %s140
      %s155 = sphi 0, %s141
      %s159 = sphi 0, %s159
      %s161 = sphi 0, %s159
      %s162 = sphi 0, %s161
      %s176 = sphi 0, %s162
      %s182 = sphi 0, %s184
      %s185 = sphi 0, %s182
      %s186 = sphi 0, %s185
      %s202 = sphi 0, %s186
    $region4: #{tpu_custom_call.1} parent=1 // loop_header_branch
      %23 = sbr.rel (%p21) target = $region8
    $region5: #{tpu_custom_call.1} parent=1 // loop_body
      %s25 = ssub.s32 %s20, 1
      %s26 = ssub.s32 %s20, 2
      %s27 = sadd.s32 %s20, 1
      %s28 = ssub.s32 %s20, %s27
      %p29 = scmp.eq.s32.totalorder %s28, 0
      %s31 = sadd.s32 %s30, 1
      %s32 = scalar_select %p29, %s30, %s31
      %p35 = pneg %p29
      %p36 = scmp.eq.s32.totalorder %s20, 1
      %p37 = por %p35, %p36
      %p38 = scmp.ne.s32.totalorder %s30, %s33
      %p39 = scmp.eq.s32.totalorder %s20, 0
      %p40 = por %p38, %p39
      %p41 = scmp.ne.s32.totalorder %s30, %s33
      %p42 = scmp.eq.s32.totalorder %s25, 1
      %p43 = por %p41, %p42
      %p44 = scmp.ne.s32.totalorder %s33, %s34
      %p45 = scmp.eq.s32.totalorder %s25, 0
      %p46 = por %p44, %p45
      %p47 = scmp.ne.s32.totalorder %s33, %s34
      %p48 = scmp.eq.s32.totalorder %s26, 1
      %p49 = por %p47, %p48
      %p51 = scmp.ne.s32.totalorder %s34, %s50
      %p52 = scmp.eq.s32.totalorder %s26, 0
      %p53 = por %p51, %p52
      %s55 = sadd.s32 %s54, 1
      %p58 = scmp.eq.s32.totalorder %s20, 1
      %p59 = scmp.ne.s32.totalorder %s54, %s56
      %p60 = scmp.eq.s32.totalorder %s20, 0
      %p61 = por %p59, %p60
      %p62 = scmp.ne.s32.totalorder %s54, %s56
      %p63 = scmp.eq.s32.totalorder %s25, 1
      %p64 = por %p62, %p63
      %p65 = scmp.ne.s32.totalorder %s56, %s57
      %p66 = scmp.eq.s32.totalorder %s25, 0
      %p67 = por %p65, %p66
      %p68 = scmp.ne.s32.totalorder %s56, %s57
      %p69 = scmp.eq.s32.totalorder %s26, 1
      %p70 = por %p68, %p69
      %p72 = scmp.ne.s32.totalorder %s57, %s71
      %p73 = scmp.eq.s32.totalorder %s26, 0
      %p74 = por %p72, %p73
      %s76 = sadd.s32 %s75, 1
      %p79 = scmp.eq.s32.totalorder %s20, 1
      %p80 = scmp.ne.s32.totalorder %s75, %s77
      %p81 = scmp.eq.s32.totalorder %s20, 0
      %p82 = por %p80, %p81
      %p83 = scmp.ne.s32.totalorder %s75, %s77
      %p84 = scmp.eq.s32.totalorder %s25, 1
      %p85 = por %p83, %p84
      %p86 = scmp.ne.s32.totalorder %s77, %s78
      %p87 = scmp.eq.s32.totalorder %s25, 0
      %p88 = por %p86, %p87
      %p89 = scmp.ne.s32.totalorder %s77, %s78
      %p90 = scmp.eq.s32.totalorder %s26, 1
      %p91 = por %p89, %p90
      %p93 = scmp.ne.s32.totalorder %s78, %s92
      %p94 = scmp.eq.s32.totalorder %s26, 0
      %p95 = por %p93, %p94
      %s97 = sadd.s32 %s96, 1
      %p100 = scmp.eq.s32.totalorder %s20, 1
      %p101 = scmp.ne.s32.totalorder %s96, %s98
      %p102 = scmp.eq.s32.totalorder %s20, 0
      %p103 = por %p101, %p102
      %p104 = scmp.ne.s32.totalorder %s96, %s98
      %p105 = scmp.eq.s32.totalorder %s25, 1
      %p106 = por %p104, %p105
      %p107 = scmp.ne.s32.totalorder %s98, %s99
      %p108 = scmp.eq.s32.totalorder %s25, 0
      %p109 = por %p107, %p108
      %p110 = scmp.ne.s32.totalorder %s98, %s99
      %p111 = scmp.eq.s32.totalorder %s26, 1
      %p112 = por %p110, %p111
      %p114 = scmp.ne.s32.totalorder %s99, %s113
      %p115 = scmp.eq.s32.totalorder %s26, 0
      %p116 = por %p114, %p115
      %s118 = sadd.s32 %s117, 1
      %p121 = scmp.eq.s32.totalorder %s20, 1
      %p122 = scmp.ne.s32.totalorder %s117, %s119
      %p123 = scmp.eq.s32.totalorder %s20, 0
      %p124 = por %p122, %p123
      %p125 = scmp.ne.s32.totalorder %s117, %s119
      %p126 = scmp.eq.s32.totalorder %s25, 1
      %p127 = por %p125, %p126
      %p128 = scmp.ne.s32.totalorder %s119, %s120
      %p129 = scmp.eq.s32.totalorder %s25, 0
      %p130 = por %p128, %p129
      %p131 = scmp.ne.s32.totalorder %s119, %s120
      %p132 = scmp.eq.s32.totalorder %s26, 1
      %p133 = por %p131, %p132
      %p135 = scmp.ne.s32.totalorder %s120, %s134
      %p136 = scmp.eq.s32.totalorder %s26, 0
      %p137 = por %p135, %p136
      %s139 = sadd.s32 %s138, 1
      %p142 = scmp.eq.s32.totalorder %s20, 1
      %p143 = scmp.ne.s32.totalorder %s138, %s140
      %p144 = scmp.eq.s32.totalorder %s20, 0
      %p145 = por %p143, %p144
      %p146 = scmp.ne.s32.totalorder %s138, %s140
      %p147 = scmp.eq.s32.totalorder %s25, 1
      %p148 = por %p146, %p147
      %p149 = scmp.ne.s32.totalorder %s140, %s141
      %p150 = scmp.eq.s32.totalorder %s25, 0
      %p151 = por %p149, %p150
      %p152 = scmp.ne.s32.totalorder %s140, %s141
      %p153 = scmp.eq.s32.totalorder %s26, 1
      %p154 = por %p152, %p153
      %p156 = scmp.ne.s32.totalorder %s141, %s155
      %p157 = scmp.eq.s32.totalorder %s26, 0
      %p158 = por %p156, %p157
      %s160 = sadd.s32 %s159, 1
      %p163 = scmp.eq.s32.totalorder %s20, 1
      %p164 = scmp.ne.s32.totalorder %s159, %s161
      %p165 = scmp.eq.s32.totalorder %s20, 0
      %p166 = por %p164, %p165
      %p167 = scmp.ne.s32.totalorder %s159, %s161
      %p168 = scmp.eq.s32.totalorder %s25, 1
      %p169 = por %p167, %p168
      %p170 = scmp.ne.s32.totalorder %s161, %s162
      %p171 = scmp.eq.s32.totalorder %s25, 0
      %p172 = por %p170, %p171
      %p173 = scmp.ne.s32.totalorder %s161, %s162
      %p174 = scmp.eq.s32.totalorder %s26, 1
      %p175 = por %p173, %p174
      %p177 = scmp.ne.s32.totalorder %s162, %s176
      %p178 = scmp.eq.s32.totalorder %s26, 0
      %p179 = por %p177, %p178
      %s180 = ssub.s32 %s20, %s27
      %p181 = scmp.eq.s32.totalorder %s180, 0
      %s183 = sadd.s32 %s182, 1
      %s184 = scalar_select %p181, %s182, %s183
      %p187 = pneg %p181
      %p188 = scmp.eq.s32.totalorder %s20, 1
      %p189 = por %p187, %p188
      %p190 = scmp.ne.s32.totalorder %s182, %s185
      %p191 = scmp.eq.s32.totalorder %s20, 0
      %p192 = por %p190, %p191
      %p193 = scmp.ne.s32.totalorder %s182, %s185
      %p194 = scmp.eq.s32.totalorder %s25, 1
      %p195 = por %p193, %p194
      %p196 = scmp.ne.s32.totalorder %s185, %s186
      %p197 = scmp.eq.s32.totalorder %s25, 0
      %p198 = por %p196, %p197
      %p199 = scmp.ne.s32.totalorder %s185, %s186
      %p200 = scmp.eq.s32.totalorder %s26, 1
      %p201 = por %p199, %p200
      %p203 = scmp.ne.s32.totalorder %s186, %s202
      %p204 = scmp.eq.s32.totalorder %s26, 0
      %p205 = por %p203, %p204
      %p206 = scmp.le.s32.totalorder 1, %s20
      %p207 = scmp.lt.s32.totalorder %s20, 3
      %p208 = pnand %p206, %p207
      %p209 = pneg %p208
      // Predicated region
      $region9: #{tpu_custom_call.1} parent=5 // pred_check
        _
      $region10: #{tpu_custom_call.1} parent=5 // pred_check_branch
        %211 = sbr.rel (%p208) target = $region12
      $region11: #{tpu_custom_call.1} parent=5 // pred_region
        %s212 = ssub.s32 %s20, 1
        // Predicated region
        $region13: #{tpu_custom_call.1} parent=11 // pred_check
          %p213 = pneg %p67
        $region14: #{tpu_custom_call.1} parent=11 // pred_check_branch
          %215 = sbr.rel (%p213) target = $region16
        $region15: #{tpu_custom_call.1} parent=11 // pred_region
          _
        $region16: #{tpu_custom_call.1} parent=11 // pred_fallthru
          _
        // Predicated region
        $region17: #{tpu_custom_call.1} parent=11 // pred_check
          %p216 = pneg %p88
        $region18: #{tpu_custom_call.1} parent=11 // pred_check_branch
          %218 = sbr.rel (%p216) target = $region20
        $region19: #{tpu_custom_call.1} parent=11 // pred_region
          _
        $region20: #{tpu_custom_call.1} parent=11 // pred_fallthru
          _
        // Predicated region
        $region21: #{tpu_custom_call.1} parent=11 // pred_check
          %p219 = pneg %p109
        $region22: #{tpu_custom_call.1} parent=11 // pred_check_branch
          %221 = sbr.rel (%p219) target = $region24
        $region23: #{tpu_custom_call.1} parent=11 // pred_region
          %s223 = ssub.s32 6144, 6144
          %224 = vsyncadd [#allocation6], %s223
          %s225 = sshll.u32 [#allocation5], 4
          %s226 = int_to_ptr.vmem [resolvable:$true] %s225
          %231 = dma.hbm_to_vmem [thread:$0]  %s3, 6144, %s226, [#allocation6], 128, 128, 8
        $region24: #{tpu_custom_call.1} parent=11 // pred_fallthru
          _
        // Predicated region
        $region25: #{tpu_custom_call.1} parent=11 // pred_check
          %p232 = pneg %p130
        $region26: #{tpu_custom_call.1} parent=11 // pred_check_branch
          %234 = sbr.rel (%p232) target = $region28
        $region27: #{tpu_custom_call.1} parent=11 // pred_region
          _
        $region28: #{tpu_custom_call.1} parent=11 // pred_fallthru
          _
        // Predicated region
        $region29: #{tpu_custom_call.1} parent=11 // pred_check
          %p235 = pneg %p151
        $region30: #{tpu_custom_call.1} parent=11 // pred_check_branch
          %237 = sbr.rel (%p235) target = $region32
        $region31: #{tpu_custom_call.1} parent=11 // pred_region
          _
        $region32: #{tpu_custom_call.1} parent=11 // pred_fallthru
          _
        // Predicated region
        $region33: #{tpu_custom_call.1} parent=11 // pred_check
          %p238 = pneg %p172
        $region34: #{tpu_custom_call.1} parent=11 // pred_check_branch
          %240 = sbr.rel (%p238) target = $region36
        $region35: #{tpu_custom_call.1} parent=11 // pred_region
          %s242 = ssub.s32 6144, 6144
          %243 = vsyncadd [#allocation6], %s242
          %s244 = sshll.u32 [#allocation7], 4
          %s245 = int_to_ptr.vmem [resolvable:$true] %s244
          %250 = dma.hbm_to_vmem [thread:$0]  %s6, 6144, %s245, [#allocation6], 128, 128, 8
        $region36: #{tpu_custom_call.1} parent=11 // pred_fallthru
          _
      $region12: #{tpu_custom_call.1} parent=5 // pred_fallthru
        _
      %p251 = scmp.lt.s32.totalorder %s20, 2
      // Predicated region
      $region37: #{tpu_custom_call.1} parent=5 // pred_check
        %p252 = pneg %p251
      $region38: #{tpu_custom_call.1} parent=5 // pred_check_branch
        %254 = sbr.rel (%p252) target = $region40
      $region39: #{tpu_custom_call.1} parent=5 // pred_region
        // Predicated region
        $region41: #{tpu_custom_call.1} parent=39 // pred_check
          %p255 = pneg %p40
        $region42: #{tpu_custom_call.1} parent=39 // pred_check_branch
          %257 = sbr.rel (%p255) target = $region44
        $region43: #{tpu_custom_call.1} parent=39 // pred_region
          %s258 = sand.u32 %s30, 1
          %s259 = scalar_lea.sflag [#allocation3], %s258
          %s260 = sand.u32 %s30, 1
          %s261 = smul.addr %s260, 16
          %s262 = scalar_lea.vmem [#allocation2], %s261
          %s264 = ssub.s32 256, 256
          %265 = vsyncadd %s259, %s264
          %s266 = smul.addr %s20, 2
          %s267 = smul.addr %s266, 128
          %s268 = scalar_lea.hbm %s0, %s267
          %s269 = sshll.u32 %s262, 4
          %s270 = int_to_ptr.vmem [resolvable:$true] %s269
          %275 = dma.hbm_to_vmem [thread:$0]  %s268, 256, %s270, %s259, 128, 128, 8
        $region44: #{tpu_custom_call.1} parent=39 // pred_fallthru
          _
      $region40: #{tpu_custom_call.1} parent=5 // pred_fallthru
        _
      %p276 = scmp.le.s32.totalorder 1, %s20
      %p277 = scmp.lt.s32.totalorder %s20, 3
      %p278 = pnand %p276, %p277
      %p279 = pneg %p278
      // Predicated region
      $region45: #{tpu_custom_call.1} parent=5 // pred_check
        _
      $region46: #{tpu_custom_call.1} parent=5 // pred_check_branch
        %281 = sbr.rel (%p278) target = $region48
      $region47: #{tpu_custom_call.1} parent=5 // pred_region
        %s282 = ssub.s32 %s20, 1
        %s283 = sand.u32 %s33, 1
        %s284 = scalar_lea.sflag [#allocation3], %s283
        %s285 = sand.u32 %s33, 1
        %s286 = smul.addr %s285, 16
        %s287 = scalar_lea.vmem [#allocation2], %s286
        // Predicated region
        $region49: #{tpu_custom_call.1} parent=47 // pred_check
          %p288 = pneg %p46
        $region50: #{tpu_custom_call.1} parent=47 // pred_check_branch
          %290 = sbr.rel (%p288) target = $region52
        $region51: #{tpu_custom_call.1} parent=47 // pred_region
          %291 = dma.done %s284, 256
        $region52: #{tpu_custom_call.1} parent=47 // pred_fallthru
          _
        // Predicated region
        $region53: #{tpu_custom_call.1} parent=47 // pred_check
          %p292 = pneg %p109
        $region54: #{tpu_custom_call.1} parent=47 // pred_check_branch
          %294 = sbr.rel (%p292) target = $region56
        $region55: #{tpu_custom_call.1} parent=47 // pred_region
          %295 = dma.done [#allocation6], 6144
        $region56: #{tpu_custom_call.1} parent=47 // pred_fallthru
          _
        // Predicated region
        $region57: #{tpu_custom_call.1} parent=47 // pred_check
          %p296 = pneg %p172
        $region58: #{tpu_custom_call.1} parent=47 // pred_check_branch
          %298 = sbr.rel (%p296) target = $region60
        $region59: #{tpu_custom_call.1} parent=47 // pred_region
          %299 = dma.done [#allocation6], 6144
        $region60: #{tpu_custom_call.1} parent=47 // pred_fallthru
          _
        %s300 = sand.u32 %s33, 1
        %s301 = scalar_lea.sflag [#allocation3], %s300
        %s302 = sand.u32 %s33, 1
        %s303 = smul.addr %s302, 16
        %s304 = scalar_lea.vmem [#allocation2], %s303
        %p305 = pneg %p46
        %p306 = pneg %p43
        %p307 = pneg %p67
        %p308 = pneg %p64
        %p309 = pneg %p88
        %p310 = pneg %p85
        %p311 = pneg %p109
        %p312 = pneg %p106
        %p313 = pneg %p130
        %p314 = pneg %p127
        %p315 = pneg %p151
        %p316 = pneg %p148
        %p317 = pneg %p172
        %p318 = pneg %p169
        %p319 = pneg %p198
        %p320 = pneg %p195
        %s321 = sand.u32 %s185, 1
        %s322 = scalar_lea.sflag [#allocation4], %s321
        %s323 = sand.u32 %s185, 1
        %s324 = smul.addr %s323, 16
        %s325 = scalar_lea.vmem [#allocation8], %s324
        %v326 = vlaneseq
        %v327 = vshrl.u32 %v326, 7
        %v328 = vadd.s32 %v327, 8
        %v329 = vlaneseq
        %v330 = vand.u32 %v329, 127
        %v331 = vadd.s32 %v330, 1
        %vm332 = vcmp.eq.s32.totalorder %v327, %v331
        %vm333 = vcmp.eq.s32.totalorder %v328, %v331
        %v334 = vsel %vm332, 1.0, 0.0
        %v335 = vsel %vm333, 1.0, 0.0
        %v336 = vadd.s32 %v327, 1
        %v337 = vadd.s32 %v328, 1
        %vm338 = vcmp.eq.s32.totalorder %v330, %v336
        %vm339 = vcmp.eq.s32.totalorder %v330, %v337
        %v340 = vsel %vm338, 1.0, 0.0
        %v341 = vsel %vm339, 1.0, 0.0
        %v342 = vld [vmem:[%s287] sm:$0xff]
        %v343 = vld [vmem:[%s287 + $0x8] sm:$0xff]
        %v344 = vld [vmem:[%s1] sm:$0x1]
        %v346 = vlaneseq
        %v347 = vshrl.u32 %v346, 7
        %v348 = vsub.s32 0, %v347
        %v349 = vrot.slane %v344, %v348
        %v351 = vmul.f32 %v342, %v349
        %v352 = vmul.f32 %v343, %v349
        %v353 = vld [vmem:[%s2] sm:$0x1]
        %v355 = vlaneseq
        %v356 = vshrl.u32 %v355, 7
        %v357 = vsub.s32 0, %v356
        %v358 = vrot.slane %v353, %v357
        %v360 = vadd.f32 %v351, %v358
        %v361 = vadd.f32 %v352, %v358
        %v362 = vmul.f32 %v360, 0.5
        %v363 = vmul.f32 %v361, 0.5
        %v364 = vmul.f32 %v360, 0.70710677
        %v365 = vmul.f32 %v361, 0.70710677
        %v366 = vand.u32 2147483647, %v364
        %v367 = vand.u32 2147483647, %v365
        %v368 = vmul.f32 %v366, 0.3275911
        %v369 = vmul.f32 %v367, 0.3275911
        %v370 = vadd.f32 %v368, 1.0
        %v371 = vadd.f32 %v369, 1.0
        %v372 = vrcp.pop %v370
        %v373 = vmul.f32 1.0, %v372
        %v374 = vrcp.pop %v371
        %v375 = vmul.f32 1.0, %v374
        %v376 = vmul.f32 %v373, 1.0614054
        %v377 = vmul.f32 %v375, 1.0614054
        %v378 = vadd.f32 %v376, -1.4531521
        %v379 = vadd.f32 %v377, -1.4531521
        %v380 = vmul.f32 %v378, %v373
        %v381 = vmul.f32 %v379, %v375
        %v382 = vadd.f32 %v380, 1.4214138
        %v383 = vadd.f32 %v381, 1.4214138
        %v384 = vmul.f32 %v382, %v373
        %v385 = vmul.f32 %v383, %v375
        %v386 = vadd.f32 %v384, -0.28449672
        %v387 = vadd.f32 %v385, -0.28449672
        %v388 = vmul.f32 %v386, %v373
        %v389 = vmul.f32 %v387, %v375
        %v390 = vadd.f32 %v388, 0.2548296
        %v391 = vadd.f32 %v389, 0.2548296
        %v392 = vmul.f32 %v390, %v373
        %v393 = vmul.f32 %v391, %v375
        %v394 = vmul.f32 %v366, %v366
        %v395 = vmul.f32 %v367, %v367
        %v396 = vsub.f32 0.0, %v394
        %v397 = vsub.f32 0.0, %v395
        %v398 = vmul.f32 %v396, 1.442695
        %v399 = vpow.pop %v398
        %v400 = vmul.f32 %v397, 1.442695
        %v401 = vpow.pop %v400
        %v402 = vmul.f32 %v392, %v399
        %v403 = vmul.f32 %v393, %v401
        %v404 = vsub.f32 1.0, %v402
        %v405 = vsub.f32 1.0, %v403
        %vm406 = vcmp.lt.f32.partialorder %v364, 0.0
        %vm407 = vcmp.lt.f32.partialorder %v365, 0.0
        %v408 = vsub.f32 0.0, %v404
        %v409 = vsub.f32 0.0, %v405
        %v410 = vsel %vm406, %v408, %v404
        %v411 = vsel %vm407, %v409, %v405
        %v412 = vadd.f32 %v410, 1.0
        %v413 = vadd.f32 %v411, 1.0
        %v414 = vmul.f32 %v362, %v412
        %v415 = vmul.f32 %v363, %v413
        %vm416 = vcmask 130048
        %v418 = vsel %vm416, %v334, 0
        %v421 = vsel %vm416, %v335, 0
        %423 = vmatprep.subr.mxu0 0.0
        %424 = vmatpush1.msra.mxu0 0.0
        %425 = vmatprep.subr.mxu0 0.0
        %426 = vmatpush1.msra.mxu0 0.0
        %427 = vmatprep.subr.mxu0 0.0
        %428 = vmatpush1.msra.mxu0 0.0
        %429 = vmatprep.subr.mxu0 0.0
        %430 = vmatpush1.msra.mxu0 0.0
        %431 = vmatprep.subr.mxu0 0.0
        %432 = vmatpush1.msra.mxu0 0.0
        %433 = vmatprep.subr.mxu0 0.0
        %434 = vmatpush1.msra.mxu0 0.0
        %435 = vmatprep.subr.mxu0 0.0
        %436 = vmatpush1.msra.mxu0 0.0
        %437 = vmatprep.subr.mxu0 0.0
        %438 = vmatpush1.msra.mxu0 0.0
        %439 = vmatprep.subr.mxu0 0.0
        %440 = vmatpush1.msra.mxu0 0.0
        %441 = vmatprep.subr.mxu0 0.0
        %442 = vmatpush1.msra.mxu0 0.0
        %443 = vmatprep.subr.mxu0 0.0
        %444 = vmatpush1.msra.mxu0 0.0
        %445 = vmatprep.subr.mxu0 0.0
        %446 = vmatpush1.msra.mxu0 0.0
        %447 = vmatprep.subr.mxu0 0.0
        %448 = vmatpush1.msra.mxu0 0.0
        %449 = vmatprep.subr.mxu0 0.0
        %450 = vmatpush1.msra.mxu0 0.0
        %451 = vmatprep.subr.mxu0 0.0
        %v452 = vand.u32 %v415, 4294901760
        %453 = vmatpush1.msra.mxu0 %v452
        %454 = vmatprep.subr.mxu0 0.0
        %v455 = vand.u32 %v414, 4294901760
        %456 = vmatpush1.msra.mxu0 %v455
        %457 = vmatprep.subr.mxu0 0.0
        %458 = vmatpush2.msra.mxu0 0.0
        %459 = vmatprep.subr.mxu0 0.0
        %460 = vmatpush2.msra.mxu0 0.0
        %461 = vmatprep.subr.mxu0 0.0
        %462 = vmatpush2.msra.mxu0 0.0
        %463 = vmatprep.subr.mxu0 0.0
        %464 = vmatpush2.msra.mxu0 0.0
        %465 = vmatprep.subr.mxu0 0.0
        %466 = vmatpush2.msra.mxu0 0.0
        %467 = vmatprep.subr.mxu0 0.0
        %468 = vmatpush2.msra.mxu0 0.0
        %469 = vmatprep.subr.mxu0 0.0
        %470 = vmatpush2.msra.mxu0 0.0
        %471 = vmatprep.subr.mxu0 0.0
        %472 = vmatpush2.msra.mxu0 0.0
        %473 = vmatprep.subr.mxu0 0.0
        %474 = vmatpush2.msra.mxu0 0.0
        %475 = vmatprep.subr.mxu0 0.0
        %476 = vmatpush2.msra.mxu0 0.0
        %477 = vmatprep.subr.mxu0 0.0
        %478 = vmatpush2.msra.mxu0 0.0
        %479 = vmatprep.subr.mxu0 0.0
        %480 = vmatpush2.msra.mxu0 0.0
        %481 = vmatprep.subr.mxu0 0.0
        %482 = vmatpush2.msra.mxu0 0.0
        %483 = vmatprep.subr.mxu0 0.0
        %484 = vmatpush2.msra.mxu0 0.0
        %485 = vmatprep.subr.mxu0 0.0
        %486 = vmatpush2.msra.mxu0 0.0
        %487 = vmatprep.subr.mxu0 0.0
        %488 = vmatpush2.msra.mxu0 0.0
        %489 = vmatprep.mubr.f32.mxu0 0.0
        %v490 = vand.u32 %v418, 4294901760
        %v491 = vsub.f32 %v418, %v490
        %v492 = vand.u32 %v491, 4294901760
        %v493 = vsub.f32 %v491, %v492
        %v494 = vand.u32 %v493, 4294901760
        %495 = vmatmul.mubr.f32.gmra.mxu0 %v494
        %v496 = vpop.f32.mrf.mxu0
        %v497 = vadd.f32 0.0, %v496
        %v498 = vpop.f32.mrf.mxu0
        %499 = vmatprep.mubr.f32.mxu0 0.0
        %v500 = vand.u32 %v421, 4294901760
        %v501 = vsub.f32 %v421, %v500
        %v502 = vand.u32 %v501, 4294901760
        %v503 = vsub.f32 %v501, %v502
        %v504 = vand.u32 %v503, 4294901760
        %505 = vmatmul.mubr.f32.gmra.mxu0 %v504
        %v506 = vpop.f32.mrf.mxu0
        %v507 = vadd.f32 0.0, %v506
        %v508 = vpop.f32.mrf.mxu0
        %509 = vdwg.mxu0
        %510 = vmatprep.subr.mxu0 0.0
        %511 = vmatpush1.msra.mxu0 0.0
        %512 = vmatprep.subr.mxu0 0.0
        %513 = vmatpush1.msra.mxu0 0.0
        %514 = vmatprep.subr.mxu0 0.0
        %515 = vmatpush1.msra.mxu0 0.0
        %516 = vmatprep.subr.mxu0 0.0
        %517 = vmatpush1.msra.mxu0 0.0
        %518 = vmatprep.subr.mxu0 0.0
        %519 = vmatpush1.msra.mxu0 0.0
        %520 = vmatprep.subr.mxu0 0.0
        %521 = vmatpush1.msra.mxu0 0.0
        %522 = vmatprep.subr.mxu0 0.0
        %523 = vmatpush1.msra.mxu0 0.0
        %524 = vmatprep.subr.mxu0 0.0
        %525 = vmatpush1.msra.mxu0 0.0
        %526 = vmatprep.subr.mxu0 0.0
        %527 = vmatpush1.msra.mxu0 0.0
        %528 = vmatprep.subr.mxu0 0.0
        %529 = vmatpush1.msra.mxu0 0.0
        %530 = vmatprep.subr.mxu0 0.0
        %531 = vmatpush1.msra.mxu0 0.0
        %532 = vmatprep.subr.mxu0 0.0
        %533 = vmatpush1.msra.mxu0 0.0
        %534 = vmatprep.subr.mxu0 0.0
        %535 = vmatpush1.msra.mxu0 0.0
        %536 = vmatprep.subr.mxu0 0.0
        %537 = vmatpush1.msra.mxu0 0.0
        %538 = vmatprep.subr.mxu0 0.0
        %v539 = vand.u32 %v415, 4294901760
        %v540 = vsub.f32 %v415, %v539
        %v541 = vand.u32 %v540, 4294901760
        %v542 = vsub.f32 %v540, %v541
        %v543 = vand.u32 %v542, 4294901760
        %544 = vmatpush1.msra.mxu0 %v543
        %545 = vmatprep.subr.mxu0 0.0
        %v546 = vand.u32 %v414, 4294901760
        %v547 = vsub.f32 %v414, %v546
        %v548 = vand.u32 %v547, 4294901760
        %v549 = vsub.f32 %v547, %v548
        %v550 = vand.u32 %v549, 4294901760
        %551 = vmatpush1.msra.mxu0 %v550
        %552 = vmatprep.subr.mxu0 0.0
        %553 = vmatpush2.msra.mxu0 0.0
        %554 = vmatprep.subr.mxu0 0.0
        %555 = vmatpush2.msra.mxu0 0.0
        %556 = vmatprep.subr.mxu0 0.0
        %557 = vmatpush2.msra.mxu0 0.0
        %558 = vmatprep.subr.mxu0 0.0
        %559 = vmatpush2.msra.mxu0 0.0
        %560 = vmatprep.subr.mxu0 0.0
        %561 = vmatpush2.msra.mxu0 0.0
        %562 = vmatprep.subr.mxu0 0.0
        %563 = vmatpush2.msra.mxu0 0.0
        %564 = vmatprep.subr.mxu0 0.0
        %565 = vmatpush2.msra.mxu0 0.0
        %566 = vmatprep.subr.mxu0 0.0
        %567 = vmatpush2.msra.mxu0 0.0
        %568 = vmatprep.subr.mxu0 0.0
        %569 = vmatpush2.msra.mxu0 0.0
        %570 = vmatprep.subr.mxu0 0.0
        %571 = vmatpush2.msra.mxu0 0.0
        %572 = vmatprep.subr.mxu0 0.0
        %573 = vmatpush2.msra.mxu0 0.0
        %574 = vmatprep.subr.mxu0 0.0
        %575 = vmatpush2.msra.mxu0 0.0
        %576 = vmatprep.subr.mxu0 0.0
        %577 = vmatpush2.msra.mxu0 0.0
        %578 = vmatprep.subr.mxu0 0.0
        %579 = vmatpush2.msra.mxu0 0.0
        %580 = vmatprep.subr.mxu0 0.0
        %581 = vmatpush2.msra.mxu0 0.0
        %582 = vmatprep.subr.mxu0 0.0
        %583 = vmatpush2.msra.mxu0 0.0
        %584 = vmatprep.mubr.f32.mxu0 0.0
        %v585 = vand.u32 %v418, 4294901760
        %586 = vmatmul.mubr.f32.gmra.mxu0 %v585
        %v587 = vpop.f32.mrf.mxu0
        %v588 = vadd.f32 %v497, %v587
        %v589 = vpop.f32.mrf.mxu0
        %590 = vmatprep.mubr.f32.mxu0 0.0
        %v591 = vand.u32 %v421, 4294901760
        %592 = vmatmul.mubr.f32.gmra.mxu0 %v591
        %v593 = vpop.f32.mrf.mxu0
        %v594 = vadd.f32 %v507, %v593
        %v595 = vpop.f32.mrf.mxu0
        %596 = vdwg.mxu0
        %597 = vmatprep.subr.mxu0 0.0
        %598 = vmatpush1.msra.mxu0 0.0
        %599 = vmatprep.subr.mxu0 0.0
        %600 = vmatpush1.msra.mxu0 0.0
        %601 = vmatprep.subr.mxu0 0.0
        %602 = vmatpush1.msra.mxu0 0.0
        %603 = vmatprep.subr.mxu0 0.0
        %604 = vmatpush1.msra.mxu0 0.0
        %605 = vmatprep.subr.mxu0 0.0
        %606 = vmatpush1.msra.mxu0 0.0
        %607 = vmatprep.subr.mxu0 0.0
        %608 = vmatpush1.msra.mxu0 0.0
        %609 = vmatprep.subr.mxu0 0.0
        %610 = vmatpush1.msra.mxu0 0.0
        %611 = vmatprep.subr.mxu0 0.0
        %612 = vmatpush1.msra.mxu0 0.0
        %613 = vmatprep.subr.mxu0 0.0
        %614 = vmatpush1.msra.mxu0 0.0
        %615 = vmatprep.subr.mxu0 0.0
        %616 = vmatpush1.msra.mxu0 0.0
        %617 = vmatprep.subr.mxu0 0.0
        %618 = vmatpush1.msra.mxu0 0.0
        %619 = vmatprep.subr.mxu0 0.0
        %620 = vmatpush1.msra.mxu0 0.0
        %621 = vmatprep.subr.mxu0 0.0
        %622 = vmatpush1.msra.mxu0 0.0
        %623 = vmatprep.subr.mxu0 0.0
        %624 = vmatpush1.msra.mxu0 0.0
        %625 = vmatprep.subr.mxu0 0.0
        %v626 = vand.u32 %v415, 4294901760
        %v627 = vsub.f32 %v415, %v626
        %628 = vmatpush1.msra.mxu0 %v627
        %629 = vmatprep.subr.mxu0 0.0
        %v630 = vand.u32 %v414, 4294901760
        %v631 = vsub.f32 %v414, %v630
        %632 = vmatpush1.msra.mxu0 %v631
        %633 = vmatprep.subr.mxu0 0.0
        %634 = vmatpush2.msra.mxu0 0.0
        %635 = vmatprep.subr.mxu0 0.0
        %636 = vmatpush2.msra.mxu0 0.0
        %637 = vmatprep.subr.mxu0 0.0
        %638 = vmatpush2.msra.mxu0 0.0
        %639 = vmatprep.subr.mxu0 0.0
        %640 = vmatpush2.msra.mxu0 0.0
        %641 = vmatprep.subr.mxu0 0.0
        %642 = vmatpush2.msra.mxu0 0.0
        %643 = vmatprep.subr.mxu0 0.0
        %644 = vmatpush2.msra.mxu0 0.0
        %645 = vmatprep.subr.mxu0 0.0
        %646 = vmatpush2.msra.mxu0 0.0
        %647 = vmatprep.subr.mxu0 0.0
        %648 = vmatpush2.msra.mxu0 0.0
        %649 = vmatprep.subr.mxu0 0.0
        %650 = vmatpush2.msra.mxu0 0.0
        %651 = vmatprep.subr.mxu0 0.0
        %652 = vmatpush2.msra.mxu0 0.0
        %653 = vmatprep.subr.mxu0 0.0
        %654 = vmatpush2.msra.mxu0 0.0
        %655 = vmatprep.subr.mxu0 0.0
        %656 = vmatpush2.msra.mxu0 0.0
        %657 = vmatprep.subr.mxu0 0.0
        %658 = vmatpush2.msra.mxu0 0.0
        %659 = vmatprep.subr.mxu0 0.0
        %660 = vmatpush2.msra.mxu0 0.0
        %661 = vmatprep.subr.mxu0 0.0
        %662 = vmatpush2.msra.mxu0 0.0
        %663 = vmatprep.subr.mxu0 0.0
        %664 = vmatpush2.msra.mxu0 0.0
        %665 = vmatprep.mubr.f32.mxu0 0.0
        %v666 = vand.u32 %v418, 4294901760
        %v667 = vsub.f32 %v418, %v666
        %668 = vmatmul.mubr.f32.gmra.mxu0 %v667
        %v669 = vpop.f32.mrf.mxu0
        %v670 = vadd.f32 %v588, %v669
        %v671 = vpop.f32.mrf.mxu0
        %672 = vmatprep.mubr.f32.mxu0 0.0
        %v673 = vand.u32 %v421, 4294901760
        %v674 = vsub.f32 %v421, %v673
        %675 = vmatmul.mubr.f32.gmra.mxu0 %v674
        %v676 = vpop.f32.mrf.mxu0
        %v677 = vadd.f32 %v594, %v676
        %v678 = vpop.f32.mrf.mxu0
        %679 = vdwg.mxu0
        %680 = vmatprep.subr.mxu0 0.0
        %681 = vmatpush1.msra.mxu0 0.0
        %682 = vmatprep.subr.mxu0 0.0
        %683 = vmatpush1.msra.mxu0 0.0
        %684 = vmatprep.subr.mxu0 0.0
        %685 = vmatpush1.msra.mxu0 0.0
        %686 = vmatprep.subr.mxu0 0.0
        %687 = vmatpush1.msra.mxu0 0.0
        %688 = vmatprep.subr.mxu0 0.0
        %689 = vmatpush1.msra.mxu0 0.0
        %690 = vmatprep.subr.mxu0 0.0
        %691 = vmatpush1.msra.mxu0 0.0
        %692 = vmatprep.subr.mxu0 0.0
        %693 = vmatpush1.msra.mxu0 0.0
        %694 = vmatprep.subr.mxu0 0.0
        %695 = vmatpush1.msra.mxu0 0.0
        %696 = vmatprep.subr.mxu0 0.0
        %697 = vmatpush1.msra.mxu0 0.0
        %698 = vmatprep.subr.mxu0 0.0
        %699 = vmatpush1.msra.mxu0 0.0
        %700 = vmatprep.subr.mxu0 0.0
        %701 = vmatpush1.msra.mxu0 0.0
        %702 = vmatprep.subr.mxu0 0.0
        %703 = vmatpush1.msra.mxu0 0.0
        %704 = vmatprep.subr.mxu0 0.0
        %705 = vmatpush1.msra.mxu0 0.0
        %706 = vmatprep.subr.mxu0 0.0
        %707 = vmatpush1.msra.mxu0 0.0
        %708 = vmatprep.subr.mxu0 0.0
        %v709 = vand.u32 %v415, 4294901760
        %710 = vmatpush1.msra.mxu0 %v709
        %711 = vmatprep.subr.mxu0 0.0
        %v712 = vand.u32 %v414, 4294901760
        %713 = vmatpush1.msra.mxu0 %v712
        %714 = vmatprep.subr.mxu0 0.0
        %715 = vmatpush2.msra.mxu0 0.0
        %716 = vmatprep.subr.mxu0 0.0
        %717 = vmatpush2.msra.mxu0 0.0
        %718 = vmatprep.subr.mxu0 0.0
        %719 = vmatpush2.msra.mxu0 0.0
        %720 = vmatprep.subr.mxu0 0.0
        %721 = vmatpush2.msra.mxu0 0.0
        %722 = vmatprep.subr.mxu0 0.0
        %723 = vmatpush2.msra.mxu0 0.0
        %724 = vmatprep.subr.mxu0 0.0
        %725 = vmatpush2.msra.mxu0 0.0
        %726 = vmatprep.subr.mxu0 0.0
        %727 = vmatpush2.msra.mxu0 0.0
        %728 = vmatprep.subr.mxu0 0.0
        %729 = vmatpush2.msra.mxu0 0.0
        %730 = vmatprep.subr.mxu0 0.0
        %731 = vmatpush2.msra.mxu0 0.0
        %732 = vmatprep.subr.mxu0 0.0
        %733 = vmatpush2.msra.mxu0 0.0
        %734 = vmatprep.subr.mxu0 0.0
        %735 = vmatpush2.msra.mxu0 0.0
        %736 = vmatprep.subr.mxu0 0.0
        %737 = vmatpush2.msra.mxu0 0.0
        %738 = vmatprep.subr.mxu0 0.0
        %739 = vmatpush2.msra.mxu0 0.0
        %740 = vmatprep.subr.mxu0 0.0
        %741 = vmatpush2.msra.mxu0 0.0
        %742 = vmatprep.subr.mxu0 0.0
        %743 = vmatpush2.msra.mxu0 0.0
        %744 = vmatprep.subr.mxu0 0.0
        %745 = vmatpush2.msra.mxu0 0.0
        %746 = vmatprep.mubr.f32.mxu0 0.0
        %v747 = vand.u32 %v418, 4294901760
        %v748 = vsub.f32 %v418, %v747
        %v749 = vand.u32 %v748, 4294901760
        %750 = vmatmul.mubr.f32.gmra.mxu0 %v749
        %v751 = vpop.f32.mrf.mxu0
        %v752 = vadd.f32 %v670, %v751
        %v753 = vpop.f32.mrf.mxu0
        %754 = vmatprep.mubr.f32.mxu0 0.0
        %v755 = vand.u32 %v421, 4294901760
        %v756 = vsub.f32 %v421, %v755
        %v757 = vand.u32 %v756, 4294901760
        %758 = vmatmul.mubr.f32.gmra.mxu0 %v757
        %v759 = vpop.f32.mrf.mxu0
        %v760 = vadd.f32 %v677, %v759
        %v761 = vpop.f32.mrf.mxu0
        %762 = vdwg.mxu0
        %763 = vmatprep.subr.mxu0 0.0
        %764 = vmatpush1.msra.mxu0 0.0
        %765 = vmatprep.subr.mxu0 0.0
        %766 = vmatpush1.msra.mxu0 0.0
        %767 = vmatprep.subr.mxu0 0.0
        %768 = vmatpush1.msra.mxu0 0.0
        %769 = vmatprep.subr.mxu0 0.0
        %770 = vmatpush1.msra.mxu0 0.0
        %771 = vmatprep.subr.mxu0 0.0
        %772 = vmatpush1.msra.mxu0 0.0
        %773 = vmatprep.subr.mxu0 0.0
        %774 = vmatpush1.msra.mxu0 0.0
        %775 = vmatprep.subr.mxu0 0.0
        %776 = vmatpush1.msra.mxu0 0.0
        %777 = vmatprep.subr.mxu0 0.0
        %778 = vmatpush1.msra.mxu0 0.0
        %779 = vmatprep.subr.mxu0 0.0
        %780 = vmatpush1.msra.mxu0 0.0
        %781 = vmatprep.subr.mxu0 0.0
        %782 = vmatpush1.msra.mxu0 0.0
        %783 = vmatprep.subr.mxu0 0.0
        %784 = vmatpush1.msra.mxu0 0.0
        %785 = vmatprep.subr.mxu0 0.0
        %786 = vmatpush1.msra.mxu0 0.0
        %787 = vmatprep.subr.mxu0 0.0
        %788 = vmatpush1.msra.mxu0 0.0
        %789 = vmatprep.subr.mxu0 0.0
        %790 = vmatpush1.msra.mxu0 0.0
        %791 = vmatprep.subr.mxu0 0.0
        %v792 = vand.u32 %v415, 4294901760
        %v793 = vsub.f32 %v415, %v792
        %v794 = vand.u32 %v793, 4294901760
        %795 = vmatpush1.msra.mxu0 %v794
        %796 = vmatprep.subr.mxu0 0.0
        %v797 = vand.u32 %v414, 4294901760
        %v798 = vsub.f32 %v414, %v797
        %v799 = vand.u32 %v798, 4294901760
        %800 = vmatpush1.msra.mxu0 %v799
        %801 = vmatprep.subr.mxu0 0.0
        %802 = vmatpush2.msra.mxu0 0.0
        %803 = vmatprep.subr.mxu0 0.0
        %804 = vmatpush2.msra.mxu0 0.0
        %805 = vmatprep.subr.mxu0 0.0
        %806 = vmatpush2.msra.mxu0 0.0
        %807 = vmatprep.subr.mxu0 0.0
        %808 = vmatpush2.msra.mxu0 0.0
        %809 = vmatprep.subr.mxu0 0.0
        %810 = vmatpush2.msra.mxu0 0.0
        %811 = vmatprep.subr.mxu0 0.0
        %812 = vmatpush2.msra.mxu0 0.0
        %813 = vmatprep.subr.mxu0 0.0
        %814 = vmatpush2.msra.mxu0 0.0
        %815 = vmatprep.subr.mxu0 0.0
        %816 = vmatpush2.msra.mxu0 0.0
        %817 = vmatprep.subr.mxu0 0.0
        %818 = vmatpush2.msra.mxu0 0.0
        %819 = vmatprep.subr.mxu0 0.0
        %820 = vmatpush2.msra.mxu0 0.0
        %821 = vmatprep.subr.mxu0 0.0
        %822 = vmatpush2.msra.mxu0 0.0
        %823 = vmatprep.subr.mxu0 0.0
        %824 = vmatpush2.msra.mxu0 0.0
        %825 = vmatprep.subr.mxu0 0.0
        %826 = vmatpush2.msra.mxu0 0.0
        %827 = vmatprep.subr.mxu0 0.0
        %828 = vmatpush2.msra.mxu0 0.0
        %829 = vmatprep.subr.mxu0 0.0
        %830 = vmatpush2.msra.mxu0 0.0
        %831 = vmatprep.subr.mxu0 0.0
        %832 = vmatpush2.msra.mxu0 0.0
        %833 = vmatprep.mubr.f32.mxu0 0.0
        %v834 = vand.u32 %v418, 4294901760
        %835 = vmatmul.mubr.f32.gmra.mxu0 %v834
        %v836 = vpop.f32.mrf.mxu0
        %v837 = vadd.f32 %v752, %v836
        %v838 = vpop.f32.mrf.mxu0
        %839 = vmatprep.mubr.f32.mxu0 0.0
        %v840 = vand.u32 %v421, 4294901760
        %841 = vmatmul.mubr.f32.gmra.mxu0 %v840
        %v842 = vpop.f32.mrf.mxu0
        %v843 = vadd.f32 %v760, %v842
        %v844 = vpop.f32.mrf.mxu0
        %845 = vdwg.mxu0
        %846 = vmatprep.subr.mxu0 0.0
        %847 = vmatpush1.msra.mxu0 0.0
        %848 = vmatprep.subr.mxu0 0.0
        %849 = vmatpush1.msra.mxu0 0.0
        %850 = vmatprep.subr.mxu0 0.0
        %851 = vmatpush1.msra.mxu0 0.0
        %852 = vmatprep.subr.mxu0 0.0
        %853 = vmatpush1.msra.mxu0 0.0
        %854 = vmatprep.subr.mxu0 0.0
        %855 = vmatpush1.msra.mxu0 0.0
        %856 = vmatprep.subr.mxu0 0.0
        %857 = vmatpush1.msra.mxu0 0.0
        %858 = vmatprep.subr.mxu0 0.0
        %859 = vmatpush1.msra.mxu0 0.0
        %860 = vmatprep.subr.mxu0 0.0
        %861 = vmatpush1.msra.mxu0 0.0
        %862 = vmatprep.subr.mxu0 0.0
        %863 = vmatpush1.msra.mxu0 0.0
        %864 = vmatprep.subr.mxu0 0.0
        %865 = vmatpush1.msra.mxu0 0.0
        %866 = vmatprep.subr.mxu0 0.0
        %867 = vmatpush1.msra.mxu0 0.0
        %868 = vmatprep.subr.mxu0 0.0
        %869 = vmatpush1.msra.mxu0 0.0
        %870 = vmatprep.subr.mxu0 0.0
        %871 = vmatpush1.msra.mxu0 0.0
        %872 = vmatprep.subr.mxu0 0.0
        %873 = vmatpush1.msra.mxu0 0.0
        %874 = vmatprep.subr.mxu0 0.0
        %v875 = vand.u32 %v415, 4294901760
        %876 = vmatpush1.msra.mxu0 %v875
        %877 = vmatprep.subr.mxu0 0.0
        %v878 = vand.u32 %v414, 4294901760
        %879 = vmatpush1.msra.mxu0 %v878
        %880 = vmatprep.subr.mxu0 0.0
        %881 = vmatpush2.msra.mxu0 0.0
        %882 = vmatprep.subr.mxu0 0.0
        %883 = vmatpush2.msra.mxu0 0.0
        %884 = vmatprep.subr.mxu0 0.0
        %885 = vmatpush2.msra.mxu0 0.0
        %886 = vmatprep.subr.mxu0 0.0
        %887 = vmatpush2.msra.mxu0 0.0
        %888 = vmatprep.subr.mxu0 0.0
        %889 = vmatpush2.msra.mxu0 0.0
        %890 = vmatprep.subr.mxu0 0.0
        %891 = vmatpush2.msra.mxu0 0.0
        %892 = vmatprep.subr.mxu0 0.0
        %893 = vmatpush2.msra.mxu0 0.0
        %894 = vmatprep.subr.mxu0 0.0
        %895 = vmatpush2.msra.mxu0 0.0
        %896 = vmatprep.subr.mxu0 0.0
        %897 = vmatpush2.msra.mxu0 0.0
        %898 = vmatprep.subr.mxu0 0.0
        %899 = vmatpush2.msra.mxu0 0.0
        %900 = vmatprep.subr.mxu0 0.0
        %901 = vmatpush2.msra.mxu0 0.0
        %902 = vmatprep.subr.mxu0 0.0
        %903 = vmatpush2.msra.mxu0 0.0
        %904 = vmatprep.subr.mxu0 0.0
        %905 = vmatpush2.msra.mxu0 0.0
        %906 = vmatprep.subr.mxu0 0.0
        %907 = vmatpush2.msra.mxu0 0.0
        %908 = vmatprep.subr.mxu0 0.0
        %909 = vmatpush2.msra.mxu0 0.0
        %910 = vmatprep.subr.mxu0 0.0
        %911 = vmatpush2.msra.mxu0 0.0
        %912 = vmatprep.mubr.f32.mxu0 0.0
        %v913 = vand.u32 %v418, 4294901760
        %914 = vmatmul.mubr.f32.gmra.mxu0 %v913
        %v915 = vpop.f32.mrf.mxu0
        %v916 = vadd.f32 %v837, %v915
        %v917 = vpop.f32.mrf.mxu0
        %918 = vmatprep.mubr.f32.mxu0 0.0
        %v919 = vand.u32 %v421, 4294901760
        %920 = vmatmul.mubr.f32.gmra.mxu0 %v919
        %v921 = vpop.f32.mrf.mxu0
        %v922 = vadd.f32 %v843, %v921
        %v923 = vpop.f32.mrf.mxu0
        %924 = vdwg.mxu0
        %v926 = vsel %vm416, %v340, 0
        %v929 = vsel %vm416, %v341, 0
        %931 = vmatprep.subr.mxu0 0.0
        %932 = vmatpush1.msra.mxu0 0.0
        %933 = vmatprep.subr.mxu0 0.0
        %934 = vmatpush1.msra.mxu0 0.0
        %935 = vmatprep.subr.mxu0 0.0
        %936 = vmatpush1.msra.mxu0 0.0
        %937 = vmatprep.subr.mxu0 0.0
        %938 = vmatpush1.msra.mxu0 0.0
        %939 = vmatprep.subr.mxu0 0.0
        %940 = vmatpush1.msra.mxu0 0.0
        %941 = vmatprep.subr.mxu0 0.0
        %942 = vmatpush1.msra.mxu0 0.0
        %943 = vmatprep.subr.mxu0 0.0
        %944 = vmatpush1.msra.mxu0 0.0
        %945 = vmatprep.subr.mxu0 0.0
        %946 = vmatpush1.msra.mxu0 0.0
        %947 = vmatprep.subr.mxu0 0.0
        %948 = vmatpush1.msra.mxu0 0.0
        %949 = vmatprep.subr.mxu0 0.0
        %950 = vmatpush1.msra.mxu0 0.0
        %951 = vmatprep.subr.mxu0 0.0
        %952 = vmatpush1.msra.mxu0 0.0
        %953 = vmatprep.subr.mxu0 0.0
        %954 = vmatpush1.msra.mxu0 0.0
        %955 = vmatprep.subr.mxu0 0.0
        %956 = vmatpush1.msra.mxu0 0.0
        %957 = vmatprep.subr.mxu0 0.0
        %958 = vmatpush1.msra.mxu0 0.0
        %959 = vmatprep.subr.mxu0 0.0
        %v960 = vand.u32 %v415, 4294901760
        %961 = vmatpush1.msra.mxu0 %v960
        %962 = vmatprep.subr.mxu0 0.0
        %v963 = vand.u32 %v414, 4294901760
        %964 = vmatpush1.msra.mxu0 %v963
        %965 = vmatprep.subr.mxu0 0.0
        %966 = vmatpush2.msra.mxu0 0.0
        %967 = vmatprep.subr.mxu0 0.0
        %968 = vmatpush2.msra.mxu0 0.0
        %969 = vmatprep.subr.mxu0 0.0
        %970 = vmatpush2.msra.mxu0 0.0
        %971 = vmatprep.subr.mxu0 0.0
        %972 = vmatpush2.msra.mxu0 0.0
        %973 = vmatprep.subr.mxu0 0.0
        %974 = vmatpush2.msra.mxu0 0.0
        %975 = vmatprep.subr.mxu0 0.0
        %976 = vmatpush2.msra.mxu0 0.0
        %977 = vmatprep.subr.mxu0 0.0
        %978 = vmatpush2.msra.mxu0 0.0
        %979 = vmatprep.subr.mxu0 0.0
        %980 = vmatpush2.msra.mxu0 0.0
        %981 = vmatprep.subr.mxu0 0.0
        %982 = vmatpush2.msra.mxu0 0.0
        %983 = vmatprep.subr.mxu0 0.0
        %984 = vmatpush2.msra.mxu0 0.0
        %985 = vmatprep.subr.mxu0 0.0
        %986 = vmatpush2.msra.mxu0 0.0
        %987 = vmatprep.subr.mxu0 0.0
        %988 = vmatpush2.msra.mxu0 0.0
        %989 = vmatprep.subr.mxu0 0.0
        %990 = vmatpush2.msra.mxu0 0.0
        %991 = vmatprep.subr.mxu0 0.0
        %992 = vmatpush2.msra.mxu0 0.0
        %993 = vmatprep.subr.mxu0 0.0
        %994 = vmatpush2.msra.mxu0 0.0
        %995 = vmatprep.subr.mxu0 0.0
        %996 = vmatpush2.msra.mxu0 0.0
        %997 = vmatprep.mubr.f32.mxu0 0.0
        %v998 = vand.u32 %v926, 4294901760
        %v999 = vsub.f32 %v926, %v998
        %v1000 = vand.u32 %v999, 4294901760
        %v1001 = vsub.f32 %v999, %v1000
        %v1002 = vand.u32 %v1001, 4294901760
        %1003 = vmatmul.mubr.f32.gmra.mxu0 %v1002
        %v1004 = vpop.f32.mrf.mxu0
        %v1005 = vadd.f32 0.0, %v1004
        %v1006 = vpop.f32.mrf.mxu0
        %1007 = vmatprep.mubr.f32.mxu0 0.0
        %v1008 = vand.u32 %v929, 4294901760
        %v1009 = vsub.f32 %v929, %v1008
        %v1010 = vand.u32 %v1009, 4294901760
        %v1011 = vsub.f32 %v1009, %v1010
        %v1012 = vand.u32 %v1011, 4294901760
        %1013 = vmatmul.mubr.f32.gmra.mxu0 %v1012
        %v1014 = vpop.f32.mrf.mxu0
        %v1015 = vadd.f32 0.0, %v1014
        %v1016 = vpop.f32.mrf.mxu0
        %1017 = vdwg.mxu0
        %1018 = vmatprep.subr.mxu0 0.0
        %1019 = vmatpush1.msra.mxu0 0.0
        %1020 = vmatprep.subr.mxu0 0.0
        %1021 = vmatpush1.msra.mxu0 0.0
        %1022 = vmatprep.subr.mxu0 0.0
        %1023 = vmatpush1.msra.mxu0 0.0
        %1024 = vmatprep.subr.mxu0 0.0
        %1025 = vmatpush1.msra.mxu0 0.0
        %1026 = vmatprep.subr.mxu0 0.0
        %1027 = vmatpush1.msra.mxu0 0.0
        %1028 = vmatprep.subr.mxu0 0.0
        %1029 = vmatpush1.msra.mxu0 0.0
        %1030 = vmatprep.subr.mxu0 0.0
        %1031 = vmatpush1.msra.mxu0 0.0
        %1032 = vmatprep.subr.mxu0 0.0
        %1033 = vmatpush1.msra.mxu0 0.0
        %1034 = vmatprep.subr.mxu0 0.0
        %1035 = vmatpush1.msra.mxu0 0.0
        %1036 = vmatprep.subr.mxu0 0.0
        %1037 = vmatpush1.msra.mxu0 0.0
        %1038 = vmatprep.subr.mxu0 0.0
        %1039 = vmatpush1.msra.mxu0 0.0
        %1040 = vmatprep.subr.mxu0 0.0
        %1041 = vmatpush1.msra.mxu0 0.0
        %1042 = vmatprep.subr.mxu0 0.0
        %1043 = vmatpush1.msra.mxu0 0.0
        %1044 = vmatprep.subr.mxu0 0.0
        %1045 = vmatpush1.msra.mxu0 0.0
        %1046 = vmatprep.subr.mxu0 0.0
        %v1047 = vand.u32 %v415, 4294901760
        %v1048 = vsub.f32 %v415, %v1047
        %v1049 = vand.u32 %v1048, 4294901760
        %v1050 = vsub.f32 %v1048, %v1049
        %v1051 = vand.u32 %v1050, 4294901760
        %1052 = vmatpush1.msra.mxu0 %v1051
        %1053 = vmatprep.subr.mxu0 0.0
        %v1054 = vand.u32 %v414, 4294901760
        %v1055 = vsub.f32 %v414, %v1054
        %v1056 = vand.u32 %v1055, 4294901760
        %v1057 = vsub.f32 %v1055, %v1056
        %v1058 = vand.u32 %v1057, 4294901760
        %1059 = vmatpush1.msra.mxu0 %v1058
        %1060 = vmatprep.subr.mxu0 0.0
        %1061 = vmatpush2.msra.mxu0 0.0
        %1062 = vmatprep.subr.mxu0 0.0
        %1063 = vmatpush2.msra.mxu0 0.0
        %1064 = vmatprep.subr.mxu0 0.0
        %1065 = vmatpush2.msra.mxu0 0.0
        %1066 = vmatprep.subr.mxu0 0.0
        %1067 = vmatpush2.msra.mxu0 0.0
        %1068 = vmatprep.subr.mxu0 0.0
        %1069 = vmatpush2.msra.mxu0 0.0
        %1070 = vmatprep.subr.mxu0 0.0
        %1071 = vmatpush2.msra.mxu0 0.0
        %1072 = vmatprep.subr.mxu0 0.0
        %1073 = vmatpush2.msra.mxu0 0.0
        %1074 = vmatprep.subr.mxu0 0.0
        %1075 = vmatpush2.msra.mxu0 0.0
        %1076 = vmatprep.subr.mxu0 0.0
        %1077 = vmatpush2.msra.mxu0 0.0
        %1078 = vmatprep.subr.mxu0 0.0
        %1079 = vmatpush2.msra.mxu0 0.0
        %1080 = vmatprep.subr.mxu0 0.0
        %1081 = vmatpush2.msra.mxu0 0.0
        %1082 = vmatprep.subr.mxu0 0.0
        %1083 = vmatpush2.msra.mxu0 0.0
        %1084 = vmatprep.subr.mxu0 0.0
        %1085 = vmatpush2.msra.mxu0 0.0
        %1086 = vmatprep.subr.mxu0 0.0
        %1087 = vmatpush2.msra.mxu0 0.0
        %1088 = vmatprep.subr.mxu0 0.0
        %1089 = vmatpush2.msra.mxu0 0.0
        %1090 = vmatprep.subr.mxu0 0.0
        %1091 = vmatpush2.msra.mxu0 0.0
        %1092 = vmatprep.mubr.f32.mxu0 0.0
        %v1093 = vand.u32 %v926, 4294901760
        %1094 = vmatmul.mubr.f32.gmra.mxu0 %v1093
        %v1095 = vpop.f32.mrf.mxu0
        %v1096 = vadd.f32 %v1005, %v1095
        %v1097 = vpop.f32.mrf.mxu0
        %1098 = vmatprep.mubr.f32.mxu0 0.0
        %v1099 = vand.u32 %v929, 4294901760
        %1100 = vmatmul.mubr.f32.gmra.mxu0 %v1099
        %v1101 = vpop.f32.mrf.mxu0
        %v1102 = vadd.f32 %v1015, %v1101
        %v1103 = vpop.f32.mrf.mxu0
        %1104 = vdwg.mxu0
        %1105 = vmatprep.subr.mxu0 0.0
        %1106 = vmatpush1.msra.mxu0 0.0
        %1107 = vmatprep.subr.mxu0 0.0
        %1108 = vmatpush1.msra.mxu0 0.0
        %1109 = vmatprep.subr.mxu0 0.0
        %1110 = vmatpush1.msra.mxu0 0.0
        %1111 = vmatprep.subr.mxu0 0.0
        %1112 = vmatpush1.msra.mxu0 0.0
        %1113 = vmatprep.subr.mxu0 0.0
        %1114 = vmatpush1.msra.mxu0 0.0
        %1115 = vmatprep.subr.mxu0 0.0
        %1116 = vmatpush1.msra.mxu0 0.0
        %1117 = vmatprep.subr.mxu0 0.0
        %1118 = vmatpush1.msra.mxu0 0.0
        %1119 = vmatprep.subr.mxu0 0.0
        %1120 = vmatpush1.msra.mxu0 0.0
        %1121 = vmatprep.subr.mxu0 0.0
        %1122 = vmatpush1.msra.mxu0 0.0
        %1123 = vmatprep.subr.mxu0 0.0
        %1124 = vmatpush1.msra.mxu0 0.0
        %1125 = vmatprep.subr.mxu0 0.0
        %1126 = vmatpush1.msra.mxu0 0.0
        %1127 = vmatprep.subr.mxu0 0.0
        %1128 = vmatpush1.msra.mxu0 0.0
        %1129 = vmatprep.subr.mxu0 0.0
        %1130 = vmatpush1.msra.mxu0 0.0
        %1131 = vmatprep.subr.mxu0 0.0
        %1132 = vmatpush1.msra.mxu0 0.0
        %1133 = vmatprep.subr.mxu0 0.0
        %v1134 = vand.u32 %v415, 4294901760
        %v1135 = vsub.f32 %v415, %v1134
        %1136 = vmatpush1.msra.mxu0 %v1135
        %1137 = vmatprep.subr.mxu0 0.0
        %v1138 = vand.u32 %v414, 4294901760
        %v1139 = vsub.f32 %v414, %v1138
        %1140 = vmatpush1.msra.mxu0 %v1139
        %1141 = vmatprep.subr.mxu0 0.0
        %1142 = vmatpush2.msra.mxu0 0.0
        %1143 = vmatprep.subr.mxu0 0.0
        %1144 = vmatpush2.msra.mxu0 0.0
        %1145 = vmatprep.subr.mxu0 0.0
        %1146 = vmatpush2.msra.mxu0 0.0
        %1147 = vmatprep.subr.mxu0 0.0
        %1148 = vmatpush2.msra.mxu0 0.0
        %1149 = vmatprep.subr.mxu0 0.0
        %1150 = vmatpush2.msra.mxu0 0.0
        %1151 = vmatprep.subr.mxu0 0.0
        %1152 = vmatpush2.msra.mxu0 0.0
        %1153 = vmatprep.subr.mxu0 0.0
        %1154 = vmatpush2.msra.mxu0 0.0
        %1155 = vmatprep.subr.mxu0 0.0
        %1156 = vmatpush2.msra.mxu0 0.0
        %1157 = vmatprep.subr.mxu0 0.0
        %1158 = vmatpush2.msra.mxu0 0.0
        %1159 = vmatprep.subr.mxu0 0.0
        %1160 = vmatpush2.msra.mxu0 0.0
        %1161 = vmatprep.subr.mxu0 0.0
        %1162 = vmatpush2.msra.mxu0 0.0
        %1163 = vmatprep.subr.mxu0 0.0
        %1164 = vmatpush2.msra.mxu0 0.0
        %1165 = vmatprep.subr.mxu0 0.0
        %1166 = vmatpush2.msra.mxu0 0.0
        %1167 = vmatprep.subr.mxu0 0.0
        %1168 = vmatpush2.msra.mxu0 0.0
        %1169 = vmatprep.subr.mxu0 0.0
        %1170 = vmatpush2.msra.mxu0 0.0
        %1171 = vmatprep.subr.mxu0 0.0
        %1172 = vmatpush2.msra.mxu0 0.0
        %1173 = vmatprep.mubr.f32.mxu0 0.0
        %v1174 = vand.u32 %v926, 4294901760
        %v1175 = vsub.f32 %v926, %v1174
        %1176 = vmatmul.mubr.f32.gmra.mxu0 %v1175
        %v1177 = vpop.f32.mrf.mxu0
        %v1178 = vadd.f32 %v1096, %v1177
        %v1179 = vpop.f32.mrf.mxu0
        %1180 = vmatprep.mubr.f32.mxu0 0.0
        %v1181 = vand.u32 %v929, 4294901760
        %v1182 = vsub.f32 %v929, %v1181
        %1183 = vmatmul.mubr.f32.gmra.mxu0 %v1182
        %v1184 = vpop.f32.mrf.mxu0
        %v1185 = vadd.f32 %v1102, %v1184
        %v1186 = vpop.f32.mrf.mxu0
        %1187 = vdwg.mxu0
        %1188 = vmatprep.subr.mxu0 0.0
        %1189 = vmatpush1.msra.mxu0 0.0
        %1190 = vmatprep.subr.mxu0 0.0
        %1191 = vmatpush1.msra.mxu0 0.0
        %1192 = vmatprep.subr.mxu0 0.0
        %1193 = vmatpush1.msra.mxu0 0.0
        %1194 = vmatprep.subr.mxu0 0.0
        %1195 = vmatpush1.msra.mxu0 0.0
        %1196 = vmatprep.subr.mxu0 0.0
        %1197 = vmatpush1.msra.mxu0 0.0
        %1198 = vmatprep.subr.mxu0 0.0
        %1199 = vmatpush1.msra.mxu0 0.0
        %1200 = vmatprep.subr.mxu0 0.0
        %1201 = vmatpush1.msra.mxu0 0.0
        %1202 = vmatprep.subr.mxu0 0.0
        %1203 = vmatpush1.msra.mxu0 0.0
        %1204 = vmatprep.subr.mxu0 0.0
        %1205 = vmatpush1.msra.mxu0 0.0
        %1206 = vmatprep.subr.mxu0 0.0
        %1207 = vmatpush1.msra.mxu0 0.0
        %1208 = vmatprep.subr.mxu0 0.0
        %1209 = vmatpush1.msra.mxu0 0.0
        %1210 = vmatprep.subr.mxu0 0.0
        %1211 = vmatpush1.msra.mxu0 0.0
        %1212 = vmatprep.subr.mxu0 0.0
        %1213 = vmatpush1.msra.mxu0 0.0
        %1214 = vmatprep.subr.mxu0 0.0
        %1215 = vmatpush1.msra.mxu0 0.0
        %1216 = vmatprep.subr.mxu0 0.0
        %v1217 = vand.u32 %v415, 4294901760
        %1218 = vmatpush1.msra.mxu0 %v1217
        %1219 = vmatprep.subr.mxu0 0.0
        %v1220 = vand.u32 %v414, 4294901760
        %1221 = vmatpush1.msra.mxu0 %v1220
        %1222 = vmatprep.subr.mxu0 0.0
        %1223 = vmatpush2.msra.mxu0 0.0
        %1224 = vmatprep.subr.mxu0 0.0
        %1225 = vmatpush2.msra.mxu0 0.0
        %1226 = vmatprep.subr.mxu0 0.0
        %1227 = vmatpush2.msra.mxu0 0.0
        %1228 = vmatprep.subr.mxu0 0.0
        %1229 = vmatpush2.msra.mxu0 0.0
        %1230 = vmatprep.subr.mxu0 0.0
        %1231 = vmatpush2.msra.mxu0 0.0
        %1232 = vmatprep.subr.mxu0 0.0
        %1233 = vmatpush2.msra.mxu0 0.0
        %1234 = vmatprep.subr.mxu0 0.0
        %1235 = vmatpush2.msra.mxu0 0.0
        %1236 = vmatprep.subr.mxu0 0.0
        %1237 = vmatpush2.msra.mxu0 0.0
        %1238 = vmatprep.subr.mxu0 0.0
        %1239 = vmatpush2.msra.mxu0 0.0
        %1240 = vmatprep.subr.mxu0 0.0
        %1241 = vmatpush2.msra.mxu0 0.0
        %1242 = vmatprep.subr.mxu0 0.0
        %1243 = vmatpush2.msra.mxu0 0.0
        %1244 = vmatprep.subr.mxu0 0.0
        %1245 = vmatpush2.msra.mxu0 0.0
        %1246 = vmatprep.subr.mxu0 0.0
        %1247 = vmatpush2.msra.mxu0 0.0
        %1248 = vmatprep.subr.mxu0 0.0
        %1249 = vmatpush2.msra.mxu0 0.0
        %1250 = vmatprep.subr.mxu0 0.0
        %1251 = vmatpush2.msra.mxu0 0.0
        %1252 = vmatprep.subr.mxu0 0.0
        %1253 = vmatpush2.msra.mxu0 0.0
        %1254 = vmatprep.mubr.f32.mxu0 0.0
        %v1255 = vand.u32 %v926, 4294901760
        %v1256 = vsub.f32 %v926, %v1255
        %v1257 = vand.u32 %v1256, 4294901760
        %1258 = vmatmul.mubr.f32.gmra.mxu0 %v1257
        %v1259 = vpop.f32.mrf.mxu0
        %v1260 = vadd.f32 %v1178, %v1259
        %v1261 = vpop.f32.mrf.mxu0
        %1262 = vmatprep.mubr.f32.mxu0 0.0
        %v1263 = vand.u32 %v929, 4294901760
        %v1264 = vsub.f32 %v929, %v1263
        %v1265 = vand.u32 %v1264, 4294901760
        %1266 = vmatmul.mubr.f32.gmra.mxu0 %v1265
        %v1267 = vpop.f32.mrf.mxu0
        %v1268 = vadd.f32 %v1185, %v1267
        %v1269 = vpop.f32.mrf.mxu0
        %1270 = vdwg.mxu0
        %1271 = vmatprep.subr.mxu0 0.0
        %1272 = vmatpush1.msra.mxu0 0.0
        %1273 = vmatprep.subr.mxu0 0.0
        %1274 = vmatpush1.msra.mxu0 0.0
        %1275 = vmatprep.subr.mxu0 0.0
        %1276 = vmatpush1.msra.mxu0 0.0
        %1277 = vmatprep.subr.mxu0 0.0
        %1278 = vmatpush1.msra.mxu0 0.0
        %1279 = vmatprep.subr.mxu0 0.0
        %1280 = vmatpush1.msra.mxu0 0.0
        %1281 = vmatprep.subr.mxu0 0.0
        %1282 = vmatpush1.msra.mxu0 0.0
        %1283 = vmatprep.subr.mxu0 0.0
        %1284 = vmatpush1.msra.mxu0 0.0
        %1285 = vmatprep.subr.mxu0 0.0
        %1286 = vmatpush1.msra.mxu0 0.0
        %1287 = vmatprep.subr.mxu0 0.0
        %1288 = vmatpush1.msra.mxu0 0.0
        %1289 = vmatprep.subr.mxu0 0.0
        %1290 = vmatpush1.msra.mxu0 0.0
        %1291 = vmatprep.subr.mxu0 0.0
        %1292 = vmatpush1.msra.mxu0 0.0
        %1293 = vmatprep.subr.mxu0 0.0
        %1294 = vmatpush1.msra.mxu0 0.0
        %1295 = vmatprep.subr.mxu0 0.0
        %1296 = vmatpush1.msra.mxu0 0.0
        %1297 = vmatprep.subr.mxu0 0.0
        %1298 = vmatpush1.msra.mxu0 0.0
        %1299 = vmatprep.subr.mxu0 0.0
        %v1300 = vand.u32 %v415, 4294901760
        %v1301 = vsub.f32 %v415, %v1300
        %v1302 = vand.u32 %v1301, 4294901760
        %1303 = vmatpush1.msra.mxu0 %v1302
        %1304 = vmatprep.subr.mxu0 0.0
        %v1305 = vand.u32 %v414, 4294901760
        %v1306 = vsub.f32 %v414, %v1305
        %v1307 = vand.u32 %v1306, 4294901760
        %1308 = vmatpush1.msra.mxu0 %v1307
        %1309 = vmatprep.subr.mxu0 0.0
        %1310 = vmatpush2.msra.mxu0 0.0
        %1311 = vmatprep.subr.mxu0 0.0
        %1312 = vmatpush2.msra.mxu0 0.0
        %1313 = vmatprep.subr.mxu0 0.0
        %1314 = vmatpush2.msra.mxu0 0.0
        %1315 = vmatprep.subr.mxu0 0.0
        %1316 = vmatpush2.msra.mxu0 0.0
        %1317 = vmatprep.subr.mxu0 0.0
        %1318 = vmatpush2.msra.mxu0 0.0
        %1319 = vmatprep.subr.mxu0 0.0
        %1320 = vmatpush2.msra.mxu0 0.0
        %1321 = vmatprep.subr.mxu0 0.0
        %1322 = vmatpush2.msra.mxu0 0.0
        %1323 = vmatprep.subr.mxu0 0.0
        %1324 = vmatpush2.msra.mxu0 0.0
        %1325 = vmatprep.subr.mxu0 0.0
        %1326 = vmatpush2.msra.mxu0 0.0
        %1327 = vmatprep.subr.mxu0 0.0
        %1328 = vmatpush2.msra.mxu0 0.0
        %1329 = vmatprep.subr.mxu0 0.0
        %1330 = vmatpush2.msra.mxu0 0.0
        %1331 = vmatprep.subr.mxu0 0.0
        %1332 = vmatpush2.msra.mxu0 0.0
        %1333 = vmatprep.subr.mxu0 0.0
        %1334 = vmatpush2.msra.mxu0 0.0
        %1335 = vmatprep.subr.mxu0 0.0
        %1336 = vmatpush2.msra.mxu0 0.0
        %1337 = vmatprep.subr.mxu0 0.0
        %1338 = vmatpush2.msra.mxu0 0.0
        %1339 = vmatprep.subr.mxu0 0.0
        %1340 = vmatpush2.msra.mxu0 0.0
        %1341 = vmatprep.mubr.f32.mxu0 0.0
        %v1342 = vand.u32 %v926, 4294901760
        %1343 = vmatmul.mubr.f32.gmra.mxu0 %v1342
        %v1344 = vpop.f32.mrf.mxu0
        %v1345 = vadd.f32 %v1260, %v1344
        %v1346 = vpop.f32.mrf.mxu0
        %1347 = vmatprep.mubr.f32.mxu0 0.0
        %v1348 = vand.u32 %v929, 4294901760
        %1349 = vmatmul.mubr.f32.gmra.mxu0 %v1348
        %v1350 = vpop.f32.mrf.mxu0
        %v1351 = vadd.f32 %v1268, %v1350
        %v1352 = vpop.f32.mrf.mxu0
        %1353 = vdwg.mxu0
        %1354 = vmatprep.subr.mxu0 0.0
        %1355 = vmatpush1.msra.mxu0 0.0
        %1356 = vmatprep.subr.mxu0 0.0
        %1357 = vmatpush1.msra.mxu0 0.0
        %1358 = vmatprep.subr.mxu0 0.0
        %1359 = vmatpush1.msra.mxu0 0.0
        %1360 = vmatprep.subr.mxu0 0.0
        %1361 = vmatpush1.msra.mxu0 0.0
        %1362 = vmatprep.subr.mxu0 0.0
        %1363 = vmatpush1.msra.mxu0 0.0
        %1364 = vmatprep.subr.mxu0 0.0
        %1365 = vmatpush1.msra.mxu0 0.0
        %1366 = vmatprep.subr.mxu0 0.0
        %1367 = vmatpush1.msra.mxu0 0.0
        %1368 = vmatprep.subr.mxu0 0.0
        %1369 = vmatpush1.msra.mxu0 0.0
        %1370 = vmatprep.subr.mxu0 0.0
        %1371 = vmatpush1.msra.mxu0 0.0
        %1372 = vmatprep.subr.mxu0 0.0
        %1373 = vmatpush1.msra.mxu0 0.0
        %1374 = vmatprep.subr.mxu0 0.0
        %1375 = vmatpush1.msra.mxu0 0.0
        %1376 = vmatprep.subr.mxu0 0.0
        %1377 = vmatpush1.msra.mxu0 0.0
        %1378 = vmatprep.subr.mxu0 0.0
        %1379 = vmatpush1.msra.mxu0 0.0
        %1380 = vmatprep.subr.mxu0 0.0
        %1381 = vmatpush1.msra.mxu0 0.0
        %1382 = vmatprep.subr.mxu0 0.0
        %v1383 = vand.u32 %v415, 4294901760
        %1384 = vmatpush1.msra.mxu0 %v1383
        %1385 = vmatprep.subr.mxu0 0.0
        %v1386 = vand.u32 %v414, 4294901760
        %1387 = vmatpush1.msra.mxu0 %v1386
        %1388 = vmatprep.subr.mxu0 0.0
        %1389 = vmatpush2.msra.mxu0 0.0
        %1390 = vmatprep.subr.mxu0 0.0
        %1391 = vmatpush2.msra.mxu0 0.0
        %1392 = vmatprep.subr.mxu0 0.0
        %1393 = vmatpush2.msra.mxu0 0.0
        %1394 = vmatprep.subr.mxu0 0.0
        %1395 = vmatpush2.msra.mxu0 0.0
        %1396 = vmatprep.subr.mxu0 0.0
        %1397 = vmatpush2.msra.mxu0 0.0
        %1398 = vmatprep.subr.mxu0 0.0
        %1399 = vmatpush2.msra.mxu0 0.0
        %1400 = vmatprep.subr.mxu0 0.0
        %1401 = vmatpush2.msra.mxu0 0.0
        %1402 = vmatprep.subr.mxu0 0.0
        %1403 = vmatpush2.msra.mxu0 0.0
        %1404 = vmatprep.subr.mxu0 0.0
        %1405 = vmatpush2.msra.mxu0 0.0
        %1406 = vmatprep.subr.mxu0 0.0
        %1407 = vmatpush2.msra.mxu0 0.0
        %1408 = vmatprep.subr.mxu0 0.0
        %1409 = vmatpush2.msra.mxu0 0.0
        %1410 = vmatprep.subr.mxu0 0.0
        %1411 = vmatpush2.msra.mxu0 0.0
        %1412 = vmatprep.subr.mxu0 0.0
        %1413 = vmatpush2.msra.mxu0 0.0
        %1414 = vmatprep.subr.mxu0 0.0
        %1415 = vmatpush2.msra.mxu0 0.0
        %1416 = vmatprep.subr.mxu0 0.0
        %1417 = vmatpush2.msra.mxu0 0.0
        %1418 = vmatprep.subr.mxu0 0.0
        %1419 = vmatpush2.msra.mxu0 0.0
        %1420 = vmatprep.mubr.f32.mxu0 0.0
        %v1421 = vand.u32 %v926, 4294901760
        %1422 = vmatmul.mubr.f32.gmra.mxu0 %v1421
        %v1423 = vpop.f32.mrf.mxu0
        %v1424 = vadd.f32 %v1345, %v1423
        %v1425 = vpop.f32.mrf.mxu0
        %1426 = vmatprep.mubr.f32.mxu0 0.0
        %v1427 = vand.u32 %v929, 4294901760
        %1428 = vmatmul.mubr.f32.gmra.mxu0 %v1427
        %v1429 = vpop.f32.mrf.mxu0
        %v1430 = vadd.f32 %v1351, %v1429
        %v1431 = vpop.f32.mrf.mxu0
        %1432 = vdwg.mxu0
        %v1433 = vld [vmem:[#allocation5] sm:$0xff]
        %v1434 = vld [vmem:[#allocation5 + $0x8] sm:$0xff]
        %v1435 = vld [vmem:[#allocation5 + $0x10] sm:$0xff]
        %v1436 = vld [vmem:[#allocation5 + $0x18] sm:$0xff]
        %v1437 = vld [vmem:[#allocation5 + $0x20] sm:$0xff]
        %v1438 = vld [vmem:[#allocation5 + $0x28] sm:$0xff]
        %v1439 = vld [vmem:[#allocation5 + $0x30] sm:$0xff]
        %v1440 = vld [vmem:[#allocation5 + $0x38] sm:$0xff]
        %v1441 = vld [vmem:[#allocation5 + $0x40] sm:$0xff]
        %v1442 = vld [vmem:[#allocation5 + $0x48] sm:$0xff]
        %v1443 = vld [vmem:[#allocation5 + $0x50] sm:$0xff]
        %v1444 = vld [vmem:[#allocation5 + $0x58] sm:$0xff]
        %v1445 = vld [vmem:[#allocation5 + $0x60] sm:$0xff]
        %v1446 = vld [vmem:[#allocation5 + $0x68] sm:$0xff]
        %v1447 = vld [vmem:[#allocation5 + $0x70] sm:$0xff]
        %v1448 = vld [vmem:[#allocation5 + $0x78] sm:$0xff]
        %v1449 = vld [vmem:[#allocation5 + $0x80] sm:$0xff]
        %v1450 = vld [vmem:[#allocation5 + $0x88] sm:$0xff]
        %v1451 = vld [vmem:[#allocation5 + $0x90] sm:$0xff]
        %v1452 = vld [vmem:[#allocation5 + $0x98] sm:$0xff]
        %v1453 = vld [vmem:[#allocation5 + $0xa0] sm:$0xff]
        %v1454 = vld [vmem:[#allocation5 + $0xa8] sm:$0xff]
        %v1455 = vld [vmem:[#allocation5 + $0xb0] sm:$0xff]
        %v1456 = vld [vmem:[#allocation5 + $0xb8] sm:$0xff]
        %v1457 = vld [vmem:[#allocation5 + $0xc0] sm:$0xff]
        %v1458 = vld [vmem:[#allocation5 + $0xc8] sm:$0xff]
        %v1459 = vld [vmem:[#allocation5 + $0xd0] sm:$0xff]
        %v1460 = vld [vmem:[#allocation5 + $0xd8] sm:$0xff]
        %v1461 = vld [vmem:[#allocation5 + $0xe0] sm:$0xff]
        %v1462 = vld [vmem:[#allocation5 + $0xe8] sm:$0xff]
        %v1463 = vld [vmem:[#allocation5 + $0xf0] sm:$0xff]
        %v1464 = vld [vmem:[#allocation5 + $0xf8] sm:$0xff]
        %v1465 = vld [vmem:[#allocation5 + $0x100] sm:$0xff]
        %v1466 = vld [vmem:[#allocation5 + $0x108] sm:$0xff]
        %v1467 = vld [vmem:[#allocation5 + $0x110] sm:$0xff]
        %v1468 = vld [vmem:[#allocation5 + $0x118] sm:$0xff]
        %v1469 = vld [vmem:[#allocation5 + $0x120] sm:$0xff]
        %v1470 = vld [vmem:[#allocation5 + $0x128] sm:$0xff]
        %v1471 = vld [vmem:[#allocation5 + $0x130] sm:$0xff]
        %v1472 = vld [vmem:[#allocation5 + $0x138] sm:$0xff]
        %v1473 = vld [vmem:[#allocation5 + $0x140] sm:$0xff]
        %v1474 = vld [vmem:[#allocation5 + $0x148] sm:$0xff]
        %v1475 = vld [vmem:[#allocation5 + $0x150] sm:$0xff]
        %v1476 = vld [vmem:[#allocation5 + $0x158] sm:$0xff]
        %v1477 = vld [vmem:[#allocation5 + $0x160] sm:$0xff]
        %v1478 = vld [vmem:[#allocation5 + $0x168] sm:$0xff]
        %v1479 = vld [vmem:[#allocation5 + $0x170] sm:$0xff]
        %v1480 = vld [vmem:[#allocation5 + $0x178] sm:$0xff]
        %1481 = vmatprep.subr.mxu0 0.0
        %v1482 = vand.u32 %v1448, 4294901760
        %1483 = vmatpush1.msra.mxu0 %v1482
        %1484 = vmatprep.subr.mxu0 0.0
        %v1485 = vand.u32 %v1447, 4294901760
        %1486 = vmatpush1.msra.mxu0 %v1485
        %1487 = vmatprep.subr.mxu0 0.0
        %v1488 = vand.u32 %v1446, 4294901760
        %1489 = vmatpush1.msra.mxu0 %v1488
        %1490 = vmatprep.subr.mxu0 0.0
        %v1491 = vand.u32 %v1445, 4294901760
        %1492 = vmatpush1.msra.mxu0 %v1491
        %1493 = vmatprep.subr.mxu0 0.0
        %v1494 = vand.u32 %v1444, 4294901760
        %1495 = vmatpush1.msra.mxu0 %v1494
        %1496 = vmatprep.subr.mxu0 0.0
        %v1497 = vand.u32 %v1443, 4294901760
        %1498 = vmatpush1.msra.mxu0 %v1497
        %1499 = vmatprep.subr.mxu0 0.0
        %v1500 = vand.u32 %v1442, 4294901760
        %1501 = vmatpush1.msra.mxu0 %v1500
        %1502 = vmatprep.subr.mxu0 0.0
        %v1503 = vand.u32 %v1441, 4294901760
        %1504 = vmatpush1.msra.mxu0 %v1503
        %1505 = vmatprep.subr.mxu0 0.0
        %v1506 = vand.u32 %v1440, 4294901760
        %1507 = vmatpush1.msra.mxu0 %v1506
        %1508 = vmatprep.subr.mxu0 0.0
        %v1509 = vand.u32 %v1439, 4294901760
        %1510 = vmatpush1.msra.mxu0 %v1509
        %1511 = vmatprep.subr.mxu0 0.0
        %v1512 = vand.u32 %v1438, 4294901760
        %1513 = vmatpush1.msra.mxu0 %v1512
        %1514 = vmatprep.subr.mxu0 0.0
        %v1515 = vand.u32 %v1437, 4294901760
        %1516 = vmatpush1.msra.mxu0 %v1515
        %1517 = vmatprep.subr.mxu0 0.0
        %v1518 = vand.u32 %v1436, 4294901760
        %1519 = vmatpush1.msra.mxu0 %v1518
        %1520 = vmatprep.subr.mxu0 0.0
        %v1521 = vand.u32 %v1435, 4294901760
        %1522 = vmatpush1.msra.mxu0 %v1521
        %1523 = vmatprep.subr.mxu0 0.0
        %v1524 = vand.u32 %v1434, 4294901760
        %1525 = vmatpush1.msra.mxu0 %v1524
        %1526 = vmatprep.subr.mxu0 0.0
        %v1527 = vand.u32 %v1433, 4294901760
        %1528 = vmatpush1.msra.mxu0 %v1527
        %1529 = vmatprep.subr.mxu0 0.0
        %v1530 = vand.u32 %v1464, 4294901760
        %1531 = vmatpush2.msra.mxu0 %v1530
        %1532 = vmatprep.subr.mxu0 0.0
        %v1533 = vand.u32 %v1463, 4294901760
        %1534 = vmatpush2.msra.mxu0 %v1533
        %1535 = vmatprep.subr.mxu0 0.0
        %v1536 = vand.u32 %v1462, 4294901760
        %1537 = vmatpush2.msra.mxu0 %v1536
        %1538 = vmatprep.subr.mxu0 0.0
        %v1539 = vand.u32 %v1461, 4294901760
        %1540 = vmatpush2.msra.mxu0 %v1539
        %1541 = vmatprep.subr.mxu0 0.0
        %v1542 = vand.u32 %v1460, 4294901760
        %1543 = vmatpush2.msra.mxu0 %v1542
        %1544 = vmatprep.subr.mxu0 0.0
        %v1545 = vand.u32 %v1459, 4294901760
        %1546 = vmatpush2.msra.mxu0 %v1545
        %1547 = vmatprep.subr.mxu0 0.0
        %v1548 = vand.u32 %v1458, 4294901760
        %1549 = vmatpush2.msra.mxu0 %v1548
        %1550 = vmatprep.subr.mxu0 0.0
        %v1551 = vand.u32 %v1457, 4294901760
        %1552 = vmatpush2.msra.mxu0 %v1551
        %1553 = vmatprep.subr.mxu0 0.0
        %v1554 = vand.u32 %v1456, 4294901760
        %1555 = vmatpush2.msra.mxu0 %v1554
        %1556 = vmatprep.subr.mxu0 0.0
        %v1557 = vand.u32 %v1455, 4294901760
        %1558 = vmatpush2.msra.mxu0 %v1557
        %1559 = vmatprep.subr.mxu0 0.0
        %v1560 = vand.u32 %v1454, 4294901760
        %1561 = vmatpush2.msra.mxu0 %v1560
        %1562 = vmatprep.subr.mxu0 0.0
        %v1563 = vand.u32 %v1453, 4294901760
        %1564 = vmatpush2.msra.mxu0 %v1563
        %1565 = vmatprep.subr.mxu0 0.0
        %v1566 = vand.u32 %v1452, 4294901760
        %1567 = vmatpush2.msra.mxu0 %v1566
        %1568 = vmatprep.subr.mxu0 0.0
        %v1569 = vand.u32 %v1451, 4294901760
        %1570 = vmatpush2.msra.mxu0 %v1569
        %1571 = vmatprep.subr.mxu0 0.0
        %v1572 = vand.u32 %v1450, 4294901760
        %1573 = vmatpush2.msra.mxu0 %v1572
        %1574 = vmatprep.subr.mxu0 0.0
        %v1575 = vand.u32 %v1449, 4294901760
        %1576 = vmatpush2.msra.mxu0 %v1575
        %v1577 = vand.u32 %v414, 4294901760
        %v1578 = vsub.f32 %v414, %v1577
        %v1579 = vand.u32 %v1578, 4294901760
        %v1580 = vsub.f32 %v1578, %v1579
        %v1581 = vand.u32 %v1580, 4294901760
        %1582 = vmatprep.mubr.f32.mxu0 %v1581
        %v1583 = vand.u32 %v916, 4294901760
        %v1584 = vsub.f32 %v916, %v1583
        %v1585 = vand.u32 %v1584, 4294901760
        %v1586 = vsub.f32 %v1584, %v1585
        %v1587 = vand.u32 %v1586, 4294901760
        %1588 = vmatmul.mubr.f32.gmra.mxu0 %v1587
        %v1589 = vpop.f32.mrf.mxu0
        %v1590 = vadd.f32 0.0, %v1589
        %v1591 = vpop.f32.mrf.mxu0
        %v1592 = vand.u32 %v415, 4294901760
        %v1593 = vsub.f32 %v415, %v1592
        %v1594 = vand.u32 %v1593, 4294901760
        %v1595 = vsub.f32 %v1593, %v1594
        %v1596 = vand.u32 %v1595, 4294901760
        %1597 = vmatprep.mubr.f32.mxu0 %v1596
        %v1598 = vand.u32 %v922, 4294901760
        %v1599 = vsub.f32 %v922, %v1598
        %v1600 = vand.u32 %v1599, 4294901760
        %v1601 = vsub.f32 %v1599, %v1600
        %v1602 = vand.u32 %v1601, 4294901760
        %1603 = vmatmul.mubr.f32.gmra.mxu0 %v1602
        %v1604 = vpop.f32.mrf.mxu0
        %v1605 = vadd.f32 0.0, %v1604
        %v1606 = vpop.f32.mrf.mxu0
        %1607 = vdwg.mxu0
        %1608 = vmatprep.subr.mxu0 0.0
        %v1609 = vand.u32 %v1448, 4294901760
        %v1610 = vsub.f32 %v1448, %v1609
        %v1611 = vand.u32 %v1610, 4294901760
        %v1612 = vsub.f32 %v1610, %v1611
        %v1613 = vand.u32 %v1612, 4294901760
        %1614 = vmatpush1.msra.mxu0 %v1613
        %1615 = vmatprep.subr.mxu0 0.0
        %v1616 = vand.u32 %v1447, 4294901760
        %v1617 = vsub.f32 %v1447, %v1616
        %v1618 = vand.u32 %v1617, 4294901760
        %v1619 = vsub.f32 %v1617, %v1618
        %v1620 = vand.u32 %v1619, 4294901760
        %1621 = vmatpush1.msra.mxu0 %v1620
        %1622 = vmatprep.subr.mxu0 0.0
        %v1623 = vand.u32 %v1446, 4294901760
        %v1624 = vsub.f32 %v1446, %v1623
        %v1625 = vand.u32 %v1624, 4294901760
        %v1626 = vsub.f32 %v1624, %v1625
        %v1627 = vand.u32 %v1626, 4294901760
        %1628 = vmatpush1.msra.mxu0 %v1627
        %1629 = vmatprep.subr.mxu0 0.0
        %v1630 = vand.u32 %v1445, 4294901760
        %v1631 = vsub.f32 %v1445, %v1630
        %v1632 = vand.u32 %v1631, 4294901760
        %v1633 = vsub.f32 %v1631, %v1632
        %v1634 = vand.u32 %v1633, 4294901760
        %1635 = vmatpush1.msra.mxu0 %v1634
        %1636 = vmatprep.subr.mxu0 0.0
        %v1637 = vand.u32 %v1444, 4294901760
        %v1638 = vsub.f32 %v1444, %v1637
        %v1639 = vand.u32 %v1638, 4294901760
        %v1640 = vsub.f32 %v1638, %v1639
        %v1641 = vand.u32 %v1640, 4294901760
        %1642 = vmatpush1.msra.mxu0 %v1641
        %1643 = vmatprep.subr.mxu0 0.0
        %v1644 = vand.u32 %v1443, 4294901760
        %v1645 = vsub.f32 %v1443, %v1644
        %v1646 = vand.u32 %v1645, 4294901760
        %v1647 = vsub.f32 %v1645, %v1646
        %v1648 = vand.u32 %v1647, 4294901760
        %1649 = vmatpush1.msra.mxu0 %v1648
        %1650 = vmatprep.subr.mxu0 0.0
        %v1651 = vand.u32 %v1442, 4294901760
        %v1652 = vsub.f32 %v1442, %v1651
        %v1653 = vand.u32 %v1652, 4294901760
        %v1654 = vsub.f32 %v1652, %v1653
        %v1655 = vand.u32 %v1654, 4294901760
        %1656 = vmatpush1.msra.mxu0 %v1655
        %1657 = vmatprep.subr.mxu0 0.0
        %v1658 = vand.u32 %v1441, 4294901760
        %v1659 = vsub.f32 %v1441, %v1658
        %v1660 = vand.u32 %v1659, 4294901760
        %v1661 = vsub.f32 %v1659, %v1660
        %v1662 = vand.u32 %v1661, 4294901760
        %1663 = vmatpush1.msra.mxu0 %v1662
        %1664 = vmatprep.subr.mxu0 0.0
        %v1665 = vand.u32 %v1440, 4294901760
        %v1666 = vsub.f32 %v1440, %v1665
        %v1667 = vand.u32 %v1666, 4294901760
        %v1668 = vsub.f32 %v1666, %v1667
        %v1669 = vand.u32 %v1668, 4294901760
        %1670 = vmatpush1.msra.mxu0 %v1669
        %1671 = vmatprep.subr.mxu0 0.0
        %v1672 = vand.u32 %v1439, 4294901760
        %v1673 = vsub.f32 %v1439, %v1672
        %v1674 = vand.u32 %v1673, 4294901760
        %v1675 = vsub.f32 %v1673, %v1674
        %v1676 = vand.u32 %v1675, 4294901760
        %1677 = vmatpush1.msra.mxu0 %v1676
        %1678 = vmatprep.subr.mxu0 0.0
        %v1679 = vand.u32 %v1438, 4294901760
        %v1680 = vsub.f32 %v1438, %v1679
        %v1681 = vand.u32 %v1680, 4294901760
        %v1682 = vsub.f32 %v1680, %v1681
        %v1683 = vand.u32 %v1682, 4294901760
        %1684 = vmatpush1.msra.mxu0 %v1683
        %1685 = vmatprep.subr.mxu0 0.0
        %v1686 = vand.u32 %v1437, 4294901760
        %v1687 = vsub.f32 %v1437, %v1686
        %v1688 = vand.u32 %v1687, 4294901760
        %v1689 = vsub.f32 %v1687, %v1688
        %v1690 = vand.u32 %v1689, 4294901760
        %1691 = vmatpush1.msra.mxu0 %v1690
        %1692 = vmatprep.subr.mxu0 0.0
        %v1693 = vand.u32 %v1436, 4294901760
        %v1694 = vsub.f32 %v1436, %v1693
        %v1695 = vand.u32 %v1694, 4294901760
        %v1696 = vsub.f32 %v1694, %v1695
        %v1697 = vand.u32 %v1696, 4294901760
        %1698 = vmatpush1.msra.mxu0 %v1697
        %1699 = vmatprep.subr.mxu0 0.0
        %v1700 = vand.u32 %v1435, 4294901760
        %v1701 = vsub.f32 %v1435, %v1700
        %v1702 = vand.u32 %v1701, 4294901760
        %v1703 = vsub.f32 %v1701, %v1702
        %v1704 = vand.u32 %v1703, 4294901760
        %1705 = vmatpush1.msra.mxu0 %v1704
        %1706 = vmatprep.subr.mxu0 0.0
        %v1707 = vand.u32 %v1434, 4294901760
        %v1708 = vsub.f32 %v1434, %v1707
        %v1709 = vand.u32 %v1708, 4294901760
        %v1710 = vsub.f32 %v1708, %v1709
        %v1711 = vand.u32 %v1710, 4294901760
        %1712 = vmatpush1.msra.mxu0 %v1711
        %1713 = vmatprep.subr.mxu0 0.0
        %v1714 = vand.u32 %v1433, 4294901760
        %v1715 = vsub.f32 %v1433, %v1714
        %v1716 = vand.u32 %v1715, 4294901760
        %v1717 = vsub.f32 %v1715, %v1716
        %v1718 = vand.u32 %v1717, 4294901760
        %1719 = vmatpush1.msra.mxu0 %v1718
        %1720 = vmatprep.subr.mxu0 0.0
        %v1721 = vand.u32 %v1464, 4294901760
        %v1722 = vsub.f32 %v1464, %v1721
        %v1723 = vand.u32 %v1722, 4294901760
        %v1724 = vsub.f32 %v1722, %v1723
        %v1725 = vand.u32 %v1724, 4294901760
        %1726 = vmatpush2.msra.mxu0 %v1725
        %1727 = vmatprep.subr.mxu0 0.0
        %v1728 = vand.u32 %v1463, 4294901760
        %v1729 = vsub.f32 %v1463, %v1728
        %v1730 = vand.u32 %v1729, 4294901760
        %v1731 = vsub.f32 %v1729, %v1730
        %v1732 = vand.u32 %v1731, 4294901760
        %1733 = vmatpush2.msra.mxu0 %v1732
        %1734 = vmatprep.subr.mxu0 0.0
        %v1735 = vand.u32 %v1462, 4294901760
        %v1736 = vsub.f32 %v1462, %v1735
        %v1737 = vand.u32 %v1736, 4294901760
        %v1738 = vsub.f32 %v1736, %v1737
        %v1739 = vand.u32 %v1738, 4294901760
        %1740 = vmatpush2.msra.mxu0 %v1739
        %1741 = vmatprep.subr.mxu0 0.0
        %v1742 = vand.u32 %v1461, 4294901760
        %v1743 = vsub.f32 %v1461, %v1742
        %v1744 = vand.u32 %v1743, 4294901760
        %v1745 = vsub.f32 %v1743, %v1744
        %v1746 = vand.u32 %v1745, 4294901760
        %1747 = vmatpush2.msra.mxu0 %v1746
        %1748 = vmatprep.subr.mxu0 0.0
        %v1749 = vand.u32 %v1460, 4294901760
        %v1750 = vsub.f32 %v1460, %v1749
        %v1751 = vand.u32 %v1750, 4294901760
        %v1752 = vsub.f32 %v1750, %v1751
        %v1753 = vand.u32 %v1752, 4294901760
        %1754 = vmatpush2.msra.mxu0 %v1753
        %1755 = vmatprep.subr.mxu0 0.0
        %v1756 = vand.u32 %v1459, 4294901760
        %v1757 = vsub.f32 %v1459, %v1756
        %v1758 = vand.u32 %v1757, 4294901760
        %v1759 = vsub.f32 %v1757, %v1758
        %v1760 = vand.u32 %v1759, 4294901760
        %1761 = vmatpush2.msra.mxu0 %v1760
        %1762 = vmatprep.subr.mxu0 0.0
        %v1763 = vand.u32 %v1458, 4294901760
        %v1764 = vsub.f32 %v1458, %v1763
        %v1765 = vand.u32 %v1764, 4294901760
        %v1766 = vsub.f32 %v1764, %v1765
        %v1767 = vand.u32 %v1766, 4294901760
        %1768 = vmatpush2.msra.mxu0 %v1767
        %1769 = vmatprep.subr.mxu0 0.0
        %v1770 = vand.u32 %v1457, 4294901760
        %v1771 = vsub.f32 %v1457, %v1770
        %v1772 = vand.u32 %v1771, 4294901760
        %v1773 = vsub.f32 %v1771, %v1772
        %v1774 = vand.u32 %v1773, 4294901760
        %1775 = vmatpush2.msra.mxu0 %v1774
        %1776 = vmatprep.subr.mxu0 0.0
        %v1777 = vand.u32 %v1456, 4294901760
        %v1778 = vsub.f32 %v1456, %v1777
        %v1779 = vand.u32 %v1778, 4294901760
        %v1780 = vsub.f32 %v1778, %v1779
        %v1781 = vand.u32 %v1780, 4294901760
        %1782 = vmatpush2.msra.mxu0 %v1781
        %1783 = vmatprep.subr.mxu0 0.0
        %v1784 = vand.u32 %v1455, 4294901760
        %v1785 = vsub.f32 %v1455, %v1784
        %v1786 = vand.u32 %v1785, 4294901760
        %v1787 = vsub.f32 %v1785, %v1786
        %v1788 = vand.u32 %v1787, 4294901760
        %1789 = vmatpush2.msra.mxu0 %v1788
        %1790 = vmatprep.subr.mxu0 0.0
        %v1791 = vand.u32 %v1454, 4294901760
        %v1792 = vsub.f32 %v1454, %v1791
        %v1793 = vand.u32 %v1792, 4294901760
        %v1794 = vsub.f32 %v1792, %v1793
        %v1795 = vand.u32 %v1794, 4294901760
        %1796 = vmatpush2.msra.mxu0 %v1795
        %1797 = vmatprep.subr.mxu0 0.0
        %v1798 = vand.u32 %v1453, 4294901760
        %v1799 = vsub.f32 %v1453, %v1798
        %v1800 = vand.u32 %v1799, 4294901760
        %v1801 = vsub.f32 %v1799, %v1800
        %v1802 = vand.u32 %v1801, 4294901760
        %1803 = vmatpush2.msra.mxu0 %v1802
        %1804 = vmatprep.subr.mxu0 0.0
        %v1805 = vand.u32 %v1452, 4294901760
        %v1806 = vsub.f32 %v1452, %v1805
        %v1807 = vand.u32 %v1806, 4294901760
        %v1808 = vsub.f32 %v1806, %v1807
        %v1809 = vand.u32 %v1808, 4294901760
        %1810 = vmatpush2.msra.mxu0 %v1809
        %1811 = vmatprep.subr.mxu0 0.0
        %v1812 = vand.u32 %v1451, 4294901760
        %v1813 = vsub.f32 %v1451, %v1812
        %v1814 = vand.u32 %v1813, 4294901760
        %v1815 = vsub.f32 %v1813, %v1814
        %v1816 = vand.u32 %v1815, 4294901760
        %1817 = vmatpush2.msra.mxu0 %v1816
        %1818 = vmatprep.subr.mxu0 0.0
        %v1819 = vand.u32 %v1450, 4294901760
        %v1820 = vsub.f32 %v1450, %v1819
        %v1821 = vand.u32 %v1820, 4294901760
        %v1822 = vsub.f32 %v1820, %v1821
        %v1823 = vand.u32 %v1822, 4294901760
        %1824 = vmatpush2.msra.mxu0 %v1823
        %1825 = vmatprep.subr.mxu0 0.0
        %v1826 = vand.u32 %v1449, 4294901760
        %v1827 = vsub.f32 %v1449, %v1826
        %v1828 = vand.u32 %v1827, 4294901760
        %v1829 = vsub.f32 %v1827, %v1828
        %v1830 = vand.u32 %v1829, 4294901760
        %1831 = vmatpush2.msra.mxu0 %v1830
        %v1832 = vand.u32 %v414, 4294901760
        %1833 = vmatprep.mubr.f32.mxu0 %v1832
        %v1834 = vand.u32 %v916, 4294901760
        %1835 = vmatmul.mubr.f32.gmra.mxu0 %v1834
        %v1836 = vpop.f32.mrf.mxu0
        %v1837 = vadd.f32 %v1590, %v1836
        %v1838 = vpop.f32.mrf.mxu0
        %v1839 = vand.u32 %v415, 4294901760
        %1840 = vmatprep.mubr.f32.mxu0 %v1839
        %v1841 = vand.u32 %v922, 4294901760
        %1842 = vmatmul.mubr.f32.gmra.mxu0 %v1841
        %v1843 = vpop.f32.mrf.mxu0
        %v1844 = vadd.f32 %v1605, %v1843
        %v1845 = vpop.f32.mrf.mxu0
        %1846 = vdwg.mxu0
        %1847 = vmatprep.subr.mxu0 0.0
        %v1848 = vand.u32 %v1448, 4294901760
        %v1849 = vsub.f32 %v1448, %v1848
        %1850 = vmatpush1.msra.mxu0 %v1849
        %1851 = vmatprep.subr.mxu0 0.0
        %v1852 = vand.u32 %v1447, 4294901760
        %v1853 = vsub.f32 %v1447, %v1852
        %1854 = vmatpush1.msra.mxu0 %v1853
        %1855 = vmatprep.subr.mxu0 0.0
        %v1856 = vand.u32 %v1446, 4294901760
        %v1857 = vsub.f32 %v1446, %v1856
        %1858 = vmatpush1.msra.mxu0 %v1857
        %1859 = vmatprep.subr.mxu0 0.0
        %v1860 = vand.u32 %v1445, 4294901760
        %v1861 = vsub.f32 %v1445, %v1860
        %1862 = vmatpush1.msra.mxu0 %v1861
        %1863 = vmatprep.subr.mxu0 0.0
        %v1864 = vand.u32 %v1444, 4294901760
        %v1865 = vsub.f32 %v1444, %v1864
        %1866 = vmatpush1.msra.mxu0 %v1865
        %1867 = vmatprep.subr.mxu0 0.0
        %v1868 = vand.u32 %v1443, 4294901760
        %v1869 = vsub.f32 %v1443, %v1868
        %1870 = vmatpush1.msra.mxu0 %v1869
        %1871 = vmatprep.subr.mxu0 0.0
        %v1872 = vand.u32 %v1442, 4294901760
        %v1873 = vsub.f32 %v1442, %v1872
        %1874 = vmatpush1.msra.mxu0 %v1873
        %1875 = vmatprep.subr.mxu0 0.0
        %v1876 = vand.u32 %v1441, 4294901760
        %v1877 = vsub.f32 %v1441, %v1876
        %1878 = vmatpush1.msra.mxu0 %v1877
        %1879 = vmatprep.subr.mxu0 0.0
        %v1880 = vand.u32 %v1440, 4294901760
        %v1881 = vsub.f32 %v1440, %v1880
        %1882 = vmatpush1.msra.mxu0 %v1881
        %1883 = vmatprep.subr.mxu0 0.0
        %v1884 = vand.u32 %v1439, 4294901760
        %v1885 = vsub.f32 %v1439, %v1884
        %1886 = vmatpush1.msra.mxu0 %v1885
        %1887 = vmatprep.subr.mxu0 0.0
        %v1888 = vand.u32 %v1438, 4294901760
        %v1889 = vsub.f32 %v1438, %v1888
        %1890 = vmatpush1.msra.mxu0 %v1889
        %1891 = vmatprep.subr.mxu0 0.0
        %v1892 = vand.u32 %v1437, 4294901760
        %v1893 = vsub.f32 %v1437, %v1892
        %1894 = vmatpush1.msra.mxu0 %v1893
        %1895 = vmatprep.subr.mxu0 0.0
        %v1896 = vand.u32 %v1436, 4294901760
        %v1897 = vsub.f32 %v1436, %v1896
        %1898 = vmatpush1.msra.mxu0 %v1897
        %1899 = vmatprep.subr.mxu0 0.0
        %v1900 = vand.u32 %v1435, 4294901760
        %v1901 = vsub.f32 %v1435, %v1900
        %1902 = vmatpush1.msra.mxu0 %v1901
        %1903 = vmatprep.subr.mxu0 0.0
        %v1904 = vand.u32 %v1434, 4294901760
        %v1905 = vsub.f32 %v1434, %v1904
        %1906 = vmatpush1.msra.mxu0 %v1905
        %1907 = vmatprep.subr.mxu0 0.0
        %v1908 = vand.u32 %v1433, 4294901760
        %v1909 = vsub.f32 %v1433, %v1908
        %1910 = vmatpush1.msra.mxu0 %v1909
        %1911 = vmatprep.subr.mxu0 0.0
        %v1912 = vand.u32 %v1464, 4294901760
        %v1913 = vsub.f32 %v1464, %v1912
        %1914 = vmatpush2.msra.mxu0 %v1913
        %1915 = vmatprep.subr.mxu0 0.0
        %v1916 = vand.u32 %v1463, 4294901760
        %v1917 = vsub.f32 %v1463, %v1916
        %1918 = vmatpush2.msra.mxu0 %v1917
        %1919 = vmatprep.subr.mxu0 0.0
        %v1920 = vand.u32 %v1462, 4294901760
        %v1921 = vsub.f32 %v1462, %v1920
        %1922 = vmatpush2.msra.mxu0 %v1921
        %1923 = vmatprep.subr.mxu0 0.0
        %v1924 = vand.u32 %v1461, 4294901760
        %v1925 = vsub.f32 %v1461, %v1924
        %1926 = vmatpush2.msra.mxu0 %v1925
        %1927 = vmatprep.subr.mxu0 0.0
        %v1928 = vand.u32 %v1460, 4294901760
        %v1929 = vsub.f32 %v1460, %v1928
        %1930 = vmatpush2.msra.mxu0 %v1929
        %1931 = vmatprep.subr.mxu0 0.0
        %v1932 = vand.u32 %v1459, 4294901760
        %v1933 = vsub.f32 %v1459, %v1932
        %1934 = vmatpush2.msra.mxu0 %v1933
        %1935 = vmatprep.subr.mxu0 0.0
        %v1936 = vand.u32 %v1458, 4294901760
        %v1937 = vsub.f32 %v1458, %v1936
        %1938 = vmatpush2.msra.mxu0 %v1937
        %1939 = vmatprep.subr.mxu0 0.0
        %v1940 = vand.u32 %v1457, 4294901760
        %v1941 = vsub.f32 %v1457, %v1940
        %1942 = vmatpush2.msra.mxu0 %v1941
        %1943 = vmatprep.subr.mxu0 0.0
        %v1944 = vand.u32 %v1456, 4294901760
        %v1945 = vsub.f32 %v1456, %v1944
        %1946 = vmatpush2.msra.mxu0 %v1945
        %1947 = vmatprep.subr.mxu0 0.0
        %v1948 = vand.u32 %v1455, 4294901760
        %v1949 = vsub.f32 %v1455, %v1948
        %1950 = vmatpush2.msra.mxu0 %v1949
        %1951 = vmatprep.subr.mxu0 0.0
        %v1952 = vand.u32 %v1454, 4294901760
        %v1953 = vsub.f32 %v1454, %v1952
        %1954 = vmatpush2.msra.mxu0 %v1953
        %1955 = vmatprep.subr.mxu0 0.0
        %v1956 = vand.u32 %v1453, 4294901760
        %v1957 = vsub.f32 %v1453, %v1956
        %1958 = vmatpush2.msra.mxu0 %v1957
        %1959 = vmatprep.subr.mxu0 0.0
        %v1960 = vand.u32 %v1452, 4294901760
        %v1961 = vsub.f32 %v1452, %v1960
        %1962 = vmatpush2.msra.mxu0 %v1961
        %1963 = vmatprep.subr.mxu0 0.0
        %v1964 = vand.u32 %v1451, 4294901760
        %v1965 = vsub.f32 %v1451, %v1964
        %1966 = vmatpush2.msra.mxu0 %v1965
        %1967 = vmatprep.subr.mxu0 0.0
        %v1968 = vand.u32 %v1450, 4294901760
        %v1969 = vsub.f32 %v1450, %v1968
        %1970 = vmatpush2.msra.mxu0 %v1969
        %1971 = vmatprep.subr.mxu0 0.0
        %v1972 = vand.u32 %v1449, 4294901760
        %v1973 = vsub.f32 %v1449, %v1972
        %1974 = vmatpush2.msra.mxu0 %v1973
        %v1975 = vand.u32 %v414, 4294901760
        %v1976 = vsub.f32 %v414, %v1975
        %1977 = vmatprep.mubr.f32.mxu0 %v1976
        %v1978 = vand.u32 %v916, 4294901760
        %v1979 = vsub.f32 %v916, %v1978
        %1980 = vmatmul.mubr.f32.gmra.mxu0 %v1979
        %v1981 = vpop.f32.mrf.mxu0
        %v1982 = vadd.f32 %v1837, %v1981
        %v1983 = vpop.f32.mrf.mxu0
        %v1984 = vand.u32 %v415, 4294901760
        %v1985 = vsub.f32 %v415, %v1984
        %1986 = vmatprep.mubr.f32.mxu0 %v1985
        %v1987 = vand.u32 %v922, 4294901760
        %v1988 = vsub.f32 %v922, %v1987
        %1989 = vmatmul.mubr.f32.gmra.mxu0 %v1988
        %v1990 = vpop.f32.mrf.mxu0
        %v1991 = vadd.f32 %v1844, %v1990
        %v1992 = vpop.f32.mrf.mxu0
        %1993 = vdwg.mxu0
        %1994 = vmatprep.subr.mxu0 0.0
        %v1995 = vand.u32 %v1448, 4294901760
        %1996 = vmatpush1.msra.mxu0 %v1995
        %1997 = vmatprep.subr.mxu0 0.0
        %v1998 = vand.u32 %v1447, 4294901760
        %1999 = vmatpush1.msra.mxu0 %v1998
        %2000 = vmatprep.subr.mxu0 0.0
        %v2001 = vand.u32 %v1446, 4294901760
        %2002 = vmatpush1.msra.mxu0 %v2001
        %2003 = vmatprep.subr.mxu0 0.0
        %v2004 = vand.u32 %v1445, 4294901760
        %2005 = vmatpush1.msra.mxu0 %v2004
        %2006 = vmatprep.subr.mxu0 0.0
        %v2007 = vand.u32 %v1444, 4294901760
        %2008 = vmatpush1.msra.mxu0 %v2007
        %2009 = vmatprep.subr.mxu0 0.0
        %v2010 = vand.u32 %v1443, 4294901760
        %2011 = vmatpush1.msra.mxu0 %v2010
        %2012 = vmatprep.subr.mxu0 0.0
        %v2013 = vand.u32 %v1442, 4294901760
        %2014 = vmatpush1.msra.mxu0 %v2013
        %2015 = vmatprep.subr.mxu0 0.0
        %v2016 = vand.u32 %v1441, 4294901760
        %2017 = vmatpush1.msra.mxu0 %v2016
        %2018 = vmatprep.subr.mxu0 0.0
        %v2019 = vand.u32 %v1440, 4294901760
        %2020 = vmatpush1.msra.mxu0 %v2019
        %2021 = vmatprep.subr.mxu0 0.0
        %v2022 = vand.u32 %v1439, 4294901760
        %2023 = vmatpush1.msra.mxu0 %v2022
        %2024 = vmatprep.subr.mxu0 0.0
        %v2025 = vand.u32 %v1438, 4294901760
        %2026 = vmatpush1.msra.mxu0 %v2025
        %2027 = vmatprep.subr.mxu0 0.0
        %v2028 = vand.u32 %v1437, 4294901760
        %2029 = vmatpush1.msra.mxu0 %v2028
        %2030 = vmatprep.subr.mxu0 0.0
        %v2031 = vand.u32 %v1436, 4294901760
        %2032 = vmatpush1.msra.mxu0 %v2031
        %2033 = vmatprep.subr.mxu0 0.0
        %v2034 = vand.u32 %v1435, 4294901760
        %2035 = vmatpush1.msra.mxu0 %v2034
        %2036 = vmatprep.subr.mxu0 0.0
        %v2037 = vand.u32 %v1434, 4294901760
        %2038 = vmatpush1.msra.mxu0 %v2037
        %2039 = vmatprep.subr.mxu0 0.0
        %v2040 = vand.u32 %v1433, 4294901760
        %2041 = vmatpush1.msra.mxu0 %v2040
        %2042 = vmatprep.subr.mxu0 0.0
        %v2043 = vand.u32 %v1464, 4294901760
        %2044 = vmatpush2.msra.mxu0 %v2043
        %2045 = vmatprep.subr.mxu0 0.0
        %v2046 = vand.u32 %v1463, 4294901760
        %2047 = vmatpush2.msra.mxu0 %v2046
        %2048 = vmatprep.subr.mxu0 0.0
        %v2049 = vand.u32 %v1462, 4294901760
        %2050 = vmatpush2.msra.mxu0 %v2049
        %2051 = vmatprep.subr.mxu0 0.0
        %v2052 = vand.u32 %v1461, 4294901760
        %2053 = vmatpush2.msra.mxu0 %v2052
        %2054 = vmatprep.subr.mxu0 0.0
        %v2055 = vand.u32 %v1460, 4294901760
        %2056 = vmatpush2.msra.mxu0 %v2055
        %2057 = vmatprep.subr.mxu0 0.0
        %v2058 = vand.u32 %v1459, 4294901760
        %2059 = vmatpush2.msra.mxu0 %v2058
        %2060 = vmatprep.subr.mxu0 0.0
        %v2061 = vand.u32 %v1458, 4294901760
        %2062 = vmatpush2.msra.mxu0 %v2061
        %2063 = vmatprep.subr.mxu0 0.0
        %v2064 = vand.u32 %v1457, 4294901760
        %2065 = vmatpush2.msra.mxu0 %v2064
        %2066 = vmatprep.subr.mxu0 0.0
        %v2067 = vand.u32 %v1456, 4294901760
        %2068 = vmatpush2.msra.mxu0 %v2067
        %2069 = vmatprep.subr.mxu0 0.0
        %v2070 = vand.u32 %v1455, 4294901760
        %2071 = vmatpush2.msra.mxu0 %v2070
        %2072 = vmatprep.subr.mxu0 0.0
        %v2073 = vand.u32 %v1454, 4294901760
        %2074 = vmatpush2.msra.mxu0 %v2073
        %2075 = vmatprep.subr.mxu0 0.0
        %v2076 = vand.u32 %v1453, 4294901760
        %2077 = vmatpush2.msra.mxu0 %v2076
        %2078 = vmatprep.subr.mxu0 0.0
        %v2079 = vand.u32 %v1452, 4294901760
        %2080 = vmatpush2.msra.mxu0 %v2079
        %2081 = vmatprep.subr.mxu0 0.0
        %v2082 = vand.u32 %v1451, 4294901760
        %2083 = vmatpush2.msra.mxu0 %v2082
        %2084 = vmatprep.subr.mxu0 0.0
        %v2085 = vand.u32 %v1450, 4294901760
        %2086 = vmatpush2.msra.mxu0 %v2085
        %2087 = vmatprep.subr.mxu0 0.0
        %v2088 = vand.u32 %v1449, 4294901760
        %2089 = vmatpush2.msra.mxu0 %v2088
        %v2090 = vand.u32 %v414, 4294901760
        %v2091 = vsub.f32 %v414, %v2090
        %v2092 = vand.u32 %v2091, 4294901760
        %2093 = vmatprep.mubr.f32.mxu0 %v2092
        %v2094 = vand.u32 %v916, 4294901760
        %v2095 = vsub.f32 %v916, %v2094
        %v2096 = vand.u32 %v2095, 4294901760
        %2097 = vmatmul.mubr.f32.gmra.mxu0 %v2096
        %v2098 = vpop.f32.mrf.mxu0
        %v2099 = vadd.f32 %v1982, %v2098
        %v2100 = vpop.f32.mrf.mxu0
        %v2101 = vand.u32 %v415, 4294901760
        %v2102 = vsub.f32 %v415, %v2101
        %v2103 = vand.u32 %v2102, 4294901760
        %2104 = vmatprep.mubr.f32.mxu0 %v2103
        %v2105 = vand.u32 %v922, 4294901760
        %v2106 = vsub.f32 %v922, %v2105
        %v2107 = vand.u32 %v2106, 4294901760
        %2108 = vmatmul.mubr.f32.gmra.mxu0 %v2107
        %v2109 = vpop.f32.mrf.mxu0
        %v2110 = vadd.f32 %v1991, %v2109
        %v2111 = vpop.f32.mrf.mxu0
        %2112 = vdwg.mxu0
        %2113 = vmatprep.subr.mxu0 0.0
        %v2114 = vand.u32 %v1448, 4294901760
        %v2115 = vsub.f32 %v1448, %v2114
        %v2116 = vand.u32 %v2115, 4294901760
        %2117 = vmatpush1.msra.mxu0 %v2116
        %2118 = vmatprep.subr.mxu0 0.0
        %v2119 = vand.u32 %v1447, 4294901760
        %v2120 = vsub.f32 %v1447, %v2119
        %v2121 = vand.u32 %v2120, 4294901760
        %2122 = vmatpush1.msra.mxu0 %v2121
        %2123 = vmatprep.subr.mxu0 0.0
        %v2124 = vand.u32 %v1446, 4294901760
        %v2125 = vsub.f32 %v1446, %v2124
        %v2126 = vand.u32 %v2125, 4294901760
        %2127 = vmatpush1.msra.mxu0 %v2126
        %2128 = vmatprep.subr.mxu0 0.0
        %v2129 = vand.u32 %v1445, 4294901760
        %v2130 = vsub.f32 %v1445, %v2129
        %v2131 = vand.u32 %v2130, 4294901760
        %2132 = vmatpush1.msra.mxu0 %v2131
        %2133 = vmatprep.subr.mxu0 0.0
        %v2134 = vand.u32 %v1444, 4294901760
        %v2135 = vsub.f32 %v1444, %v2134
        %v2136 = vand.u32 %v2135, 4294901760
        %2137 = vmatpush1.msra.mxu0 %v2136
        %2138 = vmatprep.subr.mxu0 0.0
        %v2139 = vand.u32 %v1443, 4294901760
        %v2140 = vsub.f32 %v1443, %v2139
        %v2141 = vand.u32 %v2140, 4294901760
        %2142 = vmatpush1.msra.mxu0 %v2141
        %2143 = vmatprep.subr.mxu0 0.0
        %v2144 = vand.u32 %v1442, 4294901760
        %v2145 = vsub.f32 %v1442, %v2144
        %v2146 = vand.u32 %v2145, 4294901760
        %2147 = vmatpush1.msra.mxu0 %v2146
        %2148 = vmatprep.subr.mxu0 0.0
        %v2149 = vand.u32 %v1441, 4294901760
        %v2150 = vsub.f32 %v1441, %v2149
        %v2151 = vand.u32 %v2150, 4294901760
        %2152 = vmatpush1.msra.mxu0 %v2151
        %2153 = vmatprep.subr.mxu0 0.0
        %v2154 = vand.u32 %v1440, 4294901760
        %v2155 = vsub.f32 %v1440, %v2154
        %v2156 = vand.u32 %v2155, 4294901760
        %2157 = vmatpush1.msra.mxu0 %v2156
        %2158 = vmatprep.subr.mxu0 0.0
        %v2159 = vand.u32 %v1439, 4294901760
        %v2160 = vsub.f32 %v1439, %v2159
        %v2161 = vand.u32 %v2160, 4294901760
        %2162 = vmatpush1.msra.mxu0 %v2161
        %2163 = vmatprep.subr.mxu0 0.0
        %v2164 = vand.u32 %v1438, 4294901760
        %v2165 = vsub.f32 %v1438, %v2164
        %v2166 = vand.u32 %v2165, 4294901760
        %2167 = vmatpush1.msra.mxu0 %v2166
        %2168 = vmatprep.subr.mxu0 0.0
        %v2169 = vand.u32 %v1437, 4294901760
        %v2170 = vsub.f32 %v1437, %v2169
        %v2171 = vand.u32 %v2170, 4294901760
        %2172 = vmatpush1.msra.mxu0 %v2171
        %2173 = vmatprep.subr.mxu0 0.0
        %v2174 = vand.u32 %v1436, 4294901760
        %v2175 = vsub.f32 %v1436, %v2174
        %v2176 = vand.u32 %v2175, 4294901760
        %2177 = vmatpush1.msra.mxu0 %v2176
        %2178 = vmatprep.subr.mxu0 0.0
        %v2179 = vand.u32 %v1435, 4294901760
        %v2180 = vsub.f32 %v1435, %v2179
        %v2181 = vand.u32 %v2180, 4294901760
        %2182 = vmatpush1.msra.mxu0 %v2181
        %2183 = vmatprep.subr.mxu0 0.0
        %v2184 = vand.u32 %v1434, 4294901760
        %v2185 = vsub.f32 %v1434, %v2184
        %v2186 = vand.u32 %v2185, 4294901760
        %2187 = vmatpush1.msra.mxu0 %v2186
        %2188 = vmatprep.subr.mxu0 0.0
        %v2189 = vand.u32 %v1433, 4294901760
        %v2190 = vsub.f32 %v1433, %v2189
        %v2191 = vand.u32 %v2190, 4294901760
        %2192 = vmatpush1.msra.mxu0 %v2191
        %2193 = vmatprep.subr.mxu0 0.0
        %v2194 = vand.u32 %v1464, 4294901760
        %v2195 = vsub.f32 %v1464, %v2194
        %v2196 = vand.u32 %v2195, 4294901760
        %2197 = vmatpush2.msra.mxu0 %v2196
        %2198 = vmatprep.subr.mxu0 0.0
        %v2199 = vand.u32 %v1463, 4294901760
        %v2200 = vsub.f32 %v1463, %v2199
        %v2201 = vand.u32 %v2200, 4294901760
        %2202 = vmatpush2.msra.mxu0 %v2201
        %2203 = vmatprep.subr.mxu0 0.0
        %v2204 = vand.u32 %v1462, 4294901760
        %v2205 = vsub.f32 %v1462, %v2204
        %v2206 = vand.u32 %v2205, 4294901760
        %2207 = vmatpush2.msra.mxu0 %v2206
        %2208 = vmatprep.subr.mxu0 0.0
        %v2209 = vand.u32 %v1461, 4294901760
        %v2210 = vsub.f32 %v1461, %v2209
        %v2211 = vand.u32 %v2210, 4294901760
        %2212 = vmatpush2.msra.mxu0 %v2211
        %2213 = vmatprep.subr.mxu0 0.0
        %v2214 = vand.u32 %v1460, 4294901760
        %v2215 = vsub.f32 %v1460, %v2214
        %v2216 = vand.u32 %v2215, 4294901760
        %2217 = vmatpush2.msra.mxu0 %v2216
        %2218 = vmatprep.subr.mxu0 0.0
        %v2219 = vand.u32 %v1459, 4294901760
        %v2220 = vsub.f32 %v1459, %v2219
        %v2221 = vand.u32 %v2220, 4294901760
        %2222 = vmatpush2.msra.mxu0 %v2221
        %2223 = vmatprep.subr.mxu0 0.0
        %v2224 = vand.u32 %v1458, 4294901760
        %v2225 = vsub.f32 %v1458, %v2224
        %v2226 = vand.u32 %v2225, 4294901760
        %2227 = vmatpush2.msra.mxu0 %v2226
        %2228 = vmatprep.subr.mxu0 0.0
        %v2229 = vand.u32 %v1457, 4294901760
        %v2230 = vsub.f32 %v1457, %v2229
        %v2231 = vand.u32 %v2230, 4294901760
        %2232 = vmatpush2.msra.mxu0 %v2231
        %2233 = vmatprep.subr.mxu0 0.0
        %v2234 = vand.u32 %v1456, 4294901760
        %v2235 = vsub.f32 %v1456, %v2234
        %v2236 = vand.u32 %v2235, 4294901760
        %2237 = vmatpush2.msra.mxu0 %v2236
        %2238 = vmatprep.subr.mxu0 0.0
        %v2239 = vand.u32 %v1455, 4294901760
        %v2240 = vsub.f32 %v1455, %v2239
        %v2241 = vand.u32 %v2240, 4294901760
        %2242 = vmatpush2.msra.mxu0 %v2241
        %2243 = vmatprep.subr.mxu0 0.0
        %v2244 = vand.u32 %v1454, 4294901760
        %v2245 = vsub.f32 %v1454, %v2244
        %v2246 = vand.u32 %v2245, 4294901760
        %2247 = vmatpush2.msra.mxu0 %v2246
        %2248 = vmatprep.subr.mxu0 0.0
        %v2249 = vand.u32 %v1453, 4294901760
        %v2250 = vsub.f32 %v1453, %v2249
        %v2251 = vand.u32 %v2250, 4294901760
        %2252 = vmatpush2.msra.mxu0 %v2251
        %2253 = vmatprep.subr.mxu0 0.0
        %v2254 = vand.u32 %v1452, 4294901760
        %v2255 = vsub.f32 %v1452, %v2254
        %v2256 = vand.u32 %v2255, 4294901760
        %2257 = vmatpush2.msra.mxu0 %v2256
        %2258 = vmatprep.subr.mxu0 0.0
        %v2259 = vand.u32 %v1451, 4294901760
        %v2260 = vsub.f32 %v1451, %v2259
        %v2261 = vand.u32 %v2260, 4294901760
        %2262 = vmatpush2.msra.mxu0 %v2261
        %2263 = vmatprep.subr.mxu0 0.0
        %v2264 = vand.u32 %v1450, 4294901760
        %v2265 = vsub.f32 %v1450, %v2264
        %v2266 = vand.u32 %v2265, 4294901760
        %2267 = vmatpush2.msra.mxu0 %v2266
        %2268 = vmatprep.subr.mxu0 0.0
        %v2269 = vand.u32 %v1449, 4294901760
        %v2270 = vsub.f32 %v1449, %v2269
        %v2271 = vand.u32 %v2270, 4294901760
        %2272 = vmatpush2.msra.mxu0 %v2271
        %v2273 = vand.u32 %v414, 4294901760
        %2274 = vmatprep.mubr.f32.mxu0 %v2273
        %v2275 = vand.u32 %v916, 4294901760
        %2276 = vmatmul.mubr.f32.gmra.mxu0 %v2275
        %v2277 = vpop.f32.mrf.mxu0
        %v2278 = vadd.f32 %v2099, %v2277
        %v2279 = vpop.f32.mrf.mxu0
        %v2280 = vand.u32 %v415, 4294901760
        %2281 = vmatprep.mubr.f32.mxu0 %v2280
        %v2282 = vand.u32 %v922, 4294901760
        %2283 = vmatmul.mubr.f32.gmra.mxu0 %v2282
        %v2284 = vpop.f32.mrf.mxu0
        %v2285 = vadd.f32 %v2110, %v2284
        %v2286 = vpop.f32.mrf.mxu0
        %2287 = vdwg.mxu0
        %2288 = vmatprep.subr.mxu0 0.0
        %v2289 = vand.u32 %v1448, 4294901760
        %2290 = vmatpush1.msra.mxu0 %v2289
        %2291 = vmatprep.subr.mxu0 0.0
        %v2292 = vand.u32 %v1447, 4294901760
        %2293 = vmatpush1.msra.mxu0 %v2292
        %2294 = vmatprep.subr.mxu0 0.0
        %v2295 = vand.u32 %v1446, 4294901760
        %2296 = vmatpush1.msra.mxu0 %v2295
        %2297 = vmatprep.subr.mxu0 0.0
        %v2298 = vand.u32 %v1445, 4294901760
        %2299 = vmatpush1.msra.mxu0 %v2298
        %2300 = vmatprep.subr.mxu0 0.0
        %v2301 = vand.u32 %v1444, 4294901760
        %2302 = vmatpush1.msra.mxu0 %v2301
        %2303 = vmatprep.subr.mxu0 0.0
        %v2304 = vand.u32 %v1443, 4294901760
        %2305 = vmatpush1.msra.mxu0 %v2304
        %2306 = vmatprep.subr.mxu0 0.0
        %v2307 = vand.u32 %v1442, 4294901760
        %2308 = vmatpush1.msra.mxu0 %v2307
        %2309 = vmatprep.subr.mxu0 0.0
        %v2310 = vand.u32 %v1441, 4294901760
        %2311 = vmatpush1.msra.mxu0 %v2310
        %2312 = vmatprep.subr.mxu0 0.0
        %v2313 = vand.u32 %v1440, 4294901760
        %2314 = vmatpush1.msra.mxu0 %v2313
        %2315 = vmatprep.subr.mxu0 0.0
        %v2316 = vand.u32 %v1439, 4294901760
        %2317 = vmatpush1.msra.mxu0 %v2316
        %2318 = vmatprep.subr.mxu0 0.0
        %v2319 = vand.u32 %v1438, 4294901760
        %2320 = vmatpush1.msra.mxu0 %v2319
        %2321 = vmatprep.subr.mxu0 0.0
        %v2322 = vand.u32 %v1437, 4294901760
        %2323 = vmatpush1.msra.mxu0 %v2322
        %2324 = vmatprep.subr.mxu0 0.0
        %v2325 = vand.u32 %v1436, 4294901760
        %2326 = vmatpush1.msra.mxu0 %v2325
        %2327 = vmatprep.subr.mxu0 0.0
        %v2328 = vand.u32 %v1435, 4294901760
        %2329 = vmatpush1.msra.mxu0 %v2328
        %2330 = vmatprep.subr.mxu0 0.0
        %v2331 = vand.u32 %v1434, 4294901760
        %2332 = vmatpush1.msra.mxu0 %v2331
        %2333 = vmatprep.subr.mxu0 0.0
        %v2334 = vand.u32 %v1433, 4294901760
        %2335 = vmatpush1.msra.mxu0 %v2334
        %2336 = vmatprep.subr.mxu0 0.0
        %v2337 = vand.u32 %v1464, 4294901760
        %2338 = vmatpush2.msra.mxu0 %v2337
        %2339 = vmatprep.subr.mxu0 0.0
        %v2340 = vand.u32 %v1463, 4294901760
        %2341 = vmatpush2.msra.mxu0 %v2340
        %2342 = vmatprep.subr.mxu0 0.0
        %v2343 = vand.u32 %v1462, 4294901760
        %2344 = vmatpush2.msra.mxu0 %v2343
        %2345 = vmatprep.subr.mxu0 0.0
        %v2346 = vand.u32 %v1461, 4294901760
        %2347 = vmatpush2.msra.mxu0 %v2346
        %2348 = vmatprep.subr.mxu0 0.0
        %v2349 = vand.u32 %v1460, 4294901760
        %2350 = vmatpush2.msra.mxu0 %v2349
        %2351 = vmatprep.subr.mxu0 0.0
        %v2352 = vand.u32 %v1459, 4294901760
        %2353 = vmatpush2.msra.mxu0 %v2352
        %2354 = vmatprep.subr.mxu0 0.0
        %v2355 = vand.u32 %v1458, 4294901760
        %2356 = vmatpush2.msra.mxu0 %v2355
        %2357 = vmatprep.subr.mxu0 0.0
        %v2358 = vand.u32 %v1457, 4294901760
        %2359 = vmatpush2.msra.mxu0 %v2358
        %2360 = vmatprep.subr.mxu0 0.0
        %v2361 = vand.u32 %v1456, 4294901760
        %2362 = vmatpush2.msra.mxu0 %v2361
        %2363 = vmatprep.subr.mxu0 0.0
        %v2364 = vand.u32 %v1455, 4294901760
        %2365 = vmatpush2.msra.mxu0 %v2364
        %2366 = vmatprep.subr.mxu0 0.0
        %v2367 = vand.u32 %v1454, 4294901760
        %2368 = vmatpush2.msra.mxu0 %v2367
        %2369 = vmatprep.subr.mxu0 0.0
        %v2370 = vand.u32 %v1453, 4294901760
        %2371 = vmatpush2.msra.mxu0 %v2370
        %2372 = vmatprep.subr.mxu0 0.0
        %v2373 = vand.u32 %v1452, 4294901760
        %2374 = vmatpush2.msra.mxu0 %v2373
        %2375 = vmatprep.subr.mxu0 0.0
        %v2376 = vand.u32 %v1451, 4294901760
        %2377 = vmatpush2.msra.mxu0 %v2376
        %2378 = vmatprep.subr.mxu0 0.0
        %v2379 = vand.u32 %v1450, 4294901760
        %2380 = vmatpush2.msra.mxu0 %v2379
        %2381 = vmatprep.subr.mxu0 0.0
        %v2382 = vand.u32 %v1449, 4294901760
        %2383 = vmatpush2.msra.mxu0 %v2382
        %v2384 = vand.u32 %v414, 4294901760
        %2385 = vmatprep.mubr.f32.mxu0 %v2384
        %v2386 = vand.u32 %v916, 4294901760
        %2387 = vmatmul.mubr.f32.gmra.mxu0 %v2386
        %v2388 = vpop.f32.mrf.mxu0
        %v2389 = vadd.f32 %v2278, %v2388
        %v2390 = vpop.f32.mrf.mxu0
        %v2391 = vand.u32 %v415, 4294901760
        %2392 = vmatprep.mubr.f32.mxu0 %v2391
        %v2393 = vand.u32 %v922, 4294901760
        %2394 = vmatmul.mubr.f32.gmra.mxu0 %v2393
        %v2395 = vpop.f32.mrf.mxu0
        %v2396 = vadd.f32 %v2285, %v2395
        %v2397 = vpop.f32.mrf.mxu0
        %2398 = vdwg.mxu0
        %2399 = vmatprep.subr.mxu0 0.0
        %v2400 = vand.u32 %v1480, 4294901760
        %2401 = vmatpush1.msra.mxu0 %v2400
        %2402 = vmatprep.subr.mxu0 0.0
        %v2403 = vand.u32 %v1479, 4294901760
        %2404 = vmatpush1.msra.mxu0 %v2403
        %2405 = vmatprep.subr.mxu0 0.0
        %v2406 = vand.u32 %v1478, 4294901760
        %2407 = vmatpush1.msra.mxu0 %v2406
        %2408 = vmatprep.subr.mxu0 0.0
        %v2409 = vand.u32 %v1477, 4294901760
        %2410 = vmatpush1.msra.mxu0 %v2409
        %2411 = vmatprep.subr.mxu0 0.0
        %v2412 = vand.u32 %v1476, 4294901760
        %2413 = vmatpush1.msra.mxu0 %v2412
        %2414 = vmatprep.subr.mxu0 0.0
        %v2415 = vand.u32 %v1475, 4294901760
        %2416 = vmatpush1.msra.mxu0 %v2415
        %2417 = vmatprep.subr.mxu0 0.0
        %v2418 = vand.u32 %v1474, 4294901760
        %2419 = vmatpush1.msra.mxu0 %v2418
        %2420 = vmatprep.subr.mxu0 0.0
        %v2421 = vand.u32 %v1473, 4294901760
        %2422 = vmatpush1.msra.mxu0 %v2421
        %2423 = vmatprep.subr.mxu0 0.0
        %v2424 = vand.u32 %v1472, 4294901760
        %2425 = vmatpush1.msra.mxu0 %v2424
        %2426 = vmatprep.subr.mxu0 0.0
        %v2427 = vand.u32 %v1471, 4294901760
        %2428 = vmatpush1.msra.mxu0 %v2427
        %2429 = vmatprep.subr.mxu0 0.0
        %v2430 = vand.u32 %v1470, 4294901760
        %2431 = vmatpush1.msra.mxu0 %v2430
        %2432 = vmatprep.subr.mxu0 0.0
        %v2433 = vand.u32 %v1469, 4294901760
        %2434 = vmatpush1.msra.mxu0 %v2433
        %2435 = vmatprep.subr.mxu0 0.0
        %v2436 = vand.u32 %v1468, 4294901760
        %2437 = vmatpush1.msra.mxu0 %v2436
        %2438 = vmatprep.subr.mxu0 0.0
        %v2439 = vand.u32 %v1467, 4294901760
        %2440 = vmatpush1.msra.mxu0 %v2439
        %2441 = vmatprep.subr.mxu0 0.0
        %v2442 = vand.u32 %v1466, 4294901760
        %2443 = vmatpush1.msra.mxu0 %v2442
        %2444 = vmatprep.subr.mxu0 0.0
        %v2445 = vand.u32 %v1465, 4294901760
        %2446 = vmatpush1.msra.mxu0 %v2445
        %2447 = vmatprep.subr.mxu0 0.0
        %2448 = vmatpush2.msra.mxu0 0.0
        %2449 = vmatprep.subr.mxu0 0.0
        %2450 = vmatpush2.msra.mxu0 0.0
        %2451 = vmatprep.subr.mxu0 0.0
        %2452 = vmatpush2.msra.mxu0 0.0
        %2453 = vmatprep.subr.mxu0 0.0
        %2454 = vmatpush2.msra.mxu0 0.0
        %2455 = vmatprep.subr.mxu0 0.0
        %2456 = vmatpush2.msra.mxu0 0.0
        %2457 = vmatprep.subr.mxu0 0.0
        %2458 = vmatpush2.msra.mxu0 0.0
        %2459 = vmatprep.subr.mxu0 0.0
        %2460 = vmatpush2.msra.mxu0 0.0
        %2461 = vmatprep.subr.mxu0 0.0
        %2462 = vmatpush2.msra.mxu0 0.0
        %2463 = vmatprep.subr.mxu0 0.0
        %2464 = vmatpush2.msra.mxu0 0.0
        %2465 = vmatprep.subr.mxu0 0.0
        %2466 = vmatpush2.msra.mxu0 0.0
        %2467 = vmatprep.subr.mxu0 0.0
        %2468 = vmatpush2.msra.mxu0 0.0
        %2469 = vmatprep.subr.mxu0 0.0
        %2470 = vmatpush2.msra.mxu0 0.0
        %2471 = vmatprep.subr.mxu0 0.0
        %2472 = vmatpush2.msra.mxu0 0.0
        %2473 = vmatprep.subr.mxu0 0.0
        %2474 = vmatpush2.msra.mxu0 0.0
        %2475 = vmatprep.subr.mxu0 0.0
        %2476 = vmatpush2.msra.mxu0 0.0
        %2477 = vmatprep.subr.mxu0 0.0
        %2478 = vmatpush2.msra.mxu0 0.0
        %2479 = vmatprep.mubr.f32.mxu0 0.0
        %v2480 = vand.u32 %v1424, 4294901760
        %v2481 = vsub.f32 %v1424, %v2480
        %v2482 = vand.u32 %v2481, 4294901760
        %v2483 = vsub.f32 %v2481, %v2482
        %v2484 = vand.u32 %v2483, 4294901760
        %2485 = vmatmul.mubr.f32.gmra.mxu0 %v2484
        %v2486 = vpop.f32.mrf.mxu0
        %v2487 = vadd.f32 %v2389, %v2486
        %v2488 = vpop.f32.mrf.mxu0
        %2489 = vmatprep.mubr.f32.mxu0 0.0
        %v2490 = vand.u32 %v1430, 4294901760
        %v2491 = vsub.f32 %v1430, %v2490
        %v2492 = vand.u32 %v2491, 4294901760
        %v2493 = vsub.f32 %v2491, %v2492
        %v2494 = vand.u32 %v2493, 4294901760
        %2495 = vmatmul.mubr.f32.gmra.mxu0 %v2494
        %v2496 = vpop.f32.mrf.mxu0
        %v2497 = vadd.f32 %v2396, %v2496
        %v2498 = vpop.f32.mrf.mxu0
        %2499 = vdwg.mxu0
        %2500 = vmatprep.subr.mxu0 0.0
        %v2501 = vand.u32 %v1480, 4294901760
        %v2502 = vsub.f32 %v1480, %v2501
        %v2503 = vand.u32 %v2502, 4294901760
        %v2504 = vsub.f32 %v2502, %v2503
        %v2505 = vand.u32 %v2504, 4294901760
        %2506 = vmatpush1.msra.mxu0 %v2505
        %2507 = vmatprep.subr.mxu0 0.0
        %v2508 = vand.u32 %v1479, 4294901760
        %v2509 = vsub.f32 %v1479, %v2508
        %v2510 = vand.u32 %v2509, 4294901760
        %v2511 = vsub.f32 %v2509, %v2510
        %v2512 = vand.u32 %v2511, 4294901760
        %2513 = vmatpush1.msra.mxu0 %v2512
        %2514 = vmatprep.subr.mxu0 0.0
        %v2515 = vand.u32 %v1478, 4294901760
        %v2516 = vsub.f32 %v1478, %v2515
        %v2517 = vand.u32 %v2516, 4294901760
        %v2518 = vsub.f32 %v2516, %v2517
        %v2519 = vand.u32 %v2518, 4294901760
        %2520 = vmatpush1.msra.mxu0 %v2519
        %2521 = vmatprep.subr.mxu0 0.0
        %v2522 = vand.u32 %v1477, 4294901760
        %v2523 = vsub.f32 %v1477, %v2522
        %v2524 = vand.u32 %v2523, 4294901760
        %v2525 = vsub.f32 %v2523, %v2524
        %v2526 = vand.u32 %v2525, 4294901760
        %2527 = vmatpush1.msra.mxu0 %v2526
        %2528 = vmatprep.subr.mxu0 0.0
        %v2529 = vand.u32 %v1476, 4294901760
        %v2530 = vsub.f32 %v1476, %v2529
        %v2531 = vand.u32 %v2530, 4294901760
        %v2532 = vsub.f32 %v2530, %v2531
        %v2533 = vand.u32 %v2532, 4294901760
        %2534 = vmatpush1.msra.mxu0 %v2533
        %2535 = vmatprep.subr.mxu0 0.0
        %v2536 = vand.u32 %v1475, 4294901760
        %v2537 = vsub.f32 %v1475, %v2536
        %v2538 = vand.u32 %v2537, 4294901760
        %v2539 = vsub.f32 %v2537, %v2538
        %v2540 = vand.u32 %v2539, 4294901760
        %2541 = vmatpush1.msra.mxu0 %v2540
        %2542 = vmatprep.subr.mxu0 0.0
        %v2543 = vand.u32 %v1474, 4294901760
        %v2544 = vsub.f32 %v1474, %v2543
        %v2545 = vand.u32 %v2544, 4294901760
        %v2546 = vsub.f32 %v2544, %v2545
        %v2547 = vand.u32 %v2546, 4294901760
        %2548 = vmatpush1.msra.mxu0 %v2547
        %2549 = vmatprep.subr.mxu0 0.0
        %v2550 = vand.u32 %v1473, 4294901760
        %v2551 = vsub.f32 %v1473, %v2550
        %v2552 = vand.u32 %v2551, 4294901760
        %v2553 = vsub.f32 %v2551, %v2552
        %v2554 = vand.u32 %v2553, 4294901760
        %2555 = vmatpush1.msra.mxu0 %v2554
        %2556 = vmatprep.subr.mxu0 0.0
        %v2557 = vand.u32 %v1472, 4294901760
        %v2558 = vsub.f32 %v1472, %v2557
        %v2559 = vand.u32 %v2558, 4294901760
        %v2560 = vsub.f32 %v2558, %v2559
        %v2561 = vand.u32 %v2560, 4294901760
        %2562 = vmatpush1.msra.mxu0 %v2561
        %2563 = vmatprep.subr.mxu0 0.0
        %v2564 = vand.u32 %v1471, 4294901760
        %v2565 = vsub.f32 %v1471, %v2564
        %v2566 = vand.u32 %v2565, 4294901760
        %v2567 = vsub.f32 %v2565, %v2566
        %v2568 = vand.u32 %v2567, 4294901760
        %2569 = vmatpush1.msra.mxu0 %v2568
        %2570 = vmatprep.subr.mxu0 0.0
        %v2571 = vand.u32 %v1470, 4294901760
        %v2572 = vsub.f32 %v1470, %v2571
        %v2573 = vand.u32 %v2572, 4294901760
        %v2574 = vsub.f32 %v2572, %v2573
        %v2575 = vand.u32 %v2574, 4294901760
        %2576 = vmatpush1.msra.mxu0 %v2575
        %2577 = vmatprep.subr.mxu0 0.0
        %v2578 = vand.u32 %v1469, 4294901760
        %v2579 = vsub.f32 %v1469, %v2578
        %v2580 = vand.u32 %v2579, 4294901760
        %v2581 = vsub.f32 %v2579, %v2580
        %v2582 = vand.u32 %v2581, 4294901760
        %2583 = vmatpush1.msra.mxu0 %v2582
        %2584 = vmatprep.subr.mxu0 0.0
        %v2585 = vand.u32 %v1468, 4294901760
        %v2586 = vsub.f32 %v1468, %v2585
        %v2587 = vand.u32 %v2586, 4294901760
        %v2588 = vsub.f32 %v2586, %v2587
        %v2589 = vand.u32 %v2588, 4294901760
        %2590 = vmatpush1.msra.mxu0 %v2589
        %2591 = vmatprep.subr.mxu0 0.0
        %v2592 = vand.u32 %v1467, 4294901760
        %v2593 = vsub.f32 %v1467, %v2592
        %v2594 = vand.u32 %v2593, 4294901760
        %v2595 = vsub.f32 %v2593, %v2594
        %v2596 = vand.u32 %v2595, 4294901760
        %2597 = vmatpush1.msra.mxu0 %v2596
        %2598 = vmatprep.subr.mxu0 0.0
        %v2599 = vand.u32 %v1466, 4294901760
        %v2600 = vsub.f32 %v1466, %v2599
        %v2601 = vand.u32 %v2600, 4294901760
        %v2602 = vsub.f32 %v2600, %v2601
        %v2603 = vand.u32 %v2602, 4294901760
        %2604 = vmatpush1.msra.mxu0 %v2603
        %2605 = vmatprep.subr.mxu0 0.0
        %v2606 = vand.u32 %v1465, 4294901760
        %v2607 = vsub.f32 %v1465, %v2606
        %v2608 = vand.u32 %v2607, 4294901760
        %v2609 = vsub.f32 %v2607, %v2608
        %v2610 = vand.u32 %v2609, 4294901760
        %2611 = vmatpush1.msra.mxu0 %v2610
        %2612 = vmatprep.subr.mxu0 0.0
        %2613 = vmatpush2.msra.mxu0 0.0
        %2614 = vmatprep.subr.mxu0 0.0
        %2615 = vmatpush2.msra.mxu0 0.0
        %2616 = vmatprep.subr.mxu0 0.0
        %2617 = vmatpush2.msra.mxu0 0.0
        %2618 = vmatprep.subr.mxu0 0.0
        %2619 = vmatpush2.msra.mxu0 0.0
        %2620 = vmatprep.subr.mxu0 0.0
        %2621 = vmatpush2.msra.mxu0 0.0
        %2622 = vmatprep.subr.mxu0 0.0
        %2623 = vmatpush2.msra.mxu0 0.0
        %2624 = vmatprep.subr.mxu0 0.0
        %2625 = vmatpush2.msra.mxu0 0.0
        %2626 = vmatprep.subr.mxu0 0.0
        %2627 = vmatpush2.msra.mxu0 0.0
        %2628 = vmatprep.subr.mxu0 0.0
        %2629 = vmatpush2.msra.mxu0 0.0
        %2630 = vmatprep.subr.mxu0 0.0
        %2631 = vmatpush2.msra.mxu0 0.0
        %2632 = vmatprep.subr.mxu0 0.0
        %2633 = vmatpush2.msra.mxu0 0.0
        %2634 = vmatprep.subr.mxu0 0.0
        %2635 = vmatpush2.msra.mxu0 0.0
        %2636 = vmatprep.subr.mxu0 0.0
        %2637 = vmatpush2.msra.mxu0 0.0
        %2638 = vmatprep.subr.mxu0 0.0
        %2639 = vmatpush2.msra.mxu0 0.0
        %2640 = vmatprep.subr.mxu0 0.0
        %2641 = vmatpush2.msra.mxu0 0.0
        %2642 = vmatprep.subr.mxu0 0.0
        %2643 = vmatpush2.msra.mxu0 0.0
        %2644 = vmatprep.mubr.f32.mxu0 0.0
        %v2645 = vand.u32 %v1424, 4294901760
        %2646 = vmatmul.mubr.f32.gmra.mxu0 %v2645
        %v2647 = vpop.f32.mrf.mxu0
        %v2648 = vadd.f32 %v2487, %v2647
        %v2649 = vpop.f32.mrf.mxu0
        %2650 = vmatprep.mubr.f32.mxu0 0.0
        %v2651 = vand.u32 %v1430, 4294901760
        %2652 = vmatmul.mubr.f32.gmra.mxu0 %v2651
        %v2653 = vpop.f32.mrf.mxu0
        %v2654 = vadd.f32 %v2497, %v2653
        %v2655 = vpop.f32.mrf.mxu0
        %2656 = vdwg.mxu0
        %2657 = vmatprep.subr.mxu0 0.0
        %v2658 = vand.u32 %v1480, 4294901760
        %v2659 = vsub.f32 %v1480, %v2658
        %2660 = vmatpush1.msra.mxu0 %v2659
        %2661 = vmatprep.subr.mxu0 0.0
        %v2662 = vand.u32 %v1479, 4294901760
        %v2663 = vsub.f32 %v1479, %v2662
        %2664 = vmatpush1.msra.mxu0 %v2663
        %2665 = vmatprep.subr.mxu0 0.0
        %v2666 = vand.u32 %v1478, 4294901760
        %v2667 = vsub.f32 %v1478, %v2666
        %2668 = vmatpush1.msra.mxu0 %v2667
        %2669 = vmatprep.subr.mxu0 0.0
        %v2670 = vand.u32 %v1477, 4294901760
        %v2671 = vsub.f32 %v1477, %v2670
        %2672 = vmatpush1.msra.mxu0 %v2671
        %2673 = vmatprep.subr.mxu0 0.0
        %v2674 = vand.u32 %v1476, 4294901760
        %v2675 = vsub.f32 %v1476, %v2674
        %2676 = vmatpush1.msra.mxu0 %v2675
        %2677 = vmatprep.subr.mxu0 0.0
        %v2678 = vand.u32 %v1475, 4294901760
        %v2679 = vsub.f32 %v1475, %v2678
        %2680 = vmatpush1.msra.mxu0 %v2679
        %2681 = vmatprep.subr.mxu0 0.0
        %v2682 = vand.u32 %v1474, 4294901760
        %v2683 = vsub.f32 %v1474, %v2682
        %2684 = vmatpush1.msra.mxu0 %v2683
        %2685 = vmatprep.subr.mxu0 0.0
        %v2686 = vand.u32 %v1473, 4294901760
        %v2687 = vsub.f32 %v1473, %v2686
        %2688 = vmatpush1.msra.mxu0 %v2687
        %2689 = vmatprep.subr.mxu0 0.0
        %v2690 = vand.u32 %v1472, 4294901760
        %v2691 = vsub.f32 %v1472, %v2690
        %2692 = vmatpush1.msra.mxu0 %v2691
        %2693 = vmatprep.subr.mxu0 0.0
        %v2694 = vand.u32 %v1471, 4294901760
        %v2695 = vsub.f32 %v1471, %v2694
        %2696 = vmatpush1.msra.mxu0 %v2695
        %2697 = vmatprep.subr.mxu0 0.0
        %v2698 = vand.u32 %v1470, 4294901760
        %v2699 = vsub.f32 %v1470, %v2698
        %2700 = vmatpush1.msra.mxu0 %v2699
        %2701 = vmatprep.subr.mxu0 0.0
        %v2702 = vand.u32 %v1469, 4294901760
        %v2703 = vsub.f32 %v1469, %v2702
        %2704 = vmatpush1.msra.mxu0 %v2703
        %2705 = vmatprep.subr.mxu0 0.0
        %v2706 = vand.u32 %v1468, 4294901760
        %v2707 = vsub.f32 %v1468, %v2706
        %2708 = vmatpush1.msra.mxu0 %v2707
        %2709 = vmatprep.subr.mxu0 0.0
        %v2710 = vand.u32 %v1467, 4294901760
        %v2711 = vsub.f32 %v1467, %v2710
        %2712 = vmatpush1.msra.mxu0 %v2711
        %2713 = vmatprep.subr.mxu0 0.0
        %v2714 = vand.u32 %v1466, 4294901760
        %v2715 = vsub.f32 %v1466, %v2714
        %2716 = vmatpush1.msra.mxu0 %v2715
        %2717 = vmatprep.subr.mxu0 0.0
        %v2718 = vand.u32 %v1465, 4294901760
        %v2719 = vsub.f32 %v1465, %v2718
        %2720 = vmatpush1.msra.mxu0 %v2719
        %2721 = vmatprep.subr.mxu0 0.0
        %2722 = vmatpush2.msra.mxu0 0.0
        %2723 = vmatprep.subr.mxu0 0.0
        %2724 = vmatpush2.msra.mxu0 0.0
        %2725 = vmatprep.subr.mxu0 0.0
        %2726 = vmatpush2.msra.mxu0 0.0
        %2727 = vmatprep.subr.mxu0 0.0
        %2728 = vmatpush2.msra.mxu0 0.0
        %2729 = vmatprep.subr.mxu0 0.0
        %2730 = vmatpush2.msra.mxu0 0.0
        %2731 = vmatprep.subr.mxu0 0.0
        %2732 = vmatpush2.msra.mxu0 0.0
        %2733 = vmatprep.subr.mxu0 0.0
        %2734 = vmatpush2.msra.mxu0 0.0
        %2735 = vmatprep.subr.mxu0 0.0
        %2736 = vmatpush2.msra.mxu0 0.0
        %2737 = vmatprep.subr.mxu0 0.0
        %2738 = vmatpush2.msra.mxu0 0.0
        %2739 = vmatprep.subr.mxu0 0.0
        %2740 = vmatpush2.msra.mxu0 0.0
        %2741 = vmatprep.subr.mxu0 0.0
        %2742 = vmatpush2.msra.mxu0 0.0
        %2743 = vmatprep.subr.mxu0 0.0
        %2744 = vmatpush2.msra.mxu0 0.0
        %2745 = vmatprep.subr.mxu0 0.0
        %2746 = vmatpush2.msra.mxu0 0.0
        %2747 = vmatprep.subr.mxu0 0.0
        %2748 = vmatpush2.msra.mxu0 0.0
        %2749 = vmatprep.subr.mxu0 0.0
        %2750 = vmatpush2.msra.mxu0 0.0
        %2751 = vmatprep.subr.mxu0 0.0
        %2752 = vmatpush2.msra.mxu0 0.0
        %2753 = vmatprep.mubr.f32.mxu0 0.0
        %v2754 = vand.u32 %v1424, 4294901760
        %v2755 = vsub.f32 %v1424, %v2754
        %2756 = vmatmul.mubr.f32.gmra.mxu0 %v2755
        %v2757 = vpop.f32.mrf.mxu0
        %v2758 = vadd.f32 %v2648, %v2757
        %v2759 = vpop.f32.mrf.mxu0
        %2760 = vmatprep.mubr.f32.mxu0 0.0
        %v2761 = vand.u32 %v1430, 4294901760
        %v2762 = vsub.f32 %v1430, %v2761
        %2763 = vmatmul.mubr.f32.gmra.mxu0 %v2762
        %v2764 = vpop.f32.mrf.mxu0
        %v2765 = vadd.f32 %v2654, %v2764
        %v2766 = vpop.f32.mrf.mxu0
        %2767 = vdwg.mxu0
        %2768 = vmatprep.subr.mxu0 0.0
        %v2769 = vand.u32 %v1480, 4294901760
        %2770 = vmatpush1.msra.mxu0 %v2769
        %2771 = vmatprep.subr.mxu0 0.0
        %v2772 = vand.u32 %v1479, 4294901760
        %2773 = vmatpush1.msra.mxu0 %v2772
        %2774 = vmatprep.subr.mxu0 0.0
        %v2775 = vand.u32 %v1478, 4294901760
        %2776 = vmatpush1.msra.mxu0 %v2775
        %2777 = vmatprep.subr.mxu0 0.0
        %v2778 = vand.u32 %v1477, 4294901760
        %2779 = vmatpush1.msra.mxu0 %v2778
        %2780 = vmatprep.subr.mxu0 0.0
        %v2781 = vand.u32 %v1476, 4294901760
        %2782 = vmatpush1.msra.mxu0 %v2781
        %2783 = vmatprep.subr.mxu0 0.0
        %v2784 = vand.u32 %v1475, 4294901760
        %2785 = vmatpush1.msra.mxu0 %v2784
        %2786 = vmatprep.subr.mxu0 0.0
        %v2787 = vand.u32 %v1474, 4294901760
        %2788 = vmatpush1.msra.mxu0 %v2787
        %2789 = vmatprep.subr.mxu0 0.0
        %v2790 = vand.u32 %v1473, 4294901760
        %2791 = vmatpush1.msra.mxu0 %v2790
        %2792 = vmatprep.subr.mxu0 0.0
        %v2793 = vand.u32 %v1472, 4294901760
        %2794 = vmatpush1.msra.mxu0 %v2793
        %2795 = vmatprep.subr.mxu0 0.0
        %v2796 = vand.u32 %v1471, 4294901760
        %2797 = vmatpush1.msra.mxu0 %v2796
        %2798 = vmatprep.subr.mxu0 0.0
        %v2799 = vand.u32 %v1470, 4294901760
        %2800 = vmatpush1.msra.mxu0 %v2799
        %2801 = vmatprep.subr.mxu0 0.0
        %v2802 = vand.u32 %v1469, 4294901760
        %2803 = vmatpush1.msra.mxu0 %v2802
        %2804 = vmatprep.subr.mxu0 0.0
        %v2805 = vand.u32 %v1468, 4294901760
        %2806 = vmatpush1.msra.mxu0 %v2805
        %2807 = vmatprep.subr.mxu0 0.0
        %v2808 = vand.u32 %v1467, 4294901760
        %2809 = vmatpush1.msra.mxu0 %v2808
        %2810 = vmatprep.subr.mxu0 0.0
        %v2811 = vand.u32 %v1466, 4294901760
        %2812 = vmatpush1.msra.mxu0 %v2811
        %2813 = vmatprep.subr.mxu0 0.0
        %v2814 = vand.u32 %v1465, 4294901760
        %2815 = vmatpush1.msra.mxu0 %v2814
        %2816 = vmatprep.subr.mxu0 0.0
        %2817 = vmatpush2.msra.mxu0 0.0
        %2818 = vmatprep.subr.mxu0 0.0
        %2819 = vmatpush2.msra.mxu0 0.0
        %2820 = vmatprep.subr.mxu0 0.0
        %2821 = vmatpush2.msra.mxu0 0.0
        %2822 = vmatprep.subr.mxu0 0.0
        %2823 = vmatpush2.msra.mxu0 0.0
        %2824 = vmatprep.subr.mxu0 0.0
        %2825 = vmatpush2.msra.mxu0 0.0
        %2826 = vmatprep.subr.mxu0 0.0
        %2827 = vmatpush2.msra.mxu0 0.0
        %2828 = vmatprep.subr.mxu0 0.0
        %2829 = vmatpush2.msra.mxu0 0.0
        %2830 = vmatprep.subr.mxu0 0.0
        %2831 = vmatpush2.msra.mxu0 0.0
        %2832 = vmatprep.subr.mxu0 0.0
        %2833 = vmatpush2.msra.mxu0 0.0
        %2834 = vmatprep.subr.mxu0 0.0
        %2835 = vmatpush2.msra.mxu0 0.0
        %2836 = vmatprep.subr.mxu0 0.0
        %2837 = vmatpush2.msra.mxu0 0.0
        %2838 = vmatprep.subr.mxu0 0.0
        %2839 = vmatpush2.msra.mxu0 0.0
        %2840 = vmatprep.subr.mxu0 0.0
        %2841 = vmatpush2.msra.mxu0 0.0
        %2842 = vmatprep.subr.mxu0 0.0
        %2843 = vmatpush2.msra.mxu0 0.0
        %2844 = vmatprep.subr.mxu0 0.0
        %2845 = vmatpush2.msra.mxu0 0.0
        %2846 = vmatprep.subr.mxu0 0.0
        %2847 = vmatpush2.msra.mxu0 0.0
        %2848 = vmatprep.mubr.f32.mxu0 0.0
        %v2849 = vand.u32 %v1424, 4294901760
        %v2850 = vsub.f32 %v1424, %v2849
        %v2851 = vand.u32 %v2850, 4294901760
        %2852 = vmatmul.mubr.f32.gmra.mxu0 %v2851
        %v2853 = vpop.f32.mrf.mxu0
        %v2854 = vadd.f32 %v2758, %v2853
        %v2855 = vpop.f32.mrf.mxu0
        %2856 = vmatprep.mubr.f32.mxu0 0.0
        %v2857 = vand.u32 %v1430, 4294901760
        %v2858 = vsub.f32 %v1430, %v2857
        %v2859 = vand.u32 %v2858, 4294901760
        %2860 = vmatmul.mubr.f32.gmra.mxu0 %v2859
        %v2861 = vpop.f32.mrf.mxu0
        %v2862 = vadd.f32 %v2765, %v2861
        %v2863 = vpop.f32.mrf.mxu0
        %2864 = vdwg.mxu0
        %2865 = vmatprep.subr.mxu0 0.0
        %v2866 = vand.u32 %v1480, 4294901760
        %v2867 = vsub.f32 %v1480, %v2866
        %v2868 = vand.u32 %v2867, 4294901760
        %2869 = vmatpush1.msra.mxu0 %v2868
        %2870 = vmatprep.subr.mxu0 0.0
        %v2871 = vand.u32 %v1479, 4294901760
        %v2872 = vsub.f32 %v1479, %v2871
        %v2873 = vand.u32 %v2872, 4294901760
        %2874 = vmatpush1.msra.mxu0 %v2873
        %2875 = vmatprep.subr.mxu0 0.0
        %v2876 = vand.u32 %v1478, 4294901760
        %v2877 = vsub.f32 %v1478, %v2876
        %v2878 = vand.u32 %v2877, 4294901760
        %2879 = vmatpush1.msra.mxu0 %v2878
        %2880 = vmatprep.subr.mxu0 0.0
        %v2881 = vand.u32 %v1477, 4294901760
        %v2882 = vsub.f32 %v1477, %v2881
        %v2883 = vand.u32 %v2882, 4294901760
        %2884 = vmatpush1.msra.mxu0 %v2883
        %2885 = vmatprep.subr.mxu0 0.0
        %v2886 = vand.u32 %v1476, 4294901760
        %v2887 = vsub.f32 %v1476, %v2886
        %v2888 = vand.u32 %v2887, 4294901760
        %2889 = vmatpush1.msra.mxu0 %v2888
        %2890 = vmatprep.subr.mxu0 0.0
        %v2891 = vand.u32 %v1475, 4294901760
        %v2892 = vsub.f32 %v1475, %v2891
        %v2893 = vand.u32 %v2892, 4294901760
        %2894 = vmatpush1.msra.mxu0 %v2893
        %2895 = vmatprep.subr.mxu0 0.0
        %v2896 = vand.u32 %v1474, 4294901760
        %v2897 = vsub.f32 %v1474, %v2896
        %v2898 = vand.u32 %v2897, 4294901760
        %2899 = vmatpush1.msra.mxu0 %v2898
        %2900 = vmatprep.subr.mxu0 0.0
        %v2901 = vand.u32 %v1473, 4294901760
        %v2902 = vsub.f32 %v1473, %v2901
        %v2903 = vand.u32 %v2902, 4294901760
        %2904 = vmatpush1.msra.mxu0 %v2903
        %2905 = vmatprep.subr.mxu0 0.0
        %v2906 = vand.u32 %v1472, 4294901760
        %v2907 = vsub.f32 %v1472, %v2906
        %v2908 = vand.u32 %v2907, 4294901760
        %2909 = vmatpush1.msra.mxu0 %v2908
        %2910 = vmatprep.subr.mxu0 0.0
        %v2911 = vand.u32 %v1471, 4294901760
        %v2912 = vsub.f32 %v1471, %v2911
        %v2913 = vand.u32 %v2912, 4294901760
        %2914 = vmatpush1.msra.mxu0 %v2913
        %2915 = vmatprep.subr.mxu0 0.0
        %v2916 = vand.u32 %v1470, 4294901760
        %v2917 = vsub.f32 %v1470, %v2916
        %v2918 = vand.u32 %v2917, 4294901760
        %2919 = vmatpush1.msra.mxu0 %v2918
        %2920 = vmatprep.subr.mxu0 0.0
        %v2921 = vand.u32 %v1469, 4294901760
        %v2922 = vsub.f32 %v1469, %v2921
        %v2923 = vand.u32 %v2922, 4294901760
        %2924 = vmatpush1.msra.mxu0 %v2923
        %2925 = vmatprep.subr.mxu0 0.0
        %v2926 = vand.u32 %v1468, 4294901760
        %v2927 = vsub.f32 %v1468, %v2926
        %v2928 = vand.u32 %v2927, 4294901760
        %2929 = vmatpush1.msra.mxu0 %v2928
        %2930 = vmatprep.subr.mxu0 0.0
        %v2931 = vand.u32 %v1467, 4294901760
        %v2932 = vsub.f32 %v1467, %v2931
        %v2933 = vand.u32 %v2932, 4294901760
        %2934 = vmatpush1.msra.mxu0 %v2933
        %2935 = vmatprep.subr.mxu0 0.0
        %v2936 = vand.u32 %v1466, 4294901760
        %v2937 = vsub.f32 %v1466, %v2936
        %v2938 = vand.u32 %v2937, 4294901760
        %2939 = vmatpush1.msra.mxu0 %v2938
        %2940 = vmatprep.subr.mxu0 0.0
        %v2941 = vand.u32 %v1465, 4294901760
        %v2942 = vsub.f32 %v1465, %v2941
        %v2943 = vand.u32 %v2942, 4294901760
        %2944 = vmatpush1.msra.mxu0 %v2943
        %2945 = vmatprep.subr.mxu0 0.0
        %2946 = vmatpush2.msra.mxu0 0.0
        %2947 = vmatprep.subr.mxu0 0.0
        %2948 = vmatpush2.msra.mxu0 0.0
        %2949 = vmatprep.subr.mxu0 0.0
        %2950 = vmatpush2.msra.mxu0 0.0
        %2951 = vmatprep.subr.mxu0 0.0
        %2952 = vmatpush2.msra.mxu0 0.0
        %2953 = vmatprep.subr.mxu0 0.0
        %2954 = vmatpush2.msra.mxu0 0.0
        %2955 = vmatprep.subr.mxu0 0.0
        %2956 = vmatpush2.msra.mxu0 0.0
        %2957 = vmatprep.subr.mxu0 0.0
        %2958 = vmatpush2.msra.mxu0 0.0
        %2959 = vmatprep.subr.mxu0 0.0
        %2960 = vmatpush2.msra.mxu0 0.0
        %2961 = vmatprep.subr.mxu0 0.0
        %2962 = vmatpush2.msra.mxu0 0.0
        %2963 = vmatprep.subr.mxu0 0.0
        %2964 = vmatpush2.msra.mxu0 0.0
        %2965 = vmatprep.subr.mxu0 0.0
        %2966 = vmatpush2.msra.mxu0 0.0
        %2967 = vmatprep.subr.mxu0 0.0
        %2968 = vmatpush2.msra.mxu0 0.0
        %2969 = vmatprep.subr.mxu0 0.0
        %2970 = vmatpush2.msra.mxu0 0.0
        %2971 = vmatprep.subr.mxu0 0.0
        %2972 = vmatpush2.msra.mxu0 0.0
        %2973 = vmatprep.subr.mxu0 0.0
        %2974 = vmatpush2.msra.mxu0 0.0
        %2975 = vmatprep.subr.mxu0 0.0
        %2976 = vmatpush2.msra.mxu0 0.0
        %2977 = vmatprep.mubr.f32.mxu0 0.0
        %v2978 = vand.u32 %v1424, 4294901760
        %2979 = vmatmul.mubr.f32.gmra.mxu0 %v2978
        %v2980 = vpop.f32.mrf.mxu0
        %v2981 = vadd.f32 %v2854, %v2980
        %v2982 = vpop.f32.mrf.mxu0
        %2983 = vmatprep.mubr.f32.mxu0 0.0
        %v2984 = vand.u32 %v1430, 4294901760
        %2985 = vmatmul.mubr.f32.gmra.mxu0 %v2984
        %v2986 = vpop.f32.mrf.mxu0
        %v2987 = vadd.f32 %v2862, %v2986
        %v2988 = vpop.f32.mrf.mxu0
        %2989 = vdwg.mxu0
        %2990 = vmatprep.subr.mxu0 0.0
        %v2991 = vand.u32 %v1480, 4294901760
        %2992 = vmatpush1.msra.mxu0 %v2991
        %2993 = vmatprep.subr.mxu0 0.0
        %v2994 = vand.u32 %v1479, 4294901760
        %2995 = vmatpush1.msra.mxu0 %v2994
        %2996 = vmatprep.subr.mxu0 0.0
        %v2997 = vand.u32 %v1478, 4294901760
        %2998 = vmatpush1.msra.mxu0 %v2997
        %2999 = vmatprep.subr.mxu0 0.0
        %v3000 = vand.u32 %v1477, 4294901760
        %3001 = vmatpush1.msra.mxu0 %v3000
        %3002 = vmatprep.subr.mxu0 0.0
        %v3003 = vand.u32 %v1476, 4294901760
        %3004 = vmatpush1.msra.mxu0 %v3003
        %3005 = vmatprep.subr.mxu0 0.0
        %v3006 = vand.u32 %v1475, 4294901760
        %3007 = vmatpush1.msra.mxu0 %v3006
        %3008 = vmatprep.subr.mxu0 0.0
        %v3009 = vand.u32 %v1474, 4294901760
        %3010 = vmatpush1.msra.mxu0 %v3009
        %3011 = vmatprep.subr.mxu0 0.0
        %v3012 = vand.u32 %v1473, 4294901760
        %3013 = vmatpush1.msra.mxu0 %v3012
        %3014 = vmatprep.subr.mxu0 0.0
        %v3015 = vand.u32 %v1472, 4294901760
        %3016 = vmatpush1.msra.mxu0 %v3015
        %3017 = vmatprep.subr.mxu0 0.0
        %v3018 = vand.u32 %v1471, 4294901760
        %3019 = vmatpush1.msra.mxu0 %v3018
        %3020 = vmatprep.subr.mxu0 0.0
        %v3021 = vand.u32 %v1470, 4294901760
        %3022 = vmatpush1.msra.mxu0 %v3021
        %3023 = vmatprep.subr.mxu0 0.0
        %v3024 = vand.u32 %v1469, 4294901760
        %3025 = vmatpush1.msra.mxu0 %v3024
        %3026 = vmatprep.subr.mxu0 0.0
        %v3027 = vand.u32 %v1468, 4294901760
        %3028 = vmatpush1.msra.mxu0 %v3027
        %3029 = vmatprep.subr.mxu0 0.0
        %v3030 = vand.u32 %v1467, 4294901760
        %3031 = vmatpush1.msra.mxu0 %v3030
        %3032 = vmatprep.subr.mxu0 0.0
        %v3033 = vand.u32 %v1466, 4294901760
        %3034 = vmatpush1.msra.mxu0 %v3033
        %3035 = vmatprep.subr.mxu0 0.0
        %v3036 = vand.u32 %v1465, 4294901760
        %3037 = vmatpush1.msra.mxu0 %v3036
        %3038 = vmatprep.subr.mxu0 0.0
        %3039 = vmatpush2.msra.mxu0 0.0
        %3040 = vmatprep.subr.mxu0 0.0
        %3041 = vmatpush2.msra.mxu0 0.0
        %3042 = vmatprep.subr.mxu0 0.0
        %3043 = vmatpush2.msra.mxu0 0.0
        %3044 = vmatprep.subr.mxu0 0.0
        %3045 = vmatpush2.msra.mxu0 0.0
        %3046 = vmatprep.subr.mxu0 0.0
        %3047 = vmatpush2.msra.mxu0 0.0
        %3048 = vmatprep.subr.mxu0 0.0
        %3049 = vmatpush2.msra.mxu0 0.0
        %3050 = vmatprep.subr.mxu0 0.0
        %3051 = vmatpush2.msra.mxu0 0.0
        %3052 = vmatprep.subr.mxu0 0.0
        %3053 = vmatpush2.msra.mxu0 0.0
        %3054 = vmatprep.subr.mxu0 0.0
        %3055 = vmatpush2.msra.mxu0 0.0
        %3056 = vmatprep.subr.mxu0 0.0
        %3057 = vmatpush2.msra.mxu0 0.0
        %3058 = vmatprep.subr.mxu0 0.0
        %3059 = vmatpush2.msra.mxu0 0.0
        %3060 = vmatprep.subr.mxu0 0.0
        %3061 = vmatpush2.msra.mxu0 0.0
        %3062 = vmatprep.subr.mxu0 0.0
        %3063 = vmatpush2.msra.mxu0 0.0
        %3064 = vmatprep.subr.mxu0 0.0
        %3065 = vmatpush2.msra.mxu0 0.0
        %3066 = vmatprep.subr.mxu0 0.0
        %3067 = vmatpush2.msra.mxu0 0.0
        %3068 = vmatprep.subr.mxu0 0.0
        %3069 = vmatpush2.msra.mxu0 0.0
        %3070 = vmatprep.mubr.f32.mxu0 0.0
        %v3071 = vand.u32 %v1424, 4294901760
        %3072 = vmatmul.mubr.f32.gmra.mxu0 %v3071
        %v3073 = vpop.f32.mrf.mxu0
        %v3074 = vadd.f32 %v2981, %v3073
        %v3075 = vpop.f32.mrf.mxu0
        %3076 = vmatprep.mubr.f32.mxu0 0.0
        %v3077 = vand.u32 %v1430, 4294901760
        %3078 = vmatmul.mubr.f32.gmra.mxu0 %v3077
        %v3079 = vpop.f32.mrf.mxu0
        %v3080 = vadd.f32 %v2987, %v3079
        %v3081 = vpop.f32.mrf.mxu0
        %3082 = vdwg.mxu0
        %v3083 = vld [vmem:[%s4] sm:$0x1]
        %v3085 = vlaneseq
        %v3086 = vshrl.u32 %v3085, 7
        %v3087 = vsub.s32 0, %v3086
        %v3088 = vrot.slane %v3083, %v3087
        %v3090 = vmul.f32 %v3074, %v3088
        %v3091 = vmul.f32 %v3080, %v3088
        %v3092 = vld [vmem:[%s5] sm:$0x1]
        %v3094 = vlaneseq
        %v3095 = vshrl.u32 %v3094, 7
        %v3096 = vsub.s32 0, %v3095
        %v3097 = vrot.slane %v3092, %v3096
        %v3099 = vadd.f32 %v3090, %v3097
        %v3100 = vadd.f32 %v3091, %v3097
        %v3101 = vmul.f32 %v3099, 0.5
        %v3102 = vmul.f32 %v3100, 0.5
        %v3103 = vmul.f32 %v3099, 0.70710677
        %v3104 = vmul.f32 %v3100, 0.70710677
        %v3105 = vand.u32 2147483647, %v3103
        %v3106 = vand.u32 2147483647, %v3104
        %v3107 = vmul.f32 %v3105, 0.3275911
        %v3108 = vmul.f32 %v3106, 0.3275911
        %v3109 = vadd.f32 %v3107, 1.0
        %v3110 = vadd.f32 %v3108, 1.0
        %v3111 = vrcp.pop %v3109
        %v3112 = vmul.f32 1.0, %v3111
        %v3113 = vrcp.pop %v3110
        %v3114 = vmul.f32 1.0, %v3113
        %v3115 = vmul.f32 %v3112, 1.0614054
        %v3116 = vmul.f32 %v3114, 1.0614054
        %v3117 = vadd.f32 %v3115, -1.4531521
        %v3118 = vadd.f32 %v3116, -1.4531521
        %v3119 = vmul.f32 %v3117, %v3112
        %v3120 = vmul.f32 %v3118, %v3114
        %v3121 = vadd.f32 %v3119, 1.4214138
        %v3122 = vadd.f32 %v3120, 1.4214138
        %v3123 = vmul.f32 %v3121, %v3112
        %v3124 = vmul.f32 %v3122, %v3114
        %v3125 = vadd.f32 %v3123, -0.28449672
        %v3126 = vadd.f32 %v3124, -0.28449672
        %v3127 = vmul.f32 %v3125, %v3112
        %v3128 = vmul.f32 %v3126, %v3114
        %v3129 = vadd.f32 %v3127, 0.2548296
        %v3130 = vadd.f32 %v3128, 0.2548296
        %v3131 = vmul.f32 %v3129, %v3112
        %v3132 = vmul.f32 %v3130, %v3114
        %v3133 = vmul.f32 %v3105, %v3105
        %v3134 = vmul.f32 %v3106, %v3106
        %v3135 = vsub.f32 0.0, %v3133
        %v3136 = vsub.f32 0.0, %v3134
        %v3137 = vmul.f32 %v3135, 1.442695
        %v3138 = vpow.pop %v3137
        %v3139 = vmul.f32 %v3136, 1.442695
        %v3140 = vpow.pop %v3139
        %v3141 = vmul.f32 %v3131, %v3138
        %v3142 = vmul.f32 %v3132, %v3140
        %v3143 = vsub.f32 1.0, %v3141
        %v3144 = vsub.f32 1.0, %v3142
        %vm3145 = vcmp.lt.f32.partialorder %v3103, 0.0
        %vm3146 = vcmp.lt.f32.partialorder %v3104, 0.0
        %v3147 = vsub.f32 0.0, %v3143
        %v3148 = vsub.f32 0.0, %v3144
        %v3149 = vsel %vm3145, %v3147, %v3143
        %v3150 = vsel %vm3146, %v3148, %v3144
        %v3151 = vadd.f32 %v3149, 1.0
        %v3152 = vadd.f32 %v3150, 1.0
        %v3153 = vmul.f32 %v3101, %v3151
        %v3154 = vmul.f32 %v3102, %v3152
        %3155 = vmatprep.subr.mxu0 0.0
        %3156 = vmatpush1.msra.mxu0 0.0
        %3157 = vmatprep.subr.mxu0 0.0
        %3158 = vmatpush1.msra.mxu0 0.0
        %3159 = vmatprep.subr.mxu0 0.0
        %3160 = vmatpush1.msra.mxu0 0.0
        %3161 = vmatprep.subr.mxu0 0.0
        %3162 = vmatpush1.msra.mxu0 0.0
        %3163 = vmatprep.subr.mxu0 0.0
        %3164 = vmatpush1.msra.mxu0 0.0
        %3165 = vmatprep.subr.mxu0 0.0
        %3166 = vmatpush1.msra.mxu0 0.0
        %3167 = vmatprep.subr.mxu0 0.0
        %3168 = vmatpush1.msra.mxu0 0.0
        %3169 = vmatprep.subr.mxu0 0.0
        %3170 = vmatpush1.msra.mxu0 0.0
        %3171 = vmatprep.subr.mxu0 0.0
        %3172 = vmatpush1.msra.mxu0 0.0
        %3173 = vmatprep.subr.mxu0 0.0
        %3174 = vmatpush1.msra.mxu0 0.0
        %3175 = vmatprep.subr.mxu0 0.0
        %3176 = vmatpush1.msra.mxu0 0.0
        %3177 = vmatprep.subr.mxu0 0.0
        %3178 = vmatpush1.msra.mxu0 0.0
        %3179 = vmatprep.subr.mxu0 0.0
        %3180 = vmatpush1.msra.mxu0 0.0
        %3181 = vmatprep.subr.mxu0 0.0
        %3182 = vmatpush1.msra.mxu0 0.0
        %3183 = vmatprep.subr.mxu0 0.0
        %v3184 = vand.u32 %v3154, 4294901760
        %3185 = vmatpush1.msra.mxu0 %v3184
        %3186 = vmatprep.subr.mxu0 0.0
        %v3187 = vand.u32 %v3153, 4294901760
        %3188 = vmatpush1.msra.mxu0 %v3187
        %3189 = vmatprep.subr.mxu0 0.0
        %3190 = vmatpush2.msra.mxu0 0.0
        %3191 = vmatprep.subr.mxu0 0.0
        %3192 = vmatpush2.msra.mxu0 0.0
        %3193 = vmatprep.subr.mxu0 0.0
        %3194 = vmatpush2.msra.mxu0 0.0
        %3195 = vmatprep.subr.mxu0 0.0
        %3196 = vmatpush2.msra.mxu0 0.0
        %3197 = vmatprep.subr.mxu0 0.0
        %3198 = vmatpush2.msra.mxu0 0.0
        %3199 = vmatprep.subr.mxu0 0.0
        %3200 = vmatpush2.msra.mxu0 0.0
        %3201 = vmatprep.subr.mxu0 0.0
        %3202 = vmatpush2.msra.mxu0 0.0
        %3203 = vmatprep.subr.mxu0 0.0
        %3204 = vmatpush2.msra.mxu0 0.0
        %3205 = vmatprep.subr.mxu0 0.0
        %3206 = vmatpush2.msra.mxu0 0.0
        %3207 = vmatprep.subr.mxu0 0.0
        %3208 = vmatpush2.msra.mxu0 0.0
        %3209 = vmatprep.subr.mxu0 0.0
        %3210 = vmatpush2.msra.mxu0 0.0
        %3211 = vmatprep.subr.mxu0 0.0
        %3212 = vmatpush2.msra.mxu0 0.0
        %3213 = vmatprep.subr.mxu0 0.0
        %3214 = vmatpush2.msra.mxu0 0.0
        %3215 = vmatprep.subr.mxu0 0.0
        %3216 = vmatpush2.msra.mxu0 0.0
        %3217 = vmatprep.subr.mxu0 0.0
        %3218 = vmatpush2.msra.mxu0 0.0
        %3219 = vmatprep.subr.mxu0 0.0
        %3220 = vmatpush2.msra.mxu0 0.0
        %3221 = vmatprep.mubr.f32.mxu0 0.0
        %v3222 = vand.u32 %v418, 4294901760
        %v3223 = vsub.f32 %v418, %v3222
        %v3224 = vand.u32 %v3223, 4294901760
        %v3225 = vsub.f32 %v3223, %v3224
        %v3226 = vand.u32 %v3225, 4294901760
        %3227 = vmatmul.mubr.f32.gmra.mxu0 %v3226
        %v3228 = vpop.f32.mrf.mxu0
        %v3229 = vadd.f32 0.0, %v3228
        %v3230 = vpop.f32.mrf.mxu0
        %3231 = vmatprep.mubr.f32.mxu0 0.0
        %v3232 = vand.u32 %v421, 4294901760
        %v3233 = vsub.f32 %v421, %v3232
        %v3234 = vand.u32 %v3233, 4294901760
        %v3235 = vsub.f32 %v3233, %v3234
        %v3236 = vand.u32 %v3235, 4294901760
        %3237 = vmatmul.mubr.f32.gmra.mxu0 %v3236
        %v3238 = vpop.f32.mrf.mxu0
        %v3239 = vadd.f32 0.0, %v3238
        %v3240 = vpop.f32.mrf.mxu0
        %3241 = vdwg.mxu0
        %3242 = vmatprep.subr.mxu0 0.0
        %3243 = vmatpush1.msra.mxu0 0.0
        %3244 = vmatprep.subr.mxu0 0.0
        %3245 = vmatpush1.msra.mxu0 0.0
        %3246 = vmatprep.subr.mxu0 0.0
        %3247 = vmatpush1.msra.mxu0 0.0
        %3248 = vmatprep.subr.mxu0 0.0
        %3249 = vmatpush1.msra.mxu0 0.0
        %3250 = vmatprep.subr.mxu0 0.0
        %3251 = vmatpush1.msra.mxu0 0.0
        %3252 = vmatprep.subr.mxu0 0.0
        %3253 = vmatpush1.msra.mxu0 0.0
        %3254 = vmatprep.subr.mxu0 0.0
        %3255 = vmatpush1.msra.mxu0 0.0
        %3256 = vmatprep.subr.mxu0 0.0
        %3257 = vmatpush1.msra.mxu0 0.0
        %3258 = vmatprep.subr.mxu0 0.0
        %3259 = vmatpush1.msra.mxu0 0.0
        %3260 = vmatprep.subr.mxu0 0.0
        %3261 = vmatpush1.msra.mxu0 0.0
        %3262 = vmatprep.subr.mxu0 0.0
        %3263 = vmatpush1.msra.mxu0 0.0
        %3264 = vmatprep.subr.mxu0 0.0
        %3265 = vmatpush1.msra.mxu0 0.0
        %3266 = vmatprep.subr.mxu0 0.0
        %3267 = vmatpush1.msra.mxu0 0.0
        %3268 = vmatprep.subr.mxu0 0.0
        %3269 = vmatpush1.msra.mxu0 0.0
        %3270 = vmatprep.subr.mxu0 0.0
        %v3271 = vand.u32 %v3154, 4294901760
        %v3272 = vsub.f32 %v3154, %v3271
        %v3273 = vand.u32 %v3272, 4294901760
        %v3274 = vsub.f32 %v3272, %v3273
        %v3275 = vand.u32 %v3274, 4294901760
        %3276 = vmatpush1.msra.mxu0 %v3275
        %3277 = vmatprep.subr.mxu0 0.0
        %v3278 = vand.u32 %v3153, 4294901760
        %v3279 = vsub.f32 %v3153, %v3278
        %v3280 = vand.u32 %v3279, 4294901760
        %v3281 = vsub.f32 %v3279, %v3280
        %v3282 = vand.u32 %v3281, 4294901760
        %3283 = vmatpush1.msra.mxu0 %v3282
        %3284 = vmatprep.subr.mxu0 0.0
        %3285 = vmatpush2.msra.mxu0 0.0
        %3286 = vmatprep.subr.mxu0 0.0
        %3287 = vmatpush2.msra.mxu0 0.0
        %3288 = vmatprep.subr.mxu0 0.0
        %3289 = vmatpush2.msra.mxu0 0.0
        %3290 = vmatprep.subr.mxu0 0.0
        %3291 = vmatpush2.msra.mxu0 0.0
        %3292 = vmatprep.subr.mxu0 0.0
        %3293 = vmatpush2.msra.mxu0 0.0
        %3294 = vmatprep.subr.mxu0 0.0
        %3295 = vmatpush2.msra.mxu0 0.0
        %3296 = vmatprep.subr.mxu0 0.0
        %3297 = vmatpush2.msra.mxu0 0.0
        %3298 = vmatprep.subr.mxu0 0.0
        %3299 = vmatpush2.msra.mxu0 0.0
        %3300 = vmatprep.subr.mxu0 0.0
        %3301 = vmatpush2.msra.mxu0 0.0
        %3302 = vmatprep.subr.mxu0 0.0
        %3303 = vmatpush2.msra.mxu0 0.0
        %3304 = vmatprep.subr.mxu0 0.0
        %3305 = vmatpush2.msra.mxu0 0.0
        %3306 = vmatprep.subr.mxu0 0.0
        %3307 = vmatpush2.msra.mxu0 0.0
        %3308 = vmatprep.subr.mxu0 0.0
        %3309 = vmatpush2.msra.mxu0 0.0
        %3310 = vmatprep.subr.mxu0 0.0
        %3311 = vmatpush2.msra.mxu0 0.0
        %3312 = vmatprep.subr.mxu0 0.0
        %3313 = vmatpush2.msra.mxu0 0.0
        %3314 = vmatprep.subr.mxu0 0.0
        %3315 = vmatpush2.msra.mxu0 0.0
        %3316 = vmatprep.mubr.f32.mxu0 0.0
        %v3317 = vand.u32 %v418, 4294901760
        %3318 = vmatmul.mubr.f32.gmra.mxu0 %v3317
        %v3319 = vpop.f32.mrf.mxu0
        %v3320 = vadd.f32 %v3229, %v3319
        %v3321 = vpop.f32.mrf.mxu0
        %3322 = vmatprep.mubr.f32.mxu0 0.0
        %v3323 = vand.u32 %v421, 4294901760
        %3324 = vmatmul.mubr.f32.gmra.mxu0 %v3323
        %v3325 = vpop.f32.mrf.mxu0
        %v3326 = vadd.f32 %v3239, %v3325
        %v3327 = vpop.f32.mrf.mxu0
        %3328 = vdwg.mxu0
        %3329 = vmatprep.subr.mxu0 0.0
        %3330 = vmatpush1.msra.mxu0 0.0
        %3331 = vmatprep.subr.mxu0 0.0
        %3332 = vmatpush1.msra.mxu0 0.0
        %3333 = vmatprep.subr.mxu0 0.0
        %3334 = vmatpush1.msra.mxu0 0.0
        %3335 = vmatprep.subr.mxu0 0.0
        %3336 = vmatpush1.msra.mxu0 0.0
        %3337 = vmatprep.subr.mxu0 0.0
        %3338 = vmatpush1.msra.mxu0 0.0
        %3339 = vmatprep.subr.mxu0 0.0
        %3340 = vmatpush1.msra.mxu0 0.0
        %3341 = vmatprep.subr.mxu0 0.0
        %3342 = vmatpush1.msra.mxu0 0.0
        %3343 = vmatprep.subr.mxu0 0.0
        %3344 = vmatpush1.msra.mxu0 0.0
        %3345 = vmatprep.subr.mxu0 0.0
        %3346 = vmatpush1.msra.mxu0 0.0
        %3347 = vmatprep.subr.mxu0 0.0
        %3348 = vmatpush1.msra.mxu0 0.0
        %3349 = vmatprep.subr.mxu0 0.0
        %3350 = vmatpush1.msra.mxu0 0.0
        %3351 = vmatprep.subr.mxu0 0.0
        %3352 = vmatpush1.msra.mxu0 0.0
        %3353 = vmatprep.subr.mxu0 0.0
        %3354 = vmatpush1.msra.mxu0 0.0
        %3355 = vmatprep.subr.mxu0 0.0
        %3356 = vmatpush1.msra.mxu0 0.0
        %3357 = vmatprep.subr.mxu0 0.0
        %v3358 = vand.u32 %v3154, 4294901760
        %v3359 = vsub.f32 %v3154, %v3358
        %3360 = vmatpush1.msra.mxu0 %v3359
        %3361 = vmatprep.subr.mxu0 0.0
        %v3362 = vand.u32 %v3153, 4294901760
        %v3363 = vsub.f32 %v3153, %v3362
        %3364 = vmatpush1.msra.mxu0 %v3363
        %3365 = vmatprep.subr.mxu0 0.0
        %3366 = vmatpush2.msra.mxu0 0.0
        %3367 = vmatprep.subr.mxu0 0.0
        %3368 = vmatpush2.msra.mxu0 0.0
        %3369 = vmatprep.subr.mxu0 0.0
        %3370 = vmatpush2.msra.mxu0 0.0
        %3371 = vmatprep.subr.mxu0 0.0
        %3372 = vmatpush2.msra.mxu0 0.0
        %3373 = vmatprep.subr.mxu0 0.0
        %3374 = vmatpush2.msra.mxu0 0.0
        %3375 = vmatprep.subr.mxu0 0.0
        %3376 = vmatpush2.msra.mxu0 0.0
        %3377 = vmatprep.subr.mxu0 0.0
        %3378 = vmatpush2.msra.mxu0 0.0
        %3379 = vmatprep.subr.mxu0 0.0
        %3380 = vmatpush2.msra.mxu0 0.0
        %3381 = vmatprep.subr.mxu0 0.0
        %3382 = vmatpush2.msra.mxu0 0.0
        %3383 = vmatprep.subr.mxu0 0.0
        %3384 = vmatpush2.msra.mxu0 0.0
        %3385 = vmatprep.subr.mxu0 0.0
        %3386 = vmatpush2.msra.mxu0 0.0
        %3387 = vmatprep.subr.mxu0 0.0
        %3388 = vmatpush2.msra.mxu0 0.0
        %3389 = vmatprep.subr.mxu0 0.0
        %3390 = vmatpush2.msra.mxu0 0.0
        %3391 = vmatprep.subr.mxu0 0.0
        %3392 = vmatpush2.msra.mxu0 0.0
        %3393 = vmatprep.subr.mxu0 0.0
        %3394 = vmatpush2.msra.mxu0 0.0
        %3395 = vmatprep.subr.mxu0 0.0
        %3396 = vmatpush2.msra.mxu0 0.0
        %3397 = vmatprep.mubr.f32.mxu0 0.0
        %v3398 = vand.u32 %v418, 4294901760
        %v3399 = vsub.f32 %v418, %v3398
        %3400 = vmatmul.mubr.f32.gmra.mxu0 %v3399
        %v3401 = vpop.f32.mrf.mxu0
        %v3402 = vadd.f32 %v3320, %v3401
        %v3403 = vpop.f32.mrf.mxu0
        %3404 = vmatprep.mubr.f32.mxu0 0.0
        %v3405 = vand.u32 %v421, 4294901760
        %v3406 = vsub.f32 %v421, %v3405
        %3407 = vmatmul.mubr.f32.gmra.mxu0 %v3406
        %v3408 = vpop.f32.mrf.mxu0
        %v3409 = vadd.f32 %v3326, %v3408
        %v3410 = vpop.f32.mrf.mxu0
        %3411 = vdwg.mxu0
        %3412 = vmatprep.subr.mxu0 0.0
        %3413 = vmatpush1.msra.mxu0 0.0
        %3414 = vmatprep.subr.mxu0 0.0
        %3415 = vmatpush1.msra.mxu0 0.0
        %3416 = vmatprep.subr.mxu0 0.0
        %3417 = vmatpush1.msra.mxu0 0.0
        %3418 = vmatprep.subr.mxu0 0.0
        %3419 = vmatpush1.msra.mxu0 0.0
        %3420 = vmatprep.subr.mxu0 0.0
        %3421 = vmatpush1.msra.mxu0 0.0
        %3422 = vmatprep.subr.mxu0 0.0
        %3423 = vmatpush1.msra.mxu0 0.0
        %3424 = vmatprep.subr.mxu0 0.0
        %3425 = vmatpush1.msra.mxu0 0.0
        %3426 = vmatprep.subr.mxu0 0.0
        %3427 = vmatpush1.msra.mxu0 0.0
        %3428 = vmatprep.subr.mxu0 0.0
        %3429 = vmatpush1.msra.mxu0 0.0
        %3430 = vmatprep.subr.mxu0 0.0
        %3431 = vmatpush1.msra.mxu0 0.0
        %3432 = vmatprep.subr.mxu0 0.0
        %3433 = vmatpush1.msra.mxu0 0.0
        %3434 = vmatprep.subr.mxu0 0.0
        %3435 = vmatpush1.msra.mxu0 0.0
        %3436 = vmatprep.subr.mxu0 0.0
        %3437 = vmatpush1.msra.mxu0 0.0
        %3438 = vmatprep.subr.mxu0 0.0
        %3439 = vmatpush1.msra.mxu0 0.0
        %3440 = vmatprep.subr.mxu0 0.0
        %v3441 = vand.u32 %v3154, 4294901760
        %3442 = vmatpush1.msra.mxu0 %v3441
        %3443 = vmatprep.subr.mxu0 0.0
        %v3444 = vand.u32 %v3153, 4294901760
        %3445 = vmatpush1.msra.mxu0 %v3444
        %3446 = vmatprep.subr.mxu0 0.0
        %3447 = vmatpush2.msra.mxu0 0.0
        %3448 = vmatprep.subr.mxu0 0.0
        %3449 = vmatpush2.msra.mxu0 0.0
        %3450 = vmatprep.subr.mxu0 0.0
        %3451 = vmatpush2.msra.mxu0 0.0
        %3452 = vmatprep.subr.mxu0 0.0
        %3453 = vmatpush2.msra.mxu0 0.0
        %3454 = vmatprep.subr.mxu0 0.0
        %3455 = vmatpush2.msra.mxu0 0.0
        %3456 = vmatprep.subr.mxu0 0.0
        %3457 = vmatpush2.msra.mxu0 0.0
        %3458 = vmatprep.subr.mxu0 0.0
        %3459 = vmatpush2.msra.mxu0 0.0
        %3460 = vmatprep.subr.mxu0 0.0
        %3461 = vmatpush2.msra.mxu0 0.0
        %3462 = vmatprep.subr.mxu0 0.0
        %3463 = vmatpush2.msra.mxu0 0.0
        %3464 = vmatprep.subr.mxu0 0.0
        %3465 = vmatpush2.msra.mxu0 0.0
        %3466 = vmatprep.subr.mxu0 0.0
        %3467 = vmatpush2.msra.mxu0 0.0
        %3468 = vmatprep.subr.mxu0 0.0
        %3469 = vmatpush2.msra.mxu0 0.0
        %3470 = vmatprep.subr.mxu0 0.0
        %3471 = vmatpush2.msra.mxu0 0.0
        %3472 = vmatprep.subr.mxu0 0.0
        %3473 = vmatpush2.msra.mxu0 0.0
        %3474 = vmatprep.subr.mxu0 0.0
        %3475 = vmatpush2.msra.mxu0 0.0
        %3476 = vmatprep.subr.mxu0 0.0
        %3477 = vmatpush2.msra.mxu0 0.0
        %3478 = vmatprep.mubr.f32.mxu0 0.0
        %v3479 = vand.u32 %v418, 4294901760
        %v3480 = vsub.f32 %v418, %v3479
        %v3481 = vand.u32 %v3480, 4294901760
        %3482 = vmatmul.mubr.f32.gmra.mxu0 %v3481
        %v3483 = vpop.f32.mrf.mxu0
        %v3484 = vadd.f32 %v3402, %v3483
        %v3485 = vpop.f32.mrf.mxu0
        %3486 = vmatprep.mubr.f32.mxu0 0.0
        %v3487 = vand.u32 %v421, 4294901760
        %v3488 = vsub.f32 %v421, %v3487
        %v3489 = vand.u32 %v3488, 4294901760
        %3490 = vmatmul.mubr.f32.gmra.mxu0 %v3489
        %v3491 = vpop.f32.mrf.mxu0
        %v3492 = vadd.f32 %v3409, %v3491
        %v3493 = vpop.f32.mrf.mxu0
        %3494 = vdwg.mxu0
        %3495 = vmatprep.subr.mxu0 0.0
        %3496 = vmatpush1.msra.mxu0 0.0
        %3497 = vmatprep.subr.mxu0 0.0
        %3498 = vmatpush1.msra.mxu0 0.0
        %3499 = vmatprep.subr.mxu0 0.0
        %3500 = vmatpush1.msra.mxu0 0.0
        %3501 = vmatprep.subr.mxu0 0.0
        %3502 = vmatpush1.msra.mxu0 0.0
        %3503 = vmatprep.subr.mxu0 0.0
        %3504 = vmatpush1.msra.mxu0 0.0
        %3505 = vmatprep.subr.mxu0 0.0
        %3506 = vmatpush1.msra.mxu0 0.0
        %3507 = vmatprep.subr.mxu0 0.0
        %3508 = vmatpush1.msra.mxu0 0.0
        %3509 = vmatprep.subr.mxu0 0.0
        %3510 = vmatpush1.msra.mxu0 0.0
        %3511 = vmatprep.subr.mxu0 0.0
        %3512 = vmatpush1.msra.mxu0 0.0
        %3513 = vmatprep.subr.mxu0 0.0
        %3514 = vmatpush1.msra.mxu0 0.0
        %3515 = vmatprep.subr.mxu0 0.0
        %3516 = vmatpush1.msra.mxu0 0.0
        %3517 = vmatprep.subr.mxu0 0.0
        %3518 = vmatpush1.msra.mxu0 0.0
        %3519 = vmatprep.subr.mxu0 0.0
        %3520 = vmatpush1.msra.mxu0 0.0
        %3521 = vmatprep.subr.mxu0 0.0
        %3522 = vmatpush1.msra.mxu0 0.0
        %3523 = vmatprep.subr.mxu0 0.0
        %v3524 = vand.u32 %v3154, 4294901760
        %v3525 = vsub.f32 %v3154, %v3524
        %v3526 = vand.u32 %v3525, 4294901760
        %3527 = vmatpush1.msra.mxu0 %v3526
        %3528 = vmatprep.subr.mxu0 0.0
        %v3529 = vand.u32 %v3153, 4294901760
        %v3530 = vsub.f32 %v3153, %v3529
        %v3531 = vand.u32 %v3530, 4294901760
        %3532 = vmatpush1.msra.mxu0 %v3531
        %3533 = vmatprep.subr.mxu0 0.0
        %3534 = vmatpush2.msra.mxu0 0.0
        %3535 = vmatprep.subr.mxu0 0.0
        %3536 = vmatpush2.msra.mxu0 0.0
        %3537 = vmatprep.subr.mxu0 0.0
        %3538 = vmatpush2.msra.mxu0 0.0
        %3539 = vmatprep.subr.mxu0 0.0
        %3540 = vmatpush2.msra.mxu0 0.0
        %3541 = vmatprep.subr.mxu0 0.0
        %3542 = vmatpush2.msra.mxu0 0.0
        %3543 = vmatprep.subr.mxu0 0.0
        %3544 = vmatpush2.msra.mxu0 0.0
        %3545 = vmatprep.subr.mxu0 0.0
        %3546 = vmatpush2.msra.mxu0 0.0
        %3547 = vmatprep.subr.mxu0 0.0
        %3548 = vmatpush2.msra.mxu0 0.0
        %3549 = vmatprep.subr.mxu0 0.0
        %3550 = vmatpush2.msra.mxu0 0.0
        %3551 = vmatprep.subr.mxu0 0.0
        %3552 = vmatpush2.msra.mxu0 0.0
        %3553 = vmatprep.subr.mxu0 0.0
        %3554 = vmatpush2.msra.mxu0 0.0
        %3555 = vmatprep.subr.mxu0 0.0
        %3556 = vmatpush2.msra.mxu0 0.0
        %3557 = vmatprep.subr.mxu0 0.0
        %3558 = vmatpush2.msra.mxu0 0.0
        %3559 = vmatprep.subr.mxu0 0.0
        %3560 = vmatpush2.msra.mxu0 0.0
        %3561 = vmatprep.subr.mxu0 0.0
        %3562 = vmatpush2.msra.mxu0 0.0
        %3563 = vmatprep.subr.mxu0 0.0
        %3564 = vmatpush2.msra.mxu0 0.0
        %3565 = vmatprep.mubr.f32.mxu0 0.0
        %v3566 = vand.u32 %v418, 4294901760
        %3567 = vmatmul.mubr.f32.gmra.mxu0 %v3566
        %v3568 = vpop.f32.mrf.mxu0
        %v3569 = vadd.f32 %v3484, %v3568
        %v3570 = vpop.f32.mrf.mxu0
        %3571 = vmatprep.mubr.f32.mxu0 0.0
        %v3572 = vand.u32 %v421, 4294901760
        %3573 = vmatmul.mubr.f32.gmra.mxu0 %v3572
        %v3574 = vpop.f32.mrf.mxu0
        %v3575 = vadd.f32 %v3492, %v3574
        %v3576 = vpop.f32.mrf.mxu0
        %3577 = vdwg.mxu0
        %3578 = vmatprep.subr.mxu0 0.0
        %3579 = vmatpush1.msra.mxu0 0.0
        %3580 = vmatprep.subr.mxu0 0.0
        %3581 = vmatpush1.msra.mxu0 0.0
        %3582 = vmatprep.subr.mxu0 0.0
        %3583 = vmatpush1.msra.mxu0 0.0
        %3584 = vmatprep.subr.mxu0 0.0
        %3585 = vmatpush1.msra.mxu0 0.0
        %3586 = vmatprep.subr.mxu0 0.0
        %3587 = vmatpush1.msra.mxu0 0.0
        %3588 = vmatprep.subr.mxu0 0.0
        %3589 = vmatpush1.msra.mxu0 0.0
        %3590 = vmatprep.subr.mxu0 0.0
        %3591 = vmatpush1.msra.mxu0 0.0
        %3592 = vmatprep.subr.mxu0 0.0
        %3593 = vmatpush1.msra.mxu0 0.0
        %3594 = vmatprep.subr.mxu0 0.0
        %3595 = vmatpush1.msra.mxu0 0.0
        %3596 = vmatprep.subr.mxu0 0.0
        %3597 = vmatpush1.msra.mxu0 0.0
        %3598 = vmatprep.subr.mxu0 0.0
        %3599 = vmatpush1.msra.mxu0 0.0
        %3600 = vmatprep.subr.mxu0 0.0
        %3601 = vmatpush1.msra.mxu0 0.0
        %3602 = vmatprep.subr.mxu0 0.0
        %3603 = vmatpush1.msra.mxu0 0.0
        %3604 = vmatprep.subr.mxu0 0.0
        %3605 = vmatpush1.msra.mxu0 0.0
        %3606 = vmatprep.subr.mxu0 0.0
        %v3607 = vand.u32 %v3154, 4294901760
        %3608 = vmatpush1.msra.mxu0 %v3607
        %3609 = vmatprep.subr.mxu0 0.0
        %v3610 = vand.u32 %v3153, 4294901760
        %3611 = vmatpush1.msra.mxu0 %v3610
        %3612 = vmatprep.subr.mxu0 0.0
        %3613 = vmatpush2.msra.mxu0 0.0
        %3614 = vmatprep.subr.mxu0 0.0
        %3615 = vmatpush2.msra.mxu0 0.0
        %3616 = vmatprep.subr.mxu0 0.0
        %3617 = vmatpush2.msra.mxu0 0.0
        %3618 = vmatprep.subr.mxu0 0.0
        %3619 = vmatpush2.msra.mxu0 0.0
        %3620 = vmatprep.subr.mxu0 0.0
        %3621 = vmatpush2.msra.mxu0 0.0
        %3622 = vmatprep.subr.mxu0 0.0
        %3623 = vmatpush2.msra.mxu0 0.0
        %3624 = vmatprep.subr.mxu0 0.0
        %3625 = vmatpush2.msra.mxu0 0.0
        %3626 = vmatprep.subr.mxu0 0.0
        %3627 = vmatpush2.msra.mxu0 0.0
        %3628 = vmatprep.subr.mxu0 0.0
        %3629 = vmatpush2.msra.mxu0 0.0
        %3630 = vmatprep.subr.mxu0 0.0
        %3631 = vmatpush2.msra.mxu0 0.0
        %3632 = vmatprep.subr.mxu0 0.0
        %3633 = vmatpush2.msra.mxu0 0.0
        %3634 = vmatprep.subr.mxu0 0.0
        %3635 = vmatpush2.msra.mxu0 0.0
        %3636 = vmatprep.subr.mxu0 0.0
        %3637 = vmatpush2.msra.mxu0 0.0
        %3638 = vmatprep.subr.mxu0 0.0
        %3639 = vmatpush2.msra.mxu0 0.0
        %3640 = vmatprep.subr.mxu0 0.0
        %3641 = vmatpush2.msra.mxu0 0.0
        %3642 = vmatprep.subr.mxu0 0.0
        %3643 = vmatpush2.msra.mxu0 0.0
        %3644 = vmatprep.mubr.f32.mxu0 0.0
        %v3645 = vand.u32 %v418, 4294901760
        %3646 = vmatmul.mubr.f32.gmra.mxu0 %v3645
        %v3647 = vpop.f32.mrf.mxu0
        %v3648 = vadd.f32 %v3569, %v3647
        %v3649 = vpop.f32.mrf.mxu0
        %3650 = vmatprep.mubr.f32.mxu0 0.0
        %v3651 = vand.u32 %v421, 4294901760
        %3652 = vmatmul.mubr.f32.gmra.mxu0 %v3651
        %v3653 = vpop.f32.mrf.mxu0
        %v3654 = vadd.f32 %v3575, %v3653
        %v3655 = vpop.f32.mrf.mxu0
        %3656 = vdwg.mxu0
        %3657 = vmatprep.subr.mxu0 0.0
        %3658 = vmatpush1.msra.mxu0 0.0
        %3659 = vmatprep.subr.mxu0 0.0
        %3660 = vmatpush1.msra.mxu0 0.0
        %3661 = vmatprep.subr.mxu0 0.0
        %3662 = vmatpush1.msra.mxu0 0.0
        %3663 = vmatprep.subr.mxu0 0.0
        %3664 = vmatpush1.msra.mxu0 0.0
        %3665 = vmatprep.subr.mxu0 0.0
        %3666 = vmatpush1.msra.mxu0 0.0
        %3667 = vmatprep.subr.mxu0 0.0
        %3668 = vmatpush1.msra.mxu0 0.0
        %3669 = vmatprep.subr.mxu0 0.0
        %3670 = vmatpush1.msra.mxu0 0.0
        %3671 = vmatprep.subr.mxu0 0.0
        %3672 = vmatpush1.msra.mxu0 0.0
        %3673 = vmatprep.subr.mxu0 0.0
        %3674 = vmatpush1.msra.mxu0 0.0
        %3675 = vmatprep.subr.mxu0 0.0
        %3676 = vmatpush1.msra.mxu0 0.0
        %3677 = vmatprep.subr.mxu0 0.0
        %3678 = vmatpush1.msra.mxu0 0.0
        %3679 = vmatprep.subr.mxu0 0.0
        %3680 = vmatpush1.msra.mxu0 0.0
        %3681 = vmatprep.subr.mxu0 0.0
        %3682 = vmatpush1.msra.mxu0 0.0
        %3683 = vmatprep.subr.mxu0 0.0
        %3684 = vmatpush1.msra.mxu0 0.0
        %3685 = vmatprep.subr.mxu0 0.0
        %v3686 = vand.u32 %v3154, 4294901760
        %3687 = vmatpush1.msra.mxu0 %v3686
        %3688 = vmatprep.subr.mxu0 0.0
        %v3689 = vand.u32 %v3153, 4294901760
        %3690 = vmatpush1.msra.mxu0 %v3689
        %3691 = vmatprep.subr.mxu0 0.0
        %3692 = vmatpush2.msra.mxu0 0.0
        %3693 = vmatprep.subr.mxu0 0.0
        %3694 = vmatpush2.msra.mxu0 0.0
        %3695 = vmatprep.subr.mxu0 0.0
        %3696 = vmatpush2.msra.mxu0 0.0
        %3697 = vmatprep.subr.mxu0 0.0
        %3698 = vmatpush2.msra.mxu0 0.0
        %3699 = vmatprep.subr.mxu0 0.0
        %3700 = vmatpush2.msra.mxu0 0.0
        %3701 = vmatprep.subr.mxu0 0.0
        %3702 = vmatpush2.msra.mxu0 0.0
        %3703 = vmatprep.subr.mxu0 0.0
        %3704 = vmatpush2.msra.mxu0 0.0
        %3705 = vmatprep.subr.mxu0 0.0
        %3706 = vmatpush2.msra.mxu0 0.0
        %3707 = vmatprep.subr.mxu0 0.0
        %3708 = vmatpush2.msra.mxu0 0.0
        %3709 = vmatprep.subr.mxu0 0.0
        %3710 = vmatpush2.msra.mxu0 0.0
        %3711 = vmatprep.subr.mxu0 0.0
        %3712 = vmatpush2.msra.mxu0 0.0
        %3713 = vmatprep.subr.mxu0 0.0
        %3714 = vmatpush2.msra.mxu0 0.0
        %3715 = vmatprep.subr.mxu0 0.0
        %3716 = vmatpush2.msra.mxu0 0.0
        %3717 = vmatprep.subr.mxu0 0.0
        %3718 = vmatpush2.msra.mxu0 0.0
        %3719 = vmatprep.subr.mxu0 0.0
        %3720 = vmatpush2.msra.mxu0 0.0
        %3721 = vmatprep.subr.mxu0 0.0
        %3722 = vmatpush2.msra.mxu0 0.0
        %3723 = vmatprep.mubr.f32.mxu0 0.0
        %v3724 = vand.u32 %v926, 4294901760
        %v3725 = vsub.f32 %v926, %v3724
        %v3726 = vand.u32 %v3725, 4294901760
        %v3727 = vsub.f32 %v3725, %v3726
        %v3728 = vand.u32 %v3727, 4294901760
        %3729 = vmatmul.mubr.f32.gmra.mxu0 %v3728
        %v3730 = vpop.f32.mrf.mxu0
        %v3731 = vadd.f32 0.0, %v3730
        %v3732 = vpop.f32.mrf.mxu0
        %3733 = vmatprep.mubr.f32.mxu0 0.0
        %v3734 = vand.u32 %v929, 4294901760
        %v3735 = vsub.f32 %v929, %v3734
        %v3736 = vand.u32 %v3735, 4294901760
        %v3737 = vsub.f32 %v3735, %v3736
        %v3738 = vand.u32 %v3737, 4294901760
        %3739 = vmatmul.mubr.f32.gmra.mxu0 %v3738
        %v3740 = vpop.f32.mrf.mxu0
        %v3741 = vadd.f32 0.0, %v3740
        %v3742 = vpop.f32.mrf.mxu0
        %3743 = vdwg.mxu0
        %3744 = vmatprep.subr.mxu0 0.0
        %3745 = vmatpush1.msra.mxu0 0.0
        %3746 = vmatprep.subr.mxu0 0.0
        %3747 = vmatpush1.msra.mxu0 0.0
        %3748 = vmatprep.subr.mxu0 0.0
        %3749 = vmatpush1.msra.mxu0 0.0
        %3750 = vmatprep.subr.mxu0 0.0
        %3751 = vmatpush1.msra.mxu0 0.0
        %3752 = vmatprep.subr.mxu0 0.0
        %3753 = vmatpush1.msra.mxu0 0.0
        %3754 = vmatprep.subr.mxu0 0.0
        %3755 = vmatpush1.msra.mxu0 0.0
        %3756 = vmatprep.subr.mxu0 0.0
        %3757 = vmatpush1.msra.mxu0 0.0
        %3758 = vmatprep.subr.mxu0 0.0
        %3759 = vmatpush1.msra.mxu0 0.0
        %3760 = vmatprep.subr.mxu0 0.0
        %3761 = vmatpush1.msra.mxu0 0.0
        %3762 = vmatprep.subr.mxu0 0.0
        %3763 = vmatpush1.msra.mxu0 0.0
        %3764 = vmatprep.subr.mxu0 0.0
        %3765 = vmatpush1.msra.mxu0 0.0
        %3766 = vmatprep.subr.mxu0 0.0
        %3767 = vmatpush1.msra.mxu0 0.0
        %3768 = vmatprep.subr.mxu0 0.0
        %3769 = vmatpush1.msra.mxu0 0.0
        %3770 = vmatprep.subr.mxu0 0.0
        %3771 = vmatpush1.msra.mxu0 0.0
        %3772 = vmatprep.subr.mxu0 0.0
        %v3773 = vand.u32 %v3154, 4294901760
        %v3774 = vsub.f32 %v3154, %v3773
        %v3775 = vand.u32 %v3774, 4294901760
        %v3776 = vsub.f32 %v3774, %v3775
        %v3777 = vand.u32 %v3776, 4294901760
        %3778 = vmatpush1.msra.mxu0 %v3777
        %3779 = vmatprep.subr.mxu0 0.0
        %v3780 = vand.u32 %v3153, 4294901760
        %v3781 = vsub.f32 %v3153, %v3780
        %v3782 = vand.u32 %v3781, 4294901760
        %v3783 = vsub.f32 %v3781, %v3782
        %v3784 = vand.u32 %v3783, 4294901760
        %3785 = vmatpush1.msra.mxu0 %v3784
        %3786 = vmatprep.subr.mxu0 0.0
        %3787 = vmatpush2.msra.mxu0 0.0
        %3788 = vmatprep.subr.mxu0 0.0
        %3789 = vmatpush2.msra.mxu0 0.0
        %3790 = vmatprep.subr.mxu0 0.0
        %3791 = vmatpush2.msra.mxu0 0.0
        %3792 = vmatprep.subr.mxu0 0.0
        %3793 = vmatpush2.msra.mxu0 0.0
        %3794 = vmatprep.subr.mxu0 0.0
        %3795 = vmatpush2.msra.mxu0 0.0
        %3796 = vmatprep.subr.mxu0 0.0
        %3797 = vmatpush2.msra.mxu0 0.0
        %3798 = vmatprep.subr.mxu0 0.0
        %3799 = vmatpush2.msra.mxu0 0.0
        %3800 = vmatprep.subr.mxu0 0.0
        %3801 = vmatpush2.msra.mxu0 0.0
        %3802 = vmatprep.subr.mxu0 0.0
        %3803 = vmatpush2.msra.mxu0 0.0
        %3804 = vmatprep.subr.mxu0 0.0
        %3805 = vmatpush2.msra.mxu0 0.0
        %3806 = vmatprep.subr.mxu0 0.0
        %3807 = vmatpush2.msra.mxu0 0.0
        %3808 = vmatprep.subr.mxu0 0.0
        %3809 = vmatpush2.msra.mxu0 0.0
        %3810 = vmatprep.subr.mxu0 0.0
        %3811 = vmatpush2.msra.mxu0 0.0
        %3812 = vmatprep.subr.mxu0 0.0
        %3813 = vmatpush2.msra.mxu0 0.0
        %3814 = vmatprep.subr.mxu0 0.0
        %3815 = vmatpush2.msra.mxu0 0.0
        %3816 = vmatprep.subr.mxu0 0.0
        %3817 = vmatpush2.msra.mxu0 0.0
        %3818 = vmatprep.mubr.f32.mxu0 0.0
        %v3819 = vand.u32 %v926, 4294901760
        %3820 = vmatmul.mubr.f32.gmra.mxu0 %v3819
        %v3821 = vpop.f32.mrf.mxu0
        %v3822 = vadd.f32 %v3731, %v3821
        %v3823 = vpop.f32.mrf.mxu0
        %3824 = vmatprep.mubr.f32.mxu0 0.0
        %v3825 = vand.u32 %v929, 4294901760
        %3826 = vmatmul.mubr.f32.gmra.mxu0 %v3825
        %v3827 = vpop.f32.mrf.mxu0
        %v3828 = vadd.f32 %v3741, %v3827
        %v3829 = vpop.f32.mrf.mxu0
        %3830 = vdwg.mxu0
        %3831 = vmatprep.subr.mxu0 0.0
        %3832 = vmatpush1.msra.mxu0 0.0
        %3833 = vmatprep.subr.mxu0 0.0
        %3834 = vmatpush1.msra.mxu0 0.0
        %3835 = vmatprep.subr.mxu0 0.0
        %3836 = vmatpush1.msra.mxu0 0.0
        %3837 = vmatprep.subr.mxu0 0.0
        %3838 = vmatpush1.msra.mxu0 0.0
        %3839 = vmatprep.subr.mxu0 0.0
        %3840 = vmatpush1.msra.mxu0 0.0
        %3841 = vmatprep.subr.mxu0 0.0
        %3842 = vmatpush1.msra.mxu0 0.0
        %3843 = vmatprep.subr.mxu0 0.0
        %3844 = vmatpush1.msra.mxu0 0.0
        %3845 = vmatprep.subr.mxu0 0.0
        %3846 = vmatpush1.msra.mxu0 0.0
        %3847 = vmatprep.subr.mxu0 0.0
        %3848 = vmatpush1.msra.mxu0 0.0
        %3849 = vmatprep.subr.mxu0 0.0
        %3850 = vmatpush1.msra.mxu0 0.0
        %3851 = vmatprep.subr.mxu0 0.0
        %3852 = vmatpush1.msra.mxu0 0.0
        %3853 = vmatprep.subr.mxu0 0.0
        %3854 = vmatpush1.msra.mxu0 0.0
        %3855 = vmatprep.subr.mxu0 0.0
        %3856 = vmatpush1.msra.mxu0 0.0
        %3857 = vmatprep.subr.mxu0 0.0
        %3858 = vmatpush1.msra.mxu0 0.0
        %3859 = vmatprep.subr.mxu0 0.0
        %v3860 = vand.u32 %v3154, 4294901760
        %v3861 = vsub.f32 %v3154, %v3860
        %3862 = vmatpush1.msra.mxu0 %v3861
        %3863 = vmatprep.subr.mxu0 0.0
        %v3864 = vand.u32 %v3153, 4294901760
        %v3865 = vsub.f32 %v3153, %v3864
        %3866 = vmatpush1.msra.mxu0 %v3865
        %3867 = vmatprep.subr.mxu0 0.0
        %3868 = vmatpush2.msra.mxu0 0.0
        %3869 = vmatprep.subr.mxu0 0.0
        %3870 = vmatpush2.msra.mxu0 0.0
        %3871 = vmatprep.subr.mxu0 0.0
        %3872 = vmatpush2.msra.mxu0 0.0
        %3873 = vmatprep.subr.mxu0 0.0
        %3874 = vmatpush2.msra.mxu0 0.0
        %3875 = vmatprep.subr.mxu0 0.0
        %3876 = vmatpush2.msra.mxu0 0.0
        %3877 = vmatprep.subr.mxu0 0.0
        %3878 = vmatpush2.msra.mxu0 0.0
        %3879 = vmatprep.subr.mxu0 0.0
        %3880 = vmatpush2.msra.mxu0 0.0
        %3881 = vmatprep.subr.mxu0 0.0
        %3882 = vmatpush2.msra.mxu0 0.0
        %3883 = vmatprep.subr.mxu0 0.0
        %3884 = vmatpush2.msra.mxu0 0.0
        %3885 = vmatprep.subr.mxu0 0.0
        %3886 = vmatpush2.msra.mxu0 0.0
        %3887 = vmatprep.subr.mxu0 0.0
        %3888 = vmatpush2.msra.mxu0 0.0
        %3889 = vmatprep.subr.mxu0 0.0
        %3890 = vmatpush2.msra.mxu0 0.0
        %3891 = vmatprep.subr.mxu0 0.0
        %3892 = vmatpush2.msra.mxu0 0.0
        %3893 = vmatprep.subr.mxu0 0.0
        %3894 = vmatpush2.msra.mxu0 0.0
        %3895 = vmatprep.subr.mxu0 0.0
        %3896 = vmatpush2.msra.mxu0 0.0
        %3897 = vmatprep.subr.mxu0 0.0
        %3898 = vmatpush2.msra.mxu0 0.0
        %3899 = vmatprep.mubr.f32.mxu0 0.0
        %v3900 = vand.u32 %v926, 4294901760
        %v3901 = vsub.f32 %v926, %v3900
        %3902 = vmatmul.mubr.f32.gmra.mxu0 %v3901
        %v3903 = vpop.f32.mrf.mxu0
        %v3904 = vadd.f32 %v3822, %v3903
        %v3905 = vpop.f32.mrf.mxu0
        %3906 = vmatprep.mubr.f32.mxu0 0.0
        %v3907 = vand.u32 %v929, 4294901760
        %v3908 = vsub.f32 %v929, %v3907
        %3909 = vmatmul.mubr.f32.gmra.mxu0 %v3908
        %v3910 = vpop.f32.mrf.mxu0
        %v3911 = vadd.f32 %v3828, %v3910
        %v3912 = vpop.f32.mrf.mxu0
        %3913 = vdwg.mxu0
        %3914 = vmatprep.subr.mxu0 0.0
        %3915 = vmatpush1.msra.mxu0 0.0
        %3916 = vmatprep.subr.mxu0 0.0
        %3917 = vmatpush1.msra.mxu0 0.0
        %3918 = vmatprep.subr.mxu0 0.0
        %3919 = vmatpush1.msra.mxu0 0.0
        %3920 = vmatprep.subr.mxu0 0.0
        %3921 = vmatpush1.msra.mxu0 0.0
        %3922 = vmatprep.subr.mxu0 0.0
        %3923 = vmatpush1.msra.mxu0 0.0
        %3924 = vmatprep.subr.mxu0 0.0
        %3925 = vmatpush1.msra.mxu0 0.0
        %3926 = vmatprep.subr.mxu0 0.0
        %3927 = vmatpush1.msra.mxu0 0.0
        %3928 = vmatprep.subr.mxu0 0.0
        %3929 = vmatpush1.msra.mxu0 0.0
        %3930 = vmatprep.subr.mxu0 0.0
        %3931 = vmatpush1.msra.mxu0 0.0
        %3932 = vmatprep.subr.mxu0 0.0
        %3933 = vmatpush1.msra.mxu0 0.0
        %3934 = vmatprep.subr.mxu0 0.0
        %3935 = vmatpush1.msra.mxu0 0.0
        %3936 = vmatprep.subr.mxu0 0.0
        %3937 = vmatpush1.msra.mxu0 0.0
        %3938 = vmatprep.subr.mxu0 0.0
        %3939 = vmatpush1.msra.mxu0 0.0
        %3940 = vmatprep.subr.mxu0 0.0
        %3941 = vmatpush1.msra.mxu0 0.0
        %3942 = vmatprep.subr.mxu0 0.0
        %v3943 = vand.u32 %v3154, 4294901760
        %3944 = vmatpush1.msra.mxu0 %v3943
        %3945 = vmatprep.subr.mxu0 0.0
        %v3946 = vand.u32 %v3153, 4294901760
        %3947 = vmatpush1.msra.mxu0 %v3946
        %3948 = vmatprep.subr.mxu0 0.0
        %3949 = vmatpush2.msra.mxu0 0.0
        %3950 = vmatprep.subr.mxu0 0.0
        %3951 = vmatpush2.msra.mxu0 0.0
        %3952 = vmatprep.subr.mxu0 0.0
        %3953 = vmatpush2.msra.mxu0 0.0
        %3954 = vmatprep.subr.mxu0 0.0
        %3955 = vmatpush2.msra.mxu0 0.0
        %3956 = vmatprep.subr.mxu0 0.0
        %3957 = vmatpush2.msra.mxu0 0.0
        %3958 = vmatprep.subr.mxu0 0.0
        %3959 = vmatpush2.msra.mxu0 0.0
        %3960 = vmatprep.subr.mxu0 0.0
        %3961 = vmatpush2.msra.mxu0 0.0
        %3962 = vmatprep.subr.mxu0 0.0
        %3963 = vmatpush2.msra.mxu0 0.0
        %3964 = vmatprep.subr.mxu0 0.0
        %3965 = vmatpush2.msra.mxu0 0.0
        %3966 = vmatprep.subr.mxu0 0.0
        %3967 = vmatpush2.msra.mxu0 0.0
        %3968 = vmatprep.subr.mxu0 0.0
        %3969 = vmatpush2.msra.mxu0 0.0
        %3970 = vmatprep.subr.mxu0 0.0
        %3971 = vmatpush2.msra.mxu0 0.0
        %3972 = vmatprep.subr.mxu0 0.0
        %3973 = vmatpush2.msra.mxu0 0.0
        %3974 = vmatprep.subr.mxu0 0.0
        %3975 = vmatpush2.msra.mxu0 0.0
        %3976 = vmatprep.subr.mxu0 0.0
        %3977 = vmatpush2.msra.mxu0 0.0
        %3978 = vmatprep.subr.mxu0 0.0
        %3979 = vmatpush2.msra.mxu0 0.0
        %3980 = vmatprep.mubr.f32.mxu0 0.0
        %v3981 = vand.u32 %v926, 4294901760
        %v3982 = vsub.f32 %v926, %v3981
        %v3983 = vand.u32 %v3982, 4294901760
        %3984 = vmatmul.mubr.f32.gmra.mxu0 %v3983
        %v3985 = vpop.f32.mrf.mxu0
        %v3986 = vadd.f32 %v3904, %v3985
        %v3987 = vpop.f32.mrf.mxu0
        %3988 = vmatprep.mubr.f32.mxu0 0.0
        %v3989 = vand.u32 %v929, 4294901760
        %v3990 = vsub.f32 %v929, %v3989
        %v3991 = vand.u32 %v3990, 4294901760
        %3992 = vmatmul.mubr.f32.gmra.mxu0 %v3991
        %v3993 = vpop.f32.mrf.mxu0
        %v3994 = vadd.f32 %v3911, %v3993
        %v3995 = vpop.f32.mrf.mxu0
        %3996 = vdwg.mxu0
        %3997 = vmatprep.subr.mxu0 0.0
        %3998 = vmatpush1.msra.mxu0 0.0
        %3999 = vmatprep.subr.mxu0 0.0
        %4000 = vmatpush1.msra.mxu0 0.0
        %4001 = vmatprep.subr.mxu0 0.0
        %4002 = vmatpush1.msra.mxu0 0.0
        %4003 = vmatprep.subr.mxu0 0.0
        %4004 = vmatpush1.msra.mxu0 0.0
        %4005 = vmatprep.subr.mxu0 0.0
        %4006 = vmatpush1.msra.mxu0 0.0
        %4007 = vmatprep.subr.mxu0 0.0
        %4008 = vmatpush1.msra.mxu0 0.0
        %4009 = vmatprep.subr.mxu0 0.0
        %4010 = vmatpush1.msra.mxu0 0.0
        %4011 = vmatprep.subr.mxu0 0.0
        %4012 = vmatpush1.msra.mxu0 0.0
        %4013 = vmatprep.subr.mxu0 0.0
        %4014 = vmatpush1.msra.mxu0 0.0
        %4015 = vmatprep.subr.mxu0 0.0
        %4016 = vmatpush1.msra.mxu0 0.0
        %4017 = vmatprep.subr.mxu0 0.0
        %4018 = vmatpush1.msra.mxu0 0.0
        %4019 = vmatprep.subr.mxu0 0.0
        %4020 = vmatpush1.msra.mxu0 0.0
        %4021 = vmatprep.subr.mxu0 0.0
        %4022 = vmatpush1.msra.mxu0 0.0
        %4023 = vmatprep.subr.mxu0 0.0
        %4024 = vmatpush1.msra.mxu0 0.0
        %4025 = vmatprep.subr.mxu0 0.0
        %v4026 = vand.u32 %v3154, 4294901760
        %v4027 = vsub.f32 %v3154, %v4026
        %v4028 = vand.u32 %v4027, 4294901760
        %4029 = vmatpush1.msra.mxu0 %v4028
        %4030 = vmatprep.subr.mxu0 0.0
        %v4031 = vand.u32 %v3153, 4294901760
        %v4032 = vsub.f32 %v3153, %v4031
        %v4033 = vand.u32 %v4032, 4294901760
        %4034 = vmatpush1.msra.mxu0 %v4033
        %4035 = vmatprep.subr.mxu0 0.0
        %4036 = vmatpush2.msra.mxu0 0.0
        %4037 = vmatprep.subr.mxu0 0.0
        %4038 = vmatpush2.msra.mxu0 0.0
        %4039 = vmatprep.subr.mxu0 0.0
        %4040 = vmatpush2.msra.mxu0 0.0
        %4041 = vmatprep.subr.mxu0 0.0
        %4042 = vmatpush2.msra.mxu0 0.0
        %4043 = vmatprep.subr.mxu0 0.0
        %4044 = vmatpush2.msra.mxu0 0.0
        %4045 = vmatprep.subr.mxu0 0.0
        %4046 = vmatpush2.msra.mxu0 0.0
        %4047 = vmatprep.subr.mxu0 0.0
        %4048 = vmatpush2.msra.mxu0 0.0
        %4049 = vmatprep.subr.mxu0 0.0
        %4050 = vmatpush2.msra.mxu0 0.0
        %4051 = vmatprep.subr.mxu0 0.0
        %4052 = vmatpush2.msra.mxu0 0.0
        %4053 = vmatprep.subr.mxu0 0.0
        %4054 = vmatpush2.msra.mxu0 0.0
        %4055 = vmatprep.subr.mxu0 0.0
        %4056 = vmatpush2.msra.mxu0 0.0
        %4057 = vmatprep.subr.mxu0 0.0
        %4058 = vmatpush2.msra.mxu0 0.0
        %4059 = vmatprep.subr.mxu0 0.0
        %4060 = vmatpush2.msra.mxu0 0.0
        %4061 = vmatprep.subr.mxu0 0.0
        %4062 = vmatpush2.msra.mxu0 0.0
        %4063 = vmatprep.subr.mxu0 0.0
        %4064 = vmatpush2.msra.mxu0 0.0
        %4065 = vmatprep.subr.mxu0 0.0
        %4066 = vmatpush2.msra.mxu0 0.0
        %4067 = vmatprep.mubr.f32.mxu0 0.0
        %v4068 = vand.u32 %v926, 4294901760
        %4069 = vmatmul.mubr.f32.gmra.mxu0 %v4068
        %v4070 = vpop.f32.mrf.mxu0
        %v4071 = vadd.f32 %v3986, %v4070
        %v4072 = vpop.f32.mrf.mxu0
        %4073 = vmatprep.mubr.f32.mxu0 0.0
        %v4074 = vand.u32 %v929, 4294901760
        %4075 = vmatmul.mubr.f32.gmra.mxu0 %v4074
        %v4076 = vpop.f32.mrf.mxu0
        %v4077 = vadd.f32 %v3994, %v4076
        %v4078 = vpop.f32.mrf.mxu0
        %4079 = vdwg.mxu0
        %4080 = vmatprep.subr.mxu0 0.0
        %4081 = vmatpush1.msra.mxu0 0.0
        %4082 = vmatprep.subr.mxu0 0.0
        %4083 = vmatpush1.msra.mxu0 0.0
        %4084 = vmatprep.subr.mxu0 0.0
        %4085 = vmatpush1.msra.mxu0 0.0
        %4086 = vmatprep.subr.mxu0 0.0
        %4087 = vmatpush1.msra.mxu0 0.0
        %4088 = vmatprep.subr.mxu0 0.0
        %4089 = vmatpush1.msra.mxu0 0.0
        %4090 = vmatprep.subr.mxu0 0.0
        %4091 = vmatpush1.msra.mxu0 0.0
        %4092 = vmatprep.subr.mxu0 0.0
        %4093 = vmatpush1.msra.mxu0 0.0
        %4094 = vmatprep.subr.mxu0 0.0
        %4095 = vmatpush1.msra.mxu0 0.0
        %4096 = vmatprep.subr.mxu0 0.0
        %4097 = vmatpush1.msra.mxu0 0.0
        %4098 = vmatprep.subr.mxu0 0.0
        %4099 = vmatpush1.msra.mxu0 0.0
        %4100 = vmatprep.subr.mxu0 0.0
        %4101 = vmatpush1.msra.mxu0 0.0
        %4102 = vmatprep.subr.mxu0 0.0
        %4103 = vmatpush1.msra.mxu0 0.0
        %4104 = vmatprep.subr.mxu0 0.0
        %4105 = vmatpush1.msra.mxu0 0.0
        %4106 = vmatprep.subr.mxu0 0.0
        %4107 = vmatpush1.msra.mxu0 0.0
        %4108 = vmatprep.subr.mxu0 0.0
        %v4109 = vand.u32 %v3154, 4294901760
        %4110 = vmatpush1.msra.mxu0 %v4109
        %4111 = vmatprep.subr.mxu0 0.0
        %v4112 = vand.u32 %v3153, 4294901760
        %4113 = vmatpush1.msra.mxu0 %v4112
        %4114 = vmatprep.subr.mxu0 0.0
        %4115 = vmatpush2.msra.mxu0 0.0
        %4116 = vmatprep.subr.mxu0 0.0
        %4117 = vmatpush2.msra.mxu0 0.0
        %4118 = vmatprep.subr.mxu0 0.0
        %4119 = vmatpush2.msra.mxu0 0.0
        %4120 = vmatprep.subr.mxu0 0.0
        %4121 = vmatpush2.msra.mxu0 0.0
        %4122 = vmatprep.subr.mxu0 0.0
        %4123 = vmatpush2.msra.mxu0 0.0
        %4124 = vmatprep.subr.mxu0 0.0
        %4125 = vmatpush2.msra.mxu0 0.0
        %4126 = vmatprep.subr.mxu0 0.0
        %4127 = vmatpush2.msra.mxu0 0.0
        %4128 = vmatprep.subr.mxu0 0.0
        %4129 = vmatpush2.msra.mxu0 0.0
        %4130 = vmatprep.subr.mxu0 0.0
        %4131 = vmatpush2.msra.mxu0 0.0
        %4132 = vmatprep.subr.mxu0 0.0
        %4133 = vmatpush2.msra.mxu0 0.0
        %4134 = vmatprep.subr.mxu0 0.0
        %4135 = vmatpush2.msra.mxu0 0.0
        %4136 = vmatprep.subr.mxu0 0.0
        %4137 = vmatpush2.msra.mxu0 0.0
        %4138 = vmatprep.subr.mxu0 0.0
        %4139 = vmatpush2.msra.mxu0 0.0
        %4140 = vmatprep.subr.mxu0 0.0
        %4141 = vmatpush2.msra.mxu0 0.0
        %4142 = vmatprep.subr.mxu0 0.0
        %4143 = vmatpush2.msra.mxu0 0.0
        %4144 = vmatprep.subr.mxu0 0.0
        %4145 = vmatpush2.msra.mxu0 0.0
        %4146 = vmatprep.mubr.f32.mxu0 0.0
        %v4147 = vand.u32 %v926, 4294901760
        %4148 = vmatmul.mubr.f32.gmra.mxu0 %v4147
        %v4149 = vpop.f32.mrf.mxu0
        %v4150 = vadd.f32 %v4071, %v4149
        %v4151 = vpop.f32.mrf.mxu0
        %4152 = vmatprep.mubr.f32.mxu0 0.0
        %v4153 = vand.u32 %v929, 4294901760
        %4154 = vmatmul.mubr.f32.gmra.mxu0 %v4153
        %v4155 = vpop.f32.mrf.mxu0
        %v4156 = vadd.f32 %v4077, %v4155
        %v4157 = vpop.f32.mrf.mxu0
        %4158 = vdwg.mxu0
        %v4159 = vld [vmem:[#allocation7] sm:$0xff]
        %v4160 = vld [vmem:[#allocation7 + $0x8] sm:$0xff]
        %v4161 = vld [vmem:[#allocation7 + $0x10] sm:$0xff]
        %v4162 = vld [vmem:[#allocation7 + $0x18] sm:$0xff]
        %v4163 = vld [vmem:[#allocation7 + $0x20] sm:$0xff]
        %v4164 = vld [vmem:[#allocation7 + $0x28] sm:$0xff]
        %v4165 = vld [vmem:[#allocation7 + $0x30] sm:$0xff]
        %v4166 = vld [vmem:[#allocation7 + $0x38] sm:$0xff]
        %v4167 = vld [vmem:[#allocation7 + $0x40] sm:$0xff]
        %v4168 = vld [vmem:[#allocation7 + $0x48] sm:$0xff]
        %v4169 = vld [vmem:[#allocation7 + $0x50] sm:$0xff]
        %v4170 = vld [vmem:[#allocation7 + $0x58] sm:$0xff]
        %v4171 = vld [vmem:[#allocation7 + $0x60] sm:$0xff]
        %v4172 = vld [vmem:[#allocation7 + $0x68] sm:$0xff]
        %v4173 = vld [vmem:[#allocation7 + $0x70] sm:$0xff]
        %v4174 = vld [vmem:[#allocation7 + $0x78] sm:$0xff]
        %v4175 = vld [vmem:[#allocation7 + $0x80] sm:$0xff]
        %v4176 = vld [vmem:[#allocation7 + $0x88] sm:$0xff]
        %v4177 = vld [vmem:[#allocation7 + $0x90] sm:$0xff]
        %v4178 = vld [vmem:[#allocation7 + $0x98] sm:$0xff]
        %v4179 = vld [vmem:[#allocation7 + $0xa0] sm:$0xff]
        %v4180 = vld [vmem:[#allocation7 + $0xa8] sm:$0xff]
        %v4181 = vld [vmem:[#allocation7 + $0xb0] sm:$0xff]
        %v4182 = vld [vmem:[#allocation7 + $0xb8] sm:$0xff]
        %v4183 = vld [vmem:[#allocation7 + $0xc0] sm:$0xff]
        %v4184 = vld [vmem:[#allocation7 + $0xc8] sm:$0xff]
        %v4185 = vld [vmem:[#allocation7 + $0xd0] sm:$0xff]
        %v4186 = vld [vmem:[#allocation7 + $0xd8] sm:$0xff]
        %v4187 = vld [vmem:[#allocation7 + $0xe0] sm:$0xff]
        %v4188 = vld [vmem:[#allocation7 + $0xe8] sm:$0xff]
        %v4189 = vld [vmem:[#allocation7 + $0xf0] sm:$0xff]
        %v4190 = vld [vmem:[#allocation7 + $0xf8] sm:$0xff]
        %v4191 = vld [vmem:[#allocation7 + $0x100] sm:$0xff]
        %v4192 = vld [vmem:[#allocation7 + $0x108] sm:$0xff]
        %v4193 = vld [vmem:[#allocation7 + $0x110] sm:$0xff]
        %v4194 = vld [vmem:[#allocation7 + $0x118] sm:$0xff]
        %v4195 = vld [vmem:[#allocation7 + $0x120] sm:$0xff]
        %v4196 = vld [vmem:[#allocation7 + $0x128] sm:$0xff]
        %v4197 = vld [vmem:[#allocation7 + $0x130] sm:$0xff]
        %v4198 = vld [vmem:[#allocation7 + $0x138] sm:$0xff]
        %v4199 = vld [vmem:[#allocation7 + $0x140] sm:$0xff]
        %v4200 = vld [vmem:[#allocation7 + $0x148] sm:$0xff]
        %v4201 = vld [vmem:[#allocation7 + $0x150] sm:$0xff]
        %v4202 = vld [vmem:[#allocation7 + $0x158] sm:$0xff]
        %v4203 = vld [vmem:[#allocation7 + $0x160] sm:$0xff]
        %v4204 = vld [vmem:[#allocation7 + $0x168] sm:$0xff]
        %v4205 = vld [vmem:[#allocation7 + $0x170] sm:$0xff]
        %v4206 = vld [vmem:[#allocation7 + $0x178] sm:$0xff]
        %4207 = vmatprep.subr.mxu0 0.0
        %v4208 = vand.u32 %v4174, 4294901760
        %4209 = vmatpush1.msra.mxu0 %v4208
        %4210 = vmatprep.subr.mxu0 0.0
        %v4211 = vand.u32 %v4173, 4294901760
        %4212 = vmatpush1.msra.mxu0 %v4211
        %4213 = vmatprep.subr.mxu0 0.0
        %v4214 = vand.u32 %v4172, 4294901760
        %4215 = vmatpush1.msra.mxu0 %v4214
        %4216 = vmatprep.subr.mxu0 0.0
        %v4217 = vand.u32 %v4171, 4294901760
        %4218 = vmatpush1.msra.mxu0 %v4217
        %4219 = vmatprep.subr.mxu0 0.0
        %v4220 = vand.u32 %v4170, 4294901760
        %4221 = vmatpush1.msra.mxu0 %v4220
        %4222 = vmatprep.subr.mxu0 0.0
        %v4223 = vand.u32 %v4169, 4294901760
        %4224 = vmatpush1.msra.mxu0 %v4223
        %4225 = vmatprep.subr.mxu0 0.0
        %v4226 = vand.u32 %v4168, 4294901760
        %4227 = vmatpush1.msra.mxu0 %v4226
        %4228 = vmatprep.subr.mxu0 0.0
        %v4229 = vand.u32 %v4167, 4294901760
        %4230 = vmatpush1.msra.mxu0 %v4229
        %4231 = vmatprep.subr.mxu0 0.0
        %v4232 = vand.u32 %v4166, 4294901760
        %4233 = vmatpush1.msra.mxu0 %v4232
        %4234 = vmatprep.subr.mxu0 0.0
        %v4235 = vand.u32 %v4165, 4294901760
        %4236 = vmatpush1.msra.mxu0 %v4235
        %4237 = vmatprep.subr.mxu0 0.0
        %v4238 = vand.u32 %v4164, 4294901760
        %4239 = vmatpush1.msra.mxu0 %v4238
        %4240 = vmatprep.subr.mxu0 0.0
        %v4241 = vand.u32 %v4163, 4294901760
        %4242 = vmatpush1.msra.mxu0 %v4241
        %4243 = vmatprep.subr.mxu0 0.0
        %v4244 = vand.u32 %v4162, 4294901760
        %4245 = vmatpush1.msra.mxu0 %v4244
        %4246 = vmatprep.subr.mxu0 0.0
        %v4247 = vand.u32 %v4161, 4294901760
        %4248 = vmatpush1.msra.mxu0 %v4247
        %4249 = vmatprep.subr.mxu0 0.0
        %v4250 = vand.u32 %v4160, 4294901760
        %4251 = vmatpush1.msra.mxu0 %v4250
        %4252 = vmatprep.subr.mxu0 0.0
        %v4253 = vand.u32 %v4159, 4294901760
        %4254 = vmatpush1.msra.mxu0 %v4253
        %4255 = vmatprep.subr.mxu0 0.0
        %v4256 = vand.u32 %v4190, 4294901760
        %4257 = vmatpush2.msra.mxu0 %v4256
        %4258 = vmatprep.subr.mxu0 0.0
        %v4259 = vand.u32 %v4189, 4294901760
        %4260 = vmatpush2.msra.mxu0 %v4259
        %4261 = vmatprep.subr.mxu0 0.0
        %v4262 = vand.u32 %v4188, 4294901760
        %4263 = vmatpush2.msra.mxu0 %v4262
        %4264 = vmatprep.subr.mxu0 0.0
        %v4265 = vand.u32 %v4187, 4294901760
        %4266 = vmatpush2.msra.mxu0 %v4265
        %4267 = vmatprep.subr.mxu0 0.0
        %v4268 = vand.u32 %v4186, 4294901760
        %4269 = vmatpush2.msra.mxu0 %v4268
        %4270 = vmatprep.subr.mxu0 0.0
        %v4271 = vand.u32 %v4185, 4294901760
        %4272 = vmatpush2.msra.mxu0 %v4271
        %4273 = vmatprep.subr.mxu0 0.0
        %v4274 = vand.u32 %v4184, 4294901760
        %4275 = vmatpush2.msra.mxu0 %v4274
        %4276 = vmatprep.subr.mxu0 0.0
        %v4277 = vand.u32 %v4183, 4294901760
        %4278 = vmatpush2.msra.mxu0 %v4277
        %4279 = vmatprep.subr.mxu0 0.0
        %v4280 = vand.u32 %v4182, 4294901760
        %4281 = vmatpush2.msra.mxu0 %v4280
        %4282 = vmatprep.subr.mxu0 0.0
        %v4283 = vand.u32 %v4181, 4294901760
        %4284 = vmatpush2.msra.mxu0 %v4283
        %4285 = vmatprep.subr.mxu0 0.0
        %v4286 = vand.u32 %v4180, 4294901760
        %4287 = vmatpush2.msra.mxu0 %v4286
        %4288 = vmatprep.subr.mxu0 0.0
        %v4289 = vand.u32 %v4179, 4294901760
        %4290 = vmatpush2.msra.mxu0 %v4289
        %4291 = vmatprep.subr.mxu0 0.0
        %v4292 = vand.u32 %v4178, 4294901760
        %4293 = vmatpush2.msra.mxu0 %v4292
        %4294 = vmatprep.subr.mxu0 0.0
        %v4295 = vand.u32 %v4177, 4294901760
        %4296 = vmatpush2.msra.mxu0 %v4295
        %4297 = vmatprep.subr.mxu0 0.0
        %v4298 = vand.u32 %v4176, 4294901760
        %4299 = vmatpush2.msra.mxu0 %v4298
        %4300 = vmatprep.subr.mxu0 0.0
        %v4301 = vand.u32 %v4175, 4294901760
        %4302 = vmatpush2.msra.mxu0 %v4301
        %v4303 = vand.u32 %v3153, 4294901760
        %v4304 = vsub.f32 %v3153, %v4303
        %v4305 = vand.u32 %v4304, 4294901760
        %v4306 = vsub.f32 %v4304, %v4305
        %v4307 = vand.u32 %v4306, 4294901760
        %4308 = vmatprep.mubr.f32.mxu0 %v4307
        %v4309 = vand.u32 %v3648, 4294901760
        %v4310 = vsub.f32 %v3648, %v4309
        %v4311 = vand.u32 %v4310, 4294901760
        %v4312 = vsub.f32 %v4310, %v4311
        %v4313 = vand.u32 %v4312, 4294901760
        %4314 = vmatmul.mubr.f32.gmra.mxu0 %v4313
        %v4315 = vpop.f32.mrf.mxu0
        %v4316 = vadd.f32 %v342, %v4315
        %v4317 = vpop.f32.mrf.mxu0
        %v4318 = vand.u32 %v3154, 4294901760
        %v4319 = vsub.f32 %v3154, %v4318
        %v4320 = vand.u32 %v4319, 4294901760
        %v4321 = vsub.f32 %v4319, %v4320
        %v4322 = vand.u32 %v4321, 4294901760
        %4323 = vmatprep.mubr.f32.mxu0 %v4322
        %v4324 = vand.u32 %v3654, 4294901760
        %v4325 = vsub.f32 %v3654, %v4324
        %v4326 = vand.u32 %v4325, 4294901760
        %v4327 = vsub.f32 %v4325, %v4326
        %v4328 = vand.u32 %v4327, 4294901760
        %4329 = vmatmul.mubr.f32.gmra.mxu0 %v4328
        %v4330 = vpop.f32.mrf.mxu0
        %v4331 = vadd.f32 %v343, %v4330
        %v4332 = vpop.f32.mrf.mxu0
        %4333 = vdwg.mxu0
        %4334 = vmatprep.subr.mxu0 0.0
        %v4335 = vand.u32 %v4174, 4294901760
        %v4336 = vsub.f32 %v4174, %v4335
        %v4337 = vand.u32 %v4336, 4294901760
        %v4338 = vsub.f32 %v4336, %v4337
        %v4339 = vand.u32 %v4338, 4294901760
        %4340 = vmatpush1.msra.mxu0 %v4339
        %4341 = vmatprep.subr.mxu0 0.0
        %v4342 = vand.u32 %v4173, 4294901760
        %v4343 = vsub.f32 %v4173, %v4342
        %v4344 = vand.u32 %v4343, 4294901760
        %v4345 = vsub.f32 %v4343, %v4344
        %v4346 = vand.u32 %v4345, 4294901760
        %4347 = vmatpush1.msra.mxu0 %v4346
        %4348 = vmatprep.subr.mxu0 0.0
        %v4349 = vand.u32 %v4172, 4294901760
        %v4350 = vsub.f32 %v4172, %v4349
        %v4351 = vand.u32 %v4350, 4294901760
        %v4352 = vsub.f32 %v4350, %v4351
        %v4353 = vand.u32 %v4352, 4294901760
        %4354 = vmatpush1.msra.mxu0 %v4353
        %4355 = vmatprep.subr.mxu0 0.0
        %v4356 = vand.u32 %v4171, 4294901760
        %v4357 = vsub.f32 %v4171, %v4356
        %v4358 = vand.u32 %v4357, 4294901760
        %v4359 = vsub.f32 %v4357, %v4358
        %v4360 = vand.u32 %v4359, 4294901760
        %4361 = vmatpush1.msra.mxu0 %v4360
        %4362 = vmatprep.subr.mxu0 0.0
        %v4363 = vand.u32 %v4170, 4294901760
        %v4364 = vsub.f32 %v4170, %v4363
        %v4365 = vand.u32 %v4364, 4294901760
        %v4366 = vsub.f32 %v4364, %v4365
        %v4367 = vand.u32 %v4366, 4294901760
        %4368 = vmatpush1.msra.mxu0 %v4367
        %4369 = vmatprep.subr.mxu0 0.0
        %v4370 = vand.u32 %v4169, 4294901760
        %v4371 = vsub.f32 %v4169, %v4370
        %v4372 = vand.u32 %v4371, 4294901760
        %v4373 = vsub.f32 %v4371, %v4372
        %v4374 = vand.u32 %v4373, 4294901760
        %4375 = vmatpush1.msra.mxu0 %v4374
        %4376 = vmatprep.subr.mxu0 0.0
        %v4377 = vand.u32 %v4168, 4294901760
        %v4378 = vsub.f32 %v4168, %v4377
        %v4379 = vand.u32 %v4378, 4294901760
        %v4380 = vsub.f32 %v4378, %v4379
        %v4381 = vand.u32 %v4380, 4294901760
        %4382 = vmatpush1.msra.mxu0 %v4381
        %4383 = vmatprep.subr.mxu0 0.0
        %v4384 = vand.u32 %v4167, 4294901760
        %v4385 = vsub.f32 %v4167, %v4384
        %v4386 = vand.u32 %v4385, 4294901760
        %v4387 = vsub.f32 %v4385, %v4386
        %v4388 = vand.u32 %v4387, 4294901760
        %4389 = vmatpush1.msra.mxu0 %v4388
        %4390 = vmatprep.subr.mxu0 0.0
        %v4391 = vand.u32 %v4166, 4294901760
        %v4392 = vsub.f32 %v4166, %v4391
        %v4393 = vand.u32 %v4392, 4294901760
        %v4394 = vsub.f32 %v4392, %v4393
        %v4395 = vand.u32 %v4394, 4294901760
        %4396 = vmatpush1.msra.mxu0 %v4395
        %4397 = vmatprep.subr.mxu0 0.0
        %v4398 = vand.u32 %v4165, 4294901760
        %v4399 = vsub.f32 %v4165, %v4398
        %v4400 = vand.u32 %v4399, 4294901760
        %v4401 = vsub.f32 %v4399, %v4400
        %v4402 = vand.u32 %v4401, 4294901760
        %4403 = vmatpush1.msra.mxu0 %v4402
        %4404 = vmatprep.subr.mxu0 0.0
        %v4405 = vand.u32 %v4164, 4294901760
        %v4406 = vsub.f32 %v4164, %v4405
        %v4407 = vand.u32 %v4406, 4294901760
        %v4408 = vsub.f32 %v4406, %v4407
        %v4409 = vand.u32 %v4408, 4294901760
        %4410 = vmatpush1.msra.mxu0 %v4409
        %4411 = vmatprep.subr.mxu0 0.0
        %v4412 = vand.u32 %v4163, 4294901760
        %v4413 = vsub.f32 %v4163, %v4412
        %v4414 = vand.u32 %v4413, 4294901760
        %v4415 = vsub.f32 %v4413, %v4414
        %v4416 = vand.u32 %v4415, 4294901760
        %4417 = vmatpush1.msra.mxu0 %v4416
        %4418 = vmatprep.subr.mxu0 0.0
        %v4419 = vand.u32 %v4162, 4294901760
        %v4420 = vsub.f32 %v4162, %v4419
        %v4421 = vand.u32 %v4420, 4294901760
        %v4422 = vsub.f32 %v4420, %v4421
        %v4423 = vand.u32 %v4422, 4294901760
        %4424 = vmatpush1.msra.mxu0 %v4423
        %4425 = vmatprep.subr.mxu0 0.0
        %v4426 = vand.u32 %v4161, 4294901760
        %v4427 = vsub.f32 %v4161, %v4426
        %v4428 = vand.u32 %v4427, 4294901760
        %v4429 = vsub.f32 %v4427, %v4428
        %v4430 = vand.u32 %v4429, 4294901760
        %4431 = vmatpush1.msra.mxu0 %v4430
        %4432 = vmatprep.subr.mxu0 0.0
        %v4433 = vand.u32 %v4160, 4294901760
        %v4434 = vsub.f32 %v4160, %v4433
        %v4435 = vand.u32 %v4434, 4294901760
        %v4436 = vsub.f32 %v4434, %v4435
        %v4437 = vand.u32 %v4436, 4294901760
        %4438 = vmatpush1.msra.mxu0 %v4437
        %4439 = vmatprep.subr.mxu0 0.0
        %v4440 = vand.u32 %v4159, 4294901760
        %v4441 = vsub.f32 %v4159, %v4440
        %v4442 = vand.u32 %v4441, 4294901760
        %v4443 = vsub.f32 %v4441, %v4442
        %v4444 = vand.u32 %v4443, 4294901760
        %4445 = vmatpush1.msra.mxu0 %v4444
        %4446 = vmatprep.subr.mxu0 0.0
        %v4447 = vand.u32 %v4190, 4294901760
        %v4448 = vsub.f32 %v4190, %v4447
        %v4449 = vand.u32 %v4448, 4294901760
        %v4450 = vsub.f32 %v4448, %v4449
        %v4451 = vand.u32 %v4450, 4294901760
        %4452 = vmatpush2.msra.mxu0 %v4451
        %4453 = vmatprep.subr.mxu0 0.0
        %v4454 = vand.u32 %v4189, 4294901760
        %v4455 = vsub.f32 %v4189, %v4454
        %v4456 = vand.u32 %v4455, 4294901760
        %v4457 = vsub.f32 %v4455, %v4456
        %v4458 = vand.u32 %v4457, 4294901760
        %4459 = vmatpush2.msra.mxu0 %v4458
        %4460 = vmatprep.subr.mxu0 0.0
        %v4461 = vand.u32 %v4188, 4294901760
        %v4462 = vsub.f32 %v4188, %v4461
        %v4463 = vand.u32 %v4462, 4294901760
        %v4464 = vsub.f32 %v4462, %v4463
        %v4465 = vand.u32 %v4464, 4294901760
        %4466 = vmatpush2.msra.mxu0 %v4465
        %4467 = vmatprep.subr.mxu0 0.0
        %v4468 = vand.u32 %v4187, 4294901760
        %v4469 = vsub.f32 %v4187, %v4468
        %v4470 = vand.u32 %v4469, 4294901760
        %v4471 = vsub.f32 %v4469, %v4470
        %v4472 = vand.u32 %v4471, 4294901760
        %4473 = vmatpush2.msra.mxu0 %v4472
        %4474 = vmatprep.subr.mxu0 0.0
        %v4475 = vand.u32 %v4186, 4294901760
        %v4476 = vsub.f32 %v4186, %v4475
        %v4477 = vand.u32 %v4476, 4294901760
        %v4478 = vsub.f32 %v4476, %v4477
        %v4479 = vand.u32 %v4478, 4294901760
        %4480 = vmatpush2.msra.mxu0 %v4479
        %4481 = vmatprep.subr.mxu0 0.0
        %v4482 = vand.u32 %v4185, 4294901760
        %v4483 = vsub.f32 %v4185, %v4482
        %v4484 = vand.u32 %v4483, 4294901760
        %v4485 = vsub.f32 %v4483, %v4484
        %v4486 = vand.u32 %v4485, 4294901760
        %4487 = vmatpush2.msra.mxu0 %v4486
        %4488 = vmatprep.subr.mxu0 0.0
        %v4489 = vand.u32 %v4184, 4294901760
        %v4490 = vsub.f32 %v4184, %v4489
        %v4491 = vand.u32 %v4490, 4294901760
        %v4492 = vsub.f32 %v4490, %v4491
        %v4493 = vand.u32 %v4492, 4294901760
        %4494 = vmatpush2.msra.mxu0 %v4493
        %4495 = vmatprep.subr.mxu0 0.0
        %v4496 = vand.u32 %v4183, 4294901760
        %v4497 = vsub.f32 %v4183, %v4496
        %v4498 = vand.u32 %v4497, 4294901760
        %v4499 = vsub.f32 %v4497, %v4498
        %v4500 = vand.u32 %v4499, 4294901760
        %4501 = vmatpush2.msra.mxu0 %v4500
        %4502 = vmatprep.subr.mxu0 0.0
        %v4503 = vand.u32 %v4182, 4294901760
        %v4504 = vsub.f32 %v4182, %v4503
        %v4505 = vand.u32 %v4504, 4294901760
        %v4506 = vsub.f32 %v4504, %v4505
        %v4507 = vand.u32 %v4506, 4294901760
        %4508 = vmatpush2.msra.mxu0 %v4507
        %4509 = vmatprep.subr.mxu0 0.0
        %v4510 = vand.u32 %v4181, 4294901760
        %v4511 = vsub.f32 %v4181, %v4510
        %v4512 = vand.u32 %v4511, 4294901760
        %v4513 = vsub.f32 %v4511, %v4512
        %v4514 = vand.u32 %v4513, 4294901760
        %4515 = vmatpush2.msra.mxu0 %v4514
        %4516 = vmatprep.subr.mxu0 0.0
        %v4517 = vand.u32 %v4180, 4294901760
        %v4518 = vsub.f32 %v4180, %v4517
        %v4519 = vand.u32 %v4518, 4294901760
        %v4520 = vsub.f32 %v4518, %v4519
        %v4521 = vand.u32 %v4520, 4294901760
        %4522 = vmatpush2.msra.mxu0 %v4521
        %4523 = vmatprep.subr.mxu0 0.0
        %v4524 = vand.u32 %v4179, 4294901760
        %v4525 = vsub.f32 %v4179, %v4524
        %v4526 = vand.u32 %v4525, 4294901760
        %v4527 = vsub.f32 %v4525, %v4526
        %v4528 = vand.u32 %v4527, 4294901760
        %4529 = vmatpush2.msra.mxu0 %v4528
        %4530 = vmatprep.subr.mxu0 0.0
        %v4531 = vand.u32 %v4178, 4294901760
        %v4532 = vsub.f32 %v4178, %v4531
        %v4533 = vand.u32 %v4532, 4294901760
        %v4534 = vsub.f32 %v4532, %v4533
        %v4535 = vand.u32 %v4534, 4294901760
        %4536 = vmatpush2.msra.mxu0 %v4535
        %4537 = vmatprep.subr.mxu0 0.0
        %v4538 = vand.u32 %v4177, 4294901760
        %v4539 = vsub.f32 %v4177, %v4538
        %v4540 = vand.u32 %v4539, 4294901760
        %v4541 = vsub.f32 %v4539, %v4540
        %v4542 = vand.u32 %v4541, 4294901760
        %4543 = vmatpush2.msra.mxu0 %v4542
        %4544 = vmatprep.subr.mxu0 0.0
        %v4545 = vand.u32 %v4176, 4294901760
        %v4546 = vsub.f32 %v4176, %v4545
        %v4547 = vand.u32 %v4546, 4294901760
        %v4548 = vsub.f32 %v4546, %v4547
        %v4549 = vand.u32 %v4548, 4294901760
        %4550 = vmatpush2.msra.mxu0 %v4549
        %4551 = vmatprep.subr.mxu0 0.0
        %v4552 = vand.u32 %v4175, 4294901760
        %v4553 = vsub.f32 %v4175, %v4552
        %v4554 = vand.u32 %v4553, 4294901760
        %v4555 = vsub.f32 %v4553, %v4554
        %v4556 = vand.u32 %v4555, 4294901760
        %4557 = vmatpush2.msra.mxu0 %v4556
        %v4558 = vand.u32 %v3153, 4294901760
        %4559 = vmatprep.mubr.f32.mxu0 %v4558
        %v4560 = vand.u32 %v3648, 4294901760
        %4561 = vmatmul.mubr.f32.gmra.mxu0 %v4560
        %v4562 = vpop.f32.mrf.mxu0
        %v4563 = vadd.f32 %v4316, %v4562
        %v4564 = vpop.f32.mrf.mxu0
        %v4565 = vand.u32 %v3154, 4294901760
        %4566 = vmatprep.mubr.f32.mxu0 %v4565
        %v4567 = vand.u32 %v3654, 4294901760
        %4568 = vmatmul.mubr.f32.gmra.mxu0 %v4567
        %v4569 = vpop.f32.mrf.mxu0
        %v4570 = vadd.f32 %v4331, %v4569
        %v4571 = vpop.f32.mrf.mxu0
        %4572 = vdwg.mxu0
        %4573 = vmatprep.subr.mxu0 0.0
        %v4574 = vand.u32 %v4174, 4294901760
        %v4575 = vsub.f32 %v4174, %v4574
        %4576 = vmatpush1.msra.mxu0 %v4575
        %4577 = vmatprep.subr.mxu0 0.0
        %v4578 = vand.u32 %v4173, 4294901760
        %v4579 = vsub.f32 %v4173, %v4578
        %4580 = vmatpush1.msra.mxu0 %v4579
        %4581 = vmatprep.subr.mxu0 0.0
        %v4582 = vand.u32 %v4172, 4294901760
        %v4583 = vsub.f32 %v4172, %v4582
        %4584 = vmatpush1.msra.mxu0 %v4583
        %4585 = vmatprep.subr.mxu0 0.0
        %v4586 = vand.u32 %v4171, 4294901760
        %v4587 = vsub.f32 %v4171, %v4586
        %4588 = vmatpush1.msra.mxu0 %v4587
        %4589 = vmatprep.subr.mxu0 0.0
        %v4590 = vand.u32 %v4170, 4294901760
        %v4591 = vsub.f32 %v4170, %v4590
        %4592 = vmatpush1.msra.mxu0 %v4591
        %4593 = vmatprep.subr.mxu0 0.0
        %v4594 = vand.u32 %v4169, 4294901760
        %v4595 = vsub.f32 %v4169, %v4594
        %4596 = vmatpush1.msra.mxu0 %v4595
        %4597 = vmatprep.subr.mxu0 0.0
        %v4598 = vand.u32 %v4168, 4294901760
        %v4599 = vsub.f32 %v4168, %v4598
        %4600 = vmatpush1.msra.mxu0 %v4599
        %4601 = vmatprep.subr.mxu0 0.0
        %v4602 = vand.u32 %v4167, 4294901760
        %v4603 = vsub.f32 %v4167, %v4602
        %4604 = vmatpush1.msra.mxu0 %v4603
        %4605 = vmatprep.subr.mxu0 0.0
        %v4606 = vand.u32 %v4166, 4294901760
        %v4607 = vsub.f32 %v4166, %v4606
        %4608 = vmatpush1.msra.mxu0 %v4607
        %4609 = vmatprep.subr.mxu0 0.0
        %v4610 = vand.u32 %v4165, 4294901760
        %v4611 = vsub.f32 %v4165, %v4610
        %4612 = vmatpush1.msra.mxu0 %v4611
        %4613 = vmatprep.subr.mxu0 0.0
        %v4614 = vand.u32 %v4164, 4294901760
        %v4615 = vsub.f32 %v4164, %v4614
        %4616 = vmatpush1.msra.mxu0 %v4615
        %4617 = vmatprep.subr.mxu0 0.0
        %v4618 = vand.u32 %v4163, 4294901760
        %v4619 = vsub.f32 %v4163, %v4618
        %4620 = vmatpush1.msra.mxu0 %v4619
        %4621 = vmatprep.subr.mxu0 0.0
        %v4622 = vand.u32 %v4162, 4294901760
        %v4623 = vsub.f32 %v4162, %v4622
        %4624 = vmatpush1.msra.mxu0 %v4623
        %4625 = vmatprep.subr.mxu0 0.0
        %v4626 = vand.u32 %v4161, 4294901760
        %v4627 = vsub.f32 %v4161, %v4626
        %4628 = vmatpush1.msra.mxu0 %v4627
        %4629 = vmatprep.subr.mxu0 0.0
        %v4630 = vand.u32 %v4160, 4294901760
        %v4631 = vsub.f32 %v4160, %v4630
        %4632 = vmatpush1.msra.mxu0 %v4631
        %4633 = vmatprep.subr.mxu0 0.0
        %v4634 = vand.u32 %v4159, 4294901760
        %v4635 = vsub.f32 %v4159, %v4634
        %4636 = vmatpush1.msra.mxu0 %v4635
        %4637 = vmatprep.subr.mxu0 0.0
        %v4638 = vand.u32 %v4190, 4294901760
        %v4639 = vsub.f32 %v4190, %v4638
        %4640 = vmatpush2.msra.mxu0 %v4639
        %4641 = vmatprep.subr.mxu0 0.0
        %v4642 = vand.u32 %v4189, 4294901760
        %v4643 = vsub.f32 %v4189, %v4642
        %4644 = vmatpush2.msra.mxu0 %v4643
        %4645 = vmatprep.subr.mxu0 0.0
        %v4646 = vand.u32 %v4188, 4294901760
        %v4647 = vsub.f32 %v4188, %v4646
        %4648 = vmatpush2.msra.mxu0 %v4647
        %4649 = vmatprep.subr.mxu0 0.0
        %v4650 = vand.u32 %v4187, 4294901760
        %v4651 = vsub.f32 %v4187, %v4650
        %4652 = vmatpush2.msra.mxu0 %v4651
        %4653 = vmatprep.subr.mxu0 0.0
        %v4654 = vand.u32 %v4186, 4294901760
        %v4655 = vsub.f32 %v4186, %v4654
        %4656 = vmatpush2.msra.mxu0 %v4655
        %4657 = vmatprep.subr.mxu0 0.0
        %v4658 = vand.u32 %v4185, 4294901760
        %v4659 = vsub.f32 %v4185, %v4658
        %4660 = vmatpush2.msra.mxu0 %v4659
        %4661 = vmatprep.subr.mxu0 0.0
        %v4662 = vand.u32 %v4184, 4294901760
        %v4663 = vsub.f32 %v4184, %v4662
        %4664 = vmatpush2.msra.mxu0 %v4663
        %4665 = vmatprep.subr.mxu0 0.0
        %v4666 = vand.u32 %v4183, 4294901760
        %v4667 = vsub.f32 %v4183, %v4666
        %4668 = vmatpush2.msra.mxu0 %v4667
        %4669 = vmatprep.subr.mxu0 0.0
        %v4670 = vand.u32 %v4182, 4294901760
        %v4671 = vsub.f32 %v4182, %v4670
        %4672 = vmatpush2.msra.mxu0 %v4671
        %4673 = vmatprep.subr.mxu0 0.0
        %v4674 = vand.u32 %v4181, 4294901760
        %v4675 = vsub.f32 %v4181, %v4674
        %4676 = vmatpush2.msra.mxu0 %v4675
        %4677 = vmatprep.subr.mxu0 0.0
        %v4678 = vand.u32 %v4180, 4294901760
        %v4679 = vsub.f32 %v4180, %v4678
        %4680 = vmatpush2.msra.mxu0 %v4679
        %4681 = vmatprep.subr.mxu0 0.0
        %v4682 = vand.u32 %v4179, 4294901760
        %v4683 = vsub.f32 %v4179, %v4682
        %4684 = vmatpush2.msra.mxu0 %v4683
        %4685 = vmatprep.subr.mxu0 0.0
        %v4686 = vand.u32 %v4178, 4294901760
        %v4687 = vsub.f32 %v4178, %v4686
        %4688 = vmatpush2.msra.mxu0 %v4687
        %4689 = vmatprep.subr.mxu0 0.0
        %v4690 = vand.u32 %v4177, 4294901760
        %v4691 = vsub.f32 %v4177, %v4690
        %4692 = vmatpush2.msra.mxu0 %v4691
        %4693 = vmatprep.subr.mxu0 0.0
        %v4694 = vand.u32 %v4176, 4294901760
        %v4695 = vsub.f32 %v4176, %v4694
        %4696 = vmatpush2.msra.mxu0 %v4695
        %4697 = vmatprep.subr.mxu0 0.0
        %v4698 = vand.u32 %v4175, 4294901760
        %v4699 = vsub.f32 %v4175, %v4698
        %4700 = vmatpush2.msra.mxu0 %v4699
        %v4701 = vand.u32 %v3153, 4294901760
        %v4702 = vsub.f32 %v3153, %v4701
        %4703 = vmatprep.mubr.f32.mxu0 %v4702
        %v4704 = vand.u32 %v3648, 4294901760
        %v4705 = vsub.f32 %v3648, %v4704
        %4706 = vmatmul.mubr.f32.gmra.mxu0 %v4705
        %v4707 = vpop.f32.mrf.mxu0
        %v4708 = vadd.f32 %v4563, %v4707
        %v4709 = vpop.f32.mrf.mxu0
        %v4710 = vand.u32 %v3154, 4294901760
        %v4711 = vsub.f32 %v3154, %v4710
        %4712 = vmatprep.mubr.f32.mxu0 %v4711
        %v4713 = vand.u32 %v3654, 4294901760
        %v4714 = vsub.f32 %v3654, %v4713
        %4715 = vmatmul.mubr.f32.gmra.mxu0 %v4714
        %v4716 = vpop.f32.mrf.mxu0
        %v4717 = vadd.f32 %v4570, %v4716
        %v4718 = vpop.f32.mrf.mxu0
        %4719 = vdwg.mxu0
        %4720 = vmatprep.subr.mxu0 0.0
        %v4721 = vand.u32 %v4174, 4294901760
        %4722 = vmatpush1.msra.mxu0 %v4721
        %4723 = vmatprep.subr.mxu0 0.0
        %v4724 = vand.u32 %v4173, 4294901760
        %4725 = vmatpush1.msra.mxu0 %v4724
        %4726 = vmatprep.subr.mxu0 0.0
        %v4727 = vand.u32 %v4172, 4294901760
        %4728 = vmatpush1.msra.mxu0 %v4727
        %4729 = vmatprep.subr.mxu0 0.0
        %v4730 = vand.u32 %v4171, 4294901760
        %4731 = vmatpush1.msra.mxu0 %v4730
        %4732 = vmatprep.subr.mxu0 0.0
        %v4733 = vand.u32 %v4170, 4294901760
        %4734 = vmatpush1.msra.mxu0 %v4733
        %4735 = vmatprep.subr.mxu0 0.0
        %v4736 = vand.u32 %v4169, 4294901760
        %4737 = vmatpush1.msra.mxu0 %v4736
        %4738 = vmatprep.subr.mxu0 0.0
        %v4739 = vand.u32 %v4168, 4294901760
        %4740 = vmatpush1.msra.mxu0 %v4739
        %4741 = vmatprep.subr.mxu0 0.0
        %v4742 = vand.u32 %v4167, 4294901760
        %4743 = vmatpush1.msra.mxu0 %v4742
        %4744 = vmatprep.subr.mxu0 0.0
        %v4745 = vand.u32 %v4166, 4294901760
        %4746 = vmatpush1.msra.mxu0 %v4745
        %4747 = vmatprep.subr.mxu0 0.0
        %v4748 = vand.u32 %v4165, 4294901760
        %4749 = vmatpush1.msra.mxu0 %v4748
        %4750 = vmatprep.subr.mxu0 0.0
        %v4751 = vand.u32 %v4164, 4294901760
        %4752 = vmatpush1.msra.mxu0 %v4751
        %4753 = vmatprep.subr.mxu0 0.0
        %v4754 = vand.u32 %v4163, 4294901760
        %4755 = vmatpush1.msra.mxu0 %v4754
        %4756 = vmatprep.subr.mxu0 0.0
        %v4757 = vand.u32 %v4162, 4294901760
        %4758 = vmatpush1.msra.mxu0 %v4757
        %4759 = vmatprep.subr.mxu0 0.0
        %v4760 = vand.u32 %v4161, 4294901760
        %4761 = vmatpush1.msra.mxu0 %v4760
        %4762 = vmatprep.subr.mxu0 0.0
        %v4763 = vand.u32 %v4160, 4294901760
        %4764 = vmatpush1.msra.mxu0 %v4763
        %4765 = vmatprep.subr.mxu0 0.0
        %v4766 = vand.u32 %v4159, 4294901760
        %4767 = vmatpush1.msra.mxu0 %v4766
        %4768 = vmatprep.subr.mxu0 0.0
        %v4769 = vand.u32 %v4190, 4294901760
        %4770 = vmatpush2.msra.mxu0 %v4769
        %4771 = vmatprep.subr.mxu0 0.0
        %v4772 = vand.u32 %v4189, 4294901760
        %4773 = vmatpush2.msra.mxu0 %v4772
        %4774 = vmatprep.subr.mxu0 0.0
        %v4775 = vand.u32 %v4188, 4294901760
        %4776 = vmatpush2.msra.mxu0 %v4775
        %4777 = vmatprep.subr.mxu0 0.0
        %v4778 = vand.u32 %v4187, 4294901760
        %4779 = vmatpush2.msra.mxu0 %v4778
        %4780 = vmatprep.subr.mxu0 0.0
        %v4781 = vand.u32 %v4186, 4294901760
        %4782 = vmatpush2.msra.mxu0 %v4781
        %4783 = vmatprep.subr.mxu0 0.0
        %v4784 = vand.u32 %v4185, 4294901760
        %4785 = vmatpush2.msra.mxu0 %v4784
        %4786 = vmatprep.subr.mxu0 0.0
        %v4787 = vand.u32 %v4184, 4294901760
        %4788 = vmatpush2.msra.mxu0 %v4787
        %4789 = vmatprep.subr.mxu0 0.0
        %v4790 = vand.u32 %v4183, 4294901760
        %4791 = vmatpush2.msra.mxu0 %v4790
        %4792 = vmatprep.subr.mxu0 0.0
        %v4793 = vand.u32 %v4182, 4294901760
        %4794 = vmatpush2.msra.mxu0 %v4793
        %4795 = vmatprep.subr.mxu0 0.0
        %v4796 = vand.u32 %v4181, 4294901760
        %4797 = vmatpush2.msra.mxu0 %v4796
        %4798 = vmatprep.subr.mxu0 0.0
        %v4799 = vand.u32 %v4180, 4294901760
        %4800 = vmatpush2.msra.mxu0 %v4799
        %4801 = vmatprep.subr.mxu0 0.0
        %v4802 = vand.u32 %v4179, 4294901760
        %4803 = vmatpush2.msra.mxu0 %v4802
        %4804 = vmatprep.subr.mxu0 0.0
        %v4805 = vand.u32 %v4178, 4294901760
        %4806 = vmatpush2.msra.mxu0 %v4805
        %4807 = vmatprep.subr.mxu0 0.0
        %v4808 = vand.u32 %v4177, 4294901760
        %4809 = vmatpush2.msra.mxu0 %v4808
        %4810 = vmatprep.subr.mxu0 0.0
        %v4811 = vand.u32 %v4176, 4294901760
        %4812 = vmatpush2.msra.mxu0 %v4811
        %4813 = vmatprep.subr.mxu0 0.0
        %v4814 = vand.u32 %v4175, 4294901760
        %4815 = vmatpush2.msra.mxu0 %v4814
        %v4816 = vand.u32 %v3153, 4294901760
        %v4817 = vsub.f32 %v3153, %v4816
        %v4818 = vand.u32 %v4817, 4294901760
        %4819 = vmatprep.mubr.f32.mxu0 %v4818
        %v4820 = vand.u32 %v3648, 4294901760
        %v4821 = vsub.f32 %v3648, %v4820
        %v4822 = vand.u32 %v4821, 4294901760
        %4823 = vmatmul.mubr.f32.gmra.mxu0 %v4822
        %v4824 = vpop.f32.mrf.mxu0
        %v4825 = vadd.f32 %v4708, %v4824
        %v4826 = vpop.f32.mrf.mxu0
        %v4827 = vand.u32 %v3154, 4294901760
        %v4828 = vsub.f32 %v3154, %v4827
        %v4829 = vand.u32 %v4828, 4294901760
        %4830 = vmatprep.mubr.f32.mxu0 %v4829
        %v4831 = vand.u32 %v3654, 4294901760
        %v4832 = vsub.f32 %v3654, %v4831
        %v4833 = vand.u32 %v4832, 4294901760
        %4834 = vmatmul.mubr.f32.gmra.mxu0 %v4833
        %v4835 = vpop.f32.mrf.mxu0
        %v4836 = vadd.f32 %v4717, %v4835
        %v4837 = vpop.f32.mrf.mxu0
        %4838 = vdwg.mxu0
        %4839 = vmatprep.subr.mxu0 0.0
        %v4840 = vand.u32 %v4174, 4294901760
        %v4841 = vsub.f32 %v4174, %v4840
        %v4842 = vand.u32 %v4841, 4294901760
        %4843 = vmatpush1.msra.mxu0 %v4842
        %4844 = vmatprep.subr.mxu0 0.0
        %v4845 = vand.u32 %v4173, 4294901760
        %v4846 = vsub.f32 %v4173, %v4845
        %v4847 = vand.u32 %v4846, 4294901760
        %4848 = vmatpush1.msra.mxu0 %v4847
        %4849 = vmatprep.subr.mxu0 0.0
        %v4850 = vand.u32 %v4172, 4294901760
        %v4851 = vsub.f32 %v4172, %v4850
        %v4852 = vand.u32 %v4851, 4294901760
        %4853 = vmatpush1.msra.mxu0 %v4852
        %4854 = vmatprep.subr.mxu0 0.0
        %v4855 = vand.u32 %v4171, 4294901760
        %v4856 = vsub.f32 %v4171, %v4855
        %v4857 = vand.u32 %v4856, 4294901760
        %4858 = vmatpush1.msra.mxu0 %v4857
        %4859 = vmatprep.subr.mxu0 0.0
        %v4860 = vand.u32 %v4170, 4294901760
        %v4861 = vsub.f32 %v4170, %v4860
        %v4862 = vand.u32 %v4861, 4294901760
        %4863 = vmatpush1.msra.mxu0 %v4862
        %4864 = vmatprep.subr.mxu0 0.0
        %v4865 = vand.u32 %v4169, 4294901760
        %v4866 = vsub.f32 %v4169, %v4865
        %v4867 = vand.u32 %v4866, 4294901760
        %4868 = vmatpush1.msra.mxu0 %v4867
        %4869 = vmatprep.subr.mxu0 0.0
        %v4870 = vand.u32 %v4168, 4294901760
        %v4871 = vsub.f32 %v4168, %v4870
        %v4872 = vand.u32 %v4871, 4294901760
        %4873 = vmatpush1.msra.mxu0 %v4872
        %4874 = vmatprep.subr.mxu0 0.0
        %v4875 = vand.u32 %v4167, 4294901760
        %v4876 = vsub.f32 %v4167, %v4875
        %v4877 = vand.u32 %v4876, 4294901760
        %4878 = vmatpush1.msra.mxu0 %v4877
        %4879 = vmatprep.subr.mxu0 0.0
        %v4880 = vand.u32 %v4166, 4294901760
        %v4881 = vsub.f32 %v4166, %v4880
        %v4882 = vand.u32 %v4881, 4294901760
        %4883 = vmatpush1.msra.mxu0 %v4882
        %4884 = vmatprep.subr.mxu0 0.0
        %v4885 = vand.u32 %v4165, 4294901760
        %v4886 = vsub.f32 %v4165, %v4885
        %v4887 = vand.u32 %v4886, 4294901760
        %4888 = vmatpush1.msra.mxu0 %v4887
        %4889 = vmatprep.subr.mxu0 0.0
        %v4890 = vand.u32 %v4164, 4294901760
        %v4891 = vsub.f32 %v4164, %v4890
        %v4892 = vand.u32 %v4891, 4294901760
        %4893 = vmatpush1.msra.mxu0 %v4892
        %4894 = vmatprep.subr.mxu0 0.0
        %v4895 = vand.u32 %v4163, 4294901760
        %v4896 = vsub.f32 %v4163, %v4895
        %v4897 = vand.u32 %v4896, 4294901760
        %4898 = vmatpush1.msra.mxu0 %v4897
        %4899 = vmatprep.subr.mxu0 0.0
        %v4900 = vand.u32 %v4162, 4294901760
        %v4901 = vsub.f32 %v4162, %v4900
        %v4902 = vand.u32 %v4901, 4294901760
        %4903 = vmatpush1.msra.mxu0 %v4902
        %4904 = vmatprep.subr.mxu0 0.0
        %v4905 = vand.u32 %v4161, 4294901760
        %v4906 = vsub.f32 %v4161, %v4905
        %v4907 = vand.u32 %v4906, 4294901760
        %4908 = vmatpush1.msra.mxu0 %v4907
        %4909 = vmatprep.subr.mxu0 0.0
        %v4910 = vand.u32 %v4160, 4294901760
        %v4911 = vsub.f32 %v4160, %v4910
        %v4912 = vand.u32 %v4911, 4294901760
        %4913 = vmatpush1.msra.mxu0 %v4912
        %4914 = vmatprep.subr.mxu0 0.0
        %v4915 = vand.u32 %v4159, 4294901760
        %v4916 = vsub.f32 %v4159, %v4915
        %v4917 = vand.u32 %v4916, 4294901760
        %4918 = vmatpush1.msra.mxu0 %v4917
        %4919 = vmatprep.subr.mxu0 0.0
        %v4920 = vand.u32 %v4190, 4294901760
        %v4921 = vsub.f32 %v4190, %v4920
        %v4922 = vand.u32 %v4921, 4294901760
        %4923 = vmatpush2.msra.mxu0 %v4922
        %4924 = vmatprep.subr.mxu0 0.0
        %v4925 = vand.u32 %v4189, 4294901760
        %v4926 = vsub.f32 %v4189, %v4925
        %v4927 = vand.u32 %v4926, 4294901760
        %4928 = vmatpush2.msra.mxu0 %v4927
        %4929 = vmatprep.subr.mxu0 0.0
        %v4930 = vand.u32 %v4188, 4294901760
        %v4931 = vsub.f32 %v4188, %v4930
        %v4932 = vand.u32 %v4931, 4294901760
        %4933 = vmatpush2.msra.mxu0 %v4932
        %4934 = vmatprep.subr.mxu0 0.0
        %v4935 = vand.u32 %v4187, 4294901760
        %v4936 = vsub.f32 %v4187, %v4935
        %v4937 = vand.u32 %v4936, 4294901760
        %4938 = vmatpush2.msra.mxu0 %v4937
        %4939 = vmatprep.subr.mxu0 0.0
        %v4940 = vand.u32 %v4186, 4294901760
        %v4941 = vsub.f32 %v4186, %v4940
        %v4942 = vand.u32 %v4941, 4294901760
        %4943 = vmatpush2.msra.mxu0 %v4942
        %4944 = vmatprep.subr.mxu0 0.0
        %v4945 = vand.u32 %v4185, 4294901760
        %v4946 = vsub.f32 %v4185, %v4945
        %v4947 = vand.u32 %v4946, 4294901760
        %4948 = vmatpush2.msra.mxu0 %v4947
        %4949 = vmatprep.subr.mxu0 0.0
        %v4950 = vand.u32 %v4184, 4294901760
        %v4951 = vsub.f32 %v4184, %v4950
        %v4952 = vand.u32 %v4951, 4294901760
        %4953 = vmatpush2.msra.mxu0 %v4952
        %4954 = vmatprep.subr.mxu0 0.0
        %v4955 = vand.u32 %v4183, 4294901760
        %v4956 = vsub.f32 %v4183, %v4955
        %v4957 = vand.u32 %v4956, 4294901760
        %4958 = vmatpush2.msra.mxu0 %v4957
        %4959 = vmatprep.subr.mxu0 0.0
        %v4960 = vand.u32 %v4182, 4294901760
        %v4961 = vsub.f32 %v4182, %v4960
        %v4962 = vand.u32 %v4961, 4294901760
        %4963 = vmatpush2.msra.mxu0 %v4962
        %4964 = vmatprep.subr.mxu0 0.0
        %v4965 = vand.u32 %v4181, 4294901760
        %v4966 = vsub.f32 %v4181, %v4965
        %v4967 = vand.u32 %v4966, 4294901760
        %4968 = vmatpush2.msra.mxu0 %v4967
        %4969 = vmatprep.subr.mxu0 0.0
        %v4970 = vand.u32 %v4180, 4294901760
        %v4971 = vsub.f32 %v4180, %v4970
        %v4972 = vand.u32 %v4971, 4294901760
        %4973 = vmatpush2.msra.mxu0 %v4972
        %4974 = vmatprep.subr.mxu0 0.0
        %v4975 = vand.u32 %v4179, 4294901760
        %v4976 = vsub.f32 %v4179, %v4975
        %v4977 = vand.u32 %v4976, 4294901760
        %4978 = vmatpush2.msra.mxu0 %v4977
        %4979 = vmatprep.subr.mxu0 0.0
        %v4980 = vand.u32 %v4178, 4294901760
        %v4981 = vsub.f32 %v4178, %v4980
        %v4982 = vand.u32 %v4981, 4294901760
        %4983 = vmatpush2.msra.mxu0 %v4982
        %4984 = vmatprep.subr.mxu0 0.0
        %v4985 = vand.u32 %v4177, 4294901760
        %v4986 = vsub.f32 %v4177, %v4985
        %v4987 = vand.u32 %v4986, 4294901760
        %4988 = vmatpush2.msra.mxu0 %v4987
        %4989 = vmatprep.subr.mxu0 0.0
        %v4990 = vand.u32 %v4176, 4294901760
        %v4991 = vsub.f32 %v4176, %v4990
        %v4992 = vand.u32 %v4991, 4294901760
        %4993 = vmatpush2.msra.mxu0 %v4992
        %4994 = vmatprep.subr.mxu0 0.0
        %v4995 = vand.u32 %v4175, 4294901760
        %v4996 = vsub.f32 %v4175, %v4995
        %v4997 = vand.u32 %v4996, 4294901760
        %4998 = vmatpush2.msra.mxu0 %v4997
        %v4999 = vand.u32 %v3153, 4294901760
        %5000 = vmatprep.mubr.f32.mxu0 %v4999
        %v5001 = vand.u32 %v3648, 4294901760
        %5002 = vmatmul.mubr.f32.gmra.mxu0 %v5001
        %v5003 = vpop.f32.mrf.mxu0
        %v5004 = vadd.f32 %v4825, %v5003
        %v5005 = vpop.f32.mrf.mxu0
        %v5006 = vand.u32 %v3154, 4294901760
        %5007 = vmatprep.mubr.f32.mxu0 %v5006
        %v5008 = vand.u32 %v3654, 4294901760
        %5009 = vmatmul.mubr.f32.gmra.mxu0 %v5008
        %v5010 = vpop.f32.mrf.mxu0
        %v5011 = vadd.f32 %v4836, %v5010
        %v5012 = vpop.f32.mrf.mxu0
        %5013 = vdwg.mxu0
        %5014 = vmatprep.subr.mxu0 0.0
        %v5015 = vand.u32 %v4174, 4294901760
        %5016 = vmatpush1.msra.mxu0 %v5015
        %5017 = vmatprep.subr.mxu0 0.0
        %v5018 = vand.u32 %v4173, 4294901760
        %5019 = vmatpush1.msra.mxu0 %v5018
        %5020 = vmatprep.subr.mxu0 0.0
        %v5021 = vand.u32 %v4172, 4294901760
        %5022 = vmatpush1.msra.mxu0 %v5021
        %5023 = vmatprep.subr.mxu0 0.0
        %v5024 = vand.u32 %v4171, 4294901760
        %5025 = vmatpush1.msra.mxu0 %v5024
        %5026 = vmatprep.subr.mxu0 0.0
        %v5027 = vand.u32 %v4170, 4294901760
        %5028 = vmatpush1.msra.mxu0 %v5027
        %5029 = vmatprep.subr.mxu0 0.0
        %v5030 = vand.u32 %v4169, 4294901760
        %5031 = vmatpush1.msra.mxu0 %v5030
        %5032 = vmatprep.subr.mxu0 0.0
        %v5033 = vand.u32 %v4168, 4294901760
        %5034 = vmatpush1.msra.mxu0 %v5033
        %5035 = vmatprep.subr.mxu0 0.0
        %v5036 = vand.u32 %v4167, 4294901760
        %5037 = vmatpush1.msra.mxu0 %v5036
        %5038 = vmatprep.subr.mxu0 0.0
        %v5039 = vand.u32 %v4166, 4294901760
        %5040 = vmatpush1.msra.mxu0 %v5039
        %5041 = vmatprep.subr.mxu0 0.0
        %v5042 = vand.u32 %v4165, 4294901760
        %5043 = vmatpush1.msra.mxu0 %v5042
        %5044 = vmatprep.subr.mxu0 0.0
        %v5045 = vand.u32 %v4164, 4294901760
        %5046 = vmatpush1.msra.mxu0 %v5045
        %5047 = vmatprep.subr.mxu0 0.0
        %v5048 = vand.u32 %v4163, 4294901760
        %5049 = vmatpush1.msra.mxu0 %v5048
        %5050 = vmatprep.subr.mxu0 0.0
        %v5051 = vand.u32 %v4162, 4294901760
        %5052 = vmatpush1.msra.mxu0 %v5051
        %5053 = vmatprep.subr.mxu0 0.0
        %v5054 = vand.u32 %v4161, 4294901760
        %5055 = vmatpush1.msra.mxu0 %v5054
        %5056 = vmatprep.subr.mxu0 0.0
        %v5057 = vand.u32 %v4160, 4294901760
        %5058 = vmatpush1.msra.mxu0 %v5057
        %5059 = vmatprep.subr.mxu0 0.0
        %v5060 = vand.u32 %v4159, 4294901760
        %5061 = vmatpush1.msra.mxu0 %v5060
        %5062 = vmatprep.subr.mxu0 0.0
        %v5063 = vand.u32 %v4190, 4294901760
        %5064 = vmatpush2.msra.mxu0 %v5063
        %5065 = vmatprep.subr.mxu0 0.0
        %v5066 = vand.u32 %v4189, 4294901760
        %5067 = vmatpush2.msra.mxu0 %v5066
        %5068 = vmatprep.subr.mxu0 0.0
        %v5069 = vand.u32 %v4188, 4294901760
        %5070 = vmatpush2.msra.mxu0 %v5069
        %5071 = vmatprep.subr.mxu0 0.0
        %v5072 = vand.u32 %v4187, 4294901760
        %5073 = vmatpush2.msra.mxu0 %v5072
        %5074 = vmatprep.subr.mxu0 0.0
        %v5075 = vand.u32 %v4186, 4294901760
        %5076 = vmatpush2.msra.mxu0 %v5075
        %5077 = vmatprep.subr.mxu0 0.0
        %v5078 = vand.u32 %v4185, 4294901760
        %5079 = vmatpush2.msra.mxu0 %v5078
        %5080 = vmatprep.subr.mxu0 0.0
        %v5081 = vand.u32 %v4184, 4294901760
        %5082 = vmatpush2.msra.mxu0 %v5081
        %5083 = vmatprep.subr.mxu0 0.0
        %v5084 = vand.u32 %v4183, 4294901760
        %5085 = vmatpush2.msra.mxu0 %v5084
        %5086 = vmatprep.subr.mxu0 0.0
        %v5087 = vand.u32 %v4182, 4294901760
        %5088 = vmatpush2.msra.mxu0 %v5087
        %5089 = vmatprep.subr.mxu0 0.0
        %v5090 = vand.u32 %v4181, 4294901760
        %5091 = vmatpush2.msra.mxu0 %v5090
        %5092 = vmatprep.subr.mxu0 0.0
        %v5093 = vand.u32 %v4180, 4294901760
        %5094 = vmatpush2.msra.mxu0 %v5093
        %5095 = vmatprep.subr.mxu0 0.0
        %v5096 = vand.u32 %v4179, 4294901760
        %5097 = vmatpush2.msra.mxu0 %v5096
        %5098 = vmatprep.subr.mxu0 0.0
        %v5099 = vand.u32 %v4178, 4294901760
        %5100 = vmatpush2.msra.mxu0 %v5099
        %5101 = vmatprep.subr.mxu0 0.0
        %v5102 = vand.u32 %v4177, 4294901760
        %5103 = vmatpush2.msra.mxu0 %v5102
        %5104 = vmatprep.subr.mxu0 0.0
        %v5105 = vand.u32 %v4176, 4294901760
        %5106 = vmatpush2.msra.mxu0 %v5105
        %5107 = vmatprep.subr.mxu0 0.0
        %v5108 = vand.u32 %v4175, 4294901760
        %5109 = vmatpush2.msra.mxu0 %v5108
        %v5110 = vand.u32 %v3153, 4294901760
        %5111 = vmatprep.mubr.f32.mxu0 %v5110
        %v5112 = vand.u32 %v3648, 4294901760
        %5113 = vmatmul.mubr.f32.gmra.mxu0 %v5112
        %v5114 = vpop.f32.mrf.mxu0
        %v5115 = vadd.f32 %v5004, %v5114
        %v5116 = vpop.f32.mrf.mxu0
        %v5117 = vand.u32 %v3154, 4294901760
        %5118 = vmatprep.mubr.f32.mxu0 %v5117
        %v5119 = vand.u32 %v3654, 4294901760
        %5120 = vmatmul.mubr.f32.gmra.mxu0 %v5119
        %v5121 = vpop.f32.mrf.mxu0
        %v5122 = vadd.f32 %v5011, %v5121
        %v5123 = vpop.f32.mrf.mxu0
        %5124 = vdwg.mxu0
        %5125 = vmatprep.subr.mxu0 0.0
        %v5126 = vand.u32 %v4206, 4294901760
        %5127 = vmatpush1.msra.mxu0 %v5126
        %5128 = vmatprep.subr.mxu0 0.0
        %v5129 = vand.u32 %v4205, 4294901760
        %5130 = vmatpush1.msra.mxu0 %v5129
        %5131 = vmatprep.subr.mxu0 0.0
        %v5132 = vand.u32 %v4204, 4294901760
        %5133 = vmatpush1.msra.mxu0 %v5132
        %5134 = vmatprep.subr.mxu0 0.0
        %v5135 = vand.u32 %v4203, 4294901760
        %5136 = vmatpush1.msra.mxu0 %v5135
        %5137 = vmatprep.subr.mxu0 0.0
        %v5138 = vand.u32 %v4202, 4294901760
        %5139 = vmatpush1.msra.mxu0 %v5138
        %5140 = vmatprep.subr.mxu0 0.0
        %v5141 = vand.u32 %v4201, 4294901760
        %5142 = vmatpush1.msra.mxu0 %v5141
        %5143 = vmatprep.subr.mxu0 0.0
        %v5144 = vand.u32 %v4200, 4294901760
        %5145 = vmatpush1.msra.mxu0 %v5144
        %5146 = vmatprep.subr.mxu0 0.0
        %v5147 = vand.u32 %v4199, 4294901760
        %5148 = vmatpush1.msra.mxu0 %v5147
        %5149 = vmatprep.subr.mxu0 0.0
        %v5150 = vand.u32 %v4198, 4294901760
        %5151 = vmatpush1.msra.mxu0 %v5150
        %5152 = vmatprep.subr.mxu0 0.0
        %v5153 = vand.u32 %v4197, 4294901760
        %5154 = vmatpush1.msra.mxu0 %v5153
        %5155 = vmatprep.subr.mxu0 0.0
        %v5156 = vand.u32 %v4196, 4294901760
        %5157 = vmatpush1.msra.mxu0 %v5156
        %5158 = vmatprep.subr.mxu0 0.0
        %v5159 = vand.u32 %v4195, 4294901760
        %5160 = vmatpush1.msra.mxu0 %v5159
        %5161 = vmatprep.subr.mxu0 0.0
        %v5162 = vand.u32 %v4194, 4294901760
        %5163 = vmatpush1.msra.mxu0 %v5162
        %5164 = vmatprep.subr.mxu0 0.0
        %v5165 = vand.u32 %v4193, 4294901760
        %5166 = vmatpush1.msra.mxu0 %v5165
        %5167 = vmatprep.subr.mxu0 0.0
        %v5168 = vand.u32 %v4192, 4294901760
        %5169 = vmatpush1.msra.mxu0 %v5168
        %5170 = vmatprep.subr.mxu0 0.0
        %v5171 = vand.u32 %v4191, 4294901760
        %5172 = vmatpush1.msra.mxu0 %v5171
        %5173 = vmatprep.subr.mxu0 0.0
        %5174 = vmatpush2.msra.mxu0 0.0
        %5175 = vmatprep.subr.mxu0 0.0
        %5176 = vmatpush2.msra.mxu0 0.0
        %5177 = vmatprep.subr.mxu0 0.0
        %5178 = vmatpush2.msra.mxu0 0.0
        %5179 = vmatprep.subr.mxu0 0.0
        %5180 = vmatpush2.msra.mxu0 0.0
        %5181 = vmatprep.subr.mxu0 0.0
        %5182 = vmatpush2.msra.mxu0 0.0
        %5183 = vmatprep.subr.mxu0 0.0
        %5184 = vmatpush2.msra.mxu0 0.0
        %5185 = vmatprep.subr.mxu0 0.0
        %5186 = vmatpush2.msra.mxu0 0.0
        %5187 = vmatprep.subr.mxu0 0.0
        %5188 = vmatpush2.msra.mxu0 0.0
        %5189 = vmatprep.subr.mxu0 0.0
        %5190 = vmatpush2.msra.mxu0 0.0
        %5191 = vmatprep.subr.mxu0 0.0
        %5192 = vmatpush2.msra.mxu0 0.0
        %5193 = vmatprep.subr.mxu0 0.0
        %5194 = vmatpush2.msra.mxu0 0.0
        %5195 = vmatprep.subr.mxu0 0.0
        %5196 = vmatpush2.msra.mxu0 0.0
        %5197 = vmatprep.subr.mxu0 0.0
        %5198 = vmatpush2.msra.mxu0 0.0
        %5199 = vmatprep.subr.mxu0 0.0
        %5200 = vmatpush2.msra.mxu0 0.0
        %5201 = vmatprep.subr.mxu0 0.0
        %5202 = vmatpush2.msra.mxu0 0.0
        %5203 = vmatprep.subr.mxu0 0.0
        %5204 = vmatpush2.msra.mxu0 0.0
        %5205 = vmatprep.mubr.f32.mxu0 0.0
        %v5206 = vand.u32 %v4150, 4294901760
        %v5207 = vsub.f32 %v4150, %v5206
        %v5208 = vand.u32 %v5207, 4294901760
        %v5209 = vsub.f32 %v5207, %v5208
        %v5210 = vand.u32 %v5209, 4294901760
        %5211 = vmatmul.mubr.f32.gmra.mxu0 %v5210
        %v5212 = vpop.f32.mrf.mxu0
        %v5213 = vadd.f32 %v5115, %v5212
        %v5214 = vpop.f32.mrf.mxu0
        %5215 = vmatprep.mubr.f32.mxu0 0.0
        %v5216 = vand.u32 %v4156, 4294901760
        %v5217 = vsub.f32 %v4156, %v5216
        %v5218 = vand.u32 %v5217, 4294901760
        %v5219 = vsub.f32 %v5217, %v5218
        %v5220 = vand.u32 %v5219, 4294901760
        %5221 = vmatmul.mubr.f32.gmra.mxu0 %v5220
        %v5222 = vpop.f32.mrf.mxu0
        %v5223 = vadd.f32 %v5122, %v5222
        %v5224 = vpop.f32.mrf.mxu0
        %5225 = vdwg.mxu0
        %5226 = vmatprep.subr.mxu0 0.0
        %v5227 = vand.u32 %v4206, 4294901760
        %v5228 = vsub.f32 %v4206, %v5227
        %v5229 = vand.u32 %v5228, 4294901760
        %v5230 = vsub.f32 %v5228, %v5229
        %v5231 = vand.u32 %v5230, 4294901760
        %5232 = vmatpush1.msra.mxu0 %v5231
        %5233 = vmatprep.subr.mxu0 0.0
        %v5234 = vand.u32 %v4205, 4294901760
        %v5235 = vsub.f32 %v4205, %v5234
        %v5236 = vand.u32 %v5235, 4294901760
        %v5237 = vsub.f32 %v5235, %v5236
        %v5238 = vand.u32 %v5237, 4294901760
        %5239 = vmatpush1.msra.mxu0 %v5238
        %5240 = vmatprep.subr.mxu0 0.0
        %v5241 = vand.u32 %v4204, 4294901760
        %v5242 = vsub.f32 %v4204, %v5241
        %v5243 = vand.u32 %v5242, 4294901760
        %v5244 = vsub.f32 %v5242, %v5243
        %v5245 = vand.u32 %v5244, 4294901760
        %5246 = vmatpush1.msra.mxu0 %v5245
        %5247 = vmatprep.subr.mxu0 0.0
        %v5248 = vand.u32 %v4203, 4294901760
        %v5249 = vsub.f32 %v4203, %v5248
        %v5250 = vand.u32 %v5249, 4294901760
        %v5251 = vsub.f32 %v5249, %v5250
        %v5252 = vand.u32 %v5251, 4294901760
        %5253 = vmatpush1.msra.mxu0 %v5252
        %5254 = vmatprep.subr.mxu0 0.0
        %v5255 = vand.u32 %v4202, 4294901760
        %v5256 = vsub.f32 %v4202, %v5255
        %v5257 = vand.u32 %v5256, 4294901760
        %v5258 = vsub.f32 %v5256, %v5257
        %v5259 = vand.u32 %v5258, 4294901760
        %5260 = vmatpush1.msra.mxu0 %v5259
        %5261 = vmatprep.subr.mxu0 0.0
        %v5262 = vand.u32 %v4201, 4294901760
        %v5263 = vsub.f32 %v4201, %v5262
        %v5264 = vand.u32 %v5263, 4294901760
        %v5265 = vsub.f32 %v5263, %v5264
        %v5266 = vand.u32 %v5265, 4294901760
        %5267 = vmatpush1.msra.mxu0 %v5266
        %5268 = vmatprep.subr.mxu0 0.0
        %v5269 = vand.u32 %v4200, 4294901760
        %v5270 = vsub.f32 %v4200, %v5269
        %v5271 = vand.u32 %v5270, 4294901760
        %v5272 = vsub.f32 %v5270, %v5271
        %v5273 = vand.u32 %v5272, 4294901760
        %5274 = vmatpush1.msra.mxu0 %v5273
        %5275 = vmatprep.subr.mxu0 0.0
        %v5276 = vand.u32 %v4199, 4294901760
        %v5277 = vsub.f32 %v4199, %v5276
        %v5278 = vand.u32 %v5277, 4294901760
        %v5279 = vsub.f32 %v5277, %v5278
        %v5280 = vand.u32 %v5279, 4294901760
        %5281 = vmatpush1.msra.mxu0 %v5280
        %5282 = vmatprep.subr.mxu0 0.0
        %v5283 = vand.u32 %v4198, 4294901760
        %v5284 = vsub.f32 %v4198, %v5283
        %v5285 = vand.u32 %v5284, 4294901760
        %v5286 = vsub.f32 %v5284, %v5285
        %v5287 = vand.u32 %v5286, 4294901760
        %5288 = vmatpush1.msra.mxu0 %v5287
        %5289 = vmatprep.subr.mxu0 0.0
        %v5290 = vand.u32 %v4197, 4294901760
        %v5291 = vsub.f32 %v4197, %v5290
        %v5292 = vand.u32 %v5291, 4294901760
        %v5293 = vsub.f32 %v5291, %v5292
        %v5294 = vand.u32 %v5293, 4294901760
        %5295 = vmatpush1.msra.mxu0 %v5294
        %5296 = vmatprep.subr.mxu0 0.0
        %v5297 = vand.u32 %v4196, 4294901760
        %v5298 = vsub.f32 %v4196, %v5297
        %v5299 = vand.u32 %v5298, 4294901760
        %v5300 = vsub.f32 %v5298, %v5299
        %v5301 = vand.u32 %v5300, 4294901760
        %5302 = vmatpush1.msra.mxu0 %v5301
        %5303 = vmatprep.subr.mxu0 0.0
        %v5304 = vand.u32 %v4195, 4294901760
        %v5305 = vsub.f32 %v4195, %v5304
        %v5306 = vand.u32 %v5305, 4294901760
        %v5307 = vsub.f32 %v5305, %v5306
        %v5308 = vand.u32 %v5307, 4294901760
        %5309 = vmatpush1.msra.mxu0 %v5308
        %5310 = vmatprep.subr.mxu0 0.0
        %v5311 = vand.u32 %v4194, 4294901760
        %v5312 = vsub.f32 %v4194, %v5311
        %v5313 = vand.u32 %v5312, 4294901760
        %v5314 = vsub.f32 %v5312, %v5313
        %v5315 = vand.u32 %v5314, 4294901760
        %5316 = vmatpush1.msra.mxu0 %v5315
        %5317 = vmatprep.subr.mxu0 0.0
        %v5318 = vand.u32 %v4193, 4294901760
        %v5319 = vsub.f32 %v4193, %v5318
        %v5320 = vand.u32 %v5319, 4294901760
        %v5321 = vsub.f32 %v5319, %v5320
        %v5322 = vand.u32 %v5321, 4294901760
        %5323 = vmatpush1.msra.mxu0 %v5322
        %5324 = vmatprep.subr.mxu0 0.0
        %v5325 = vand.u32 %v4192, 4294901760
        %v5326 = vsub.f32 %v4192, %v5325
        %v5327 = vand.u32 %v5326, 4294901760
        %v5328 = vsub.f32 %v5326, %v5327
        %v5329 = vand.u32 %v5328, 4294901760
        %5330 = vmatpush1.msra.mxu0 %v5329
        %5331 = vmatprep.subr.mxu0 0.0
        %v5332 = vand.u32 %v4191, 4294901760
        %v5333 = vsub.f32 %v4191, %v5332
        %v5334 = vand.u32 %v5333, 4294901760
        %v5335 = vsub.f32 %v5333, %v5334
        %v5336 = vand.u32 %v5335, 4294901760
        %5337 = vmatpush1.msra.mxu0 %v5336
        %5338 = vmatprep.subr.mxu0 0.0
        %5339 = vmatpush2.msra.mxu0 0.0
        %5340 = vmatprep.subr.mxu0 0.0
        %5341 = vmatpush2.msra.mxu0 0.0
        %5342 = vmatprep.subr.mxu0 0.0
        %5343 = vmatpush2.msra.mxu0 0.0
        %5344 = vmatprep.subr.mxu0 0.0
        %5345 = vmatpush2.msra.mxu0 0.0
        %5346 = vmatprep.subr.mxu0 0.0
        %5347 = vmatpush2.msra.mxu0 0.0
        %5348 = vmatprep.subr.mxu0 0.0
        %5349 = vmatpush2.msra.mxu0 0.0
        %5350 = vmatprep.subr.mxu0 0.0
        %5351 = vmatpush2.msra.mxu0 0.0
        %5352 = vmatprep.subr.mxu0 0.0
        %5353 = vmatpush2.msra.mxu0 0.0
        %5354 = vmatprep.subr.mxu0 0.0
        %5355 = vmatpush2.msra.mxu0 0.0
        %5356 = vmatprep.subr.mxu0 0.0
        %5357 = vmatpush2.msra.mxu0 0.0
        %5358 = vmatprep.subr.mxu0 0.0
        %5359 = vmatpush2.msra.mxu0 0.0
        %5360 = vmatprep.subr.mxu0 0.0
        %5361 = vmatpush2.msra.mxu0 0.0
        %5362 = vmatprep.subr.mxu0 0.0
        %5363 = vmatpush2.msra.mxu0 0.0
        %5364 = vmatprep.subr.mxu0 0.0
        %5365 = vmatpush2.msra.mxu0 0.0
        %5366 = vmatprep.subr.mxu0 0.0
        %5367 = vmatpush2.msra.mxu0 0.0
        %5368 = vmatprep.subr.mxu0 0.0
        %5369 = vmatpush2.msra.mxu0 0.0
        %5370 = vmatprep.mubr.f32.mxu0 0.0
        %v5371 = vand.u32 %v4150, 4294901760
        %5372 = vmatmul.mubr.f32.gmra.mxu0 %v5371
        %v5373 = vpop.f32.mrf.mxu0
        %v5374 = vadd.f32 %v5213, %v5373
        %v5375 = vpop.f32.mrf.mxu0
        %5376 = vmatprep.mubr.f32.mxu0 0.0
        %v5377 = vand.u32 %v4156, 4294901760
        %5378 = vmatmul.mubr.f32.gmra.mxu0 %v5377
        %v5379 = vpop.f32.mrf.mxu0
        %v5380 = vadd.f32 %v5223, %v5379
        %v5381 = vpop.f32.mrf.mxu0
        %5382 = vdwg.mxu0
        %5383 = vmatprep.subr.mxu0 0.0
        %v5384 = vand.u32 %v4206, 4294901760
        %v5385 = vsub.f32 %v4206, %v5384
        %5386 = vmatpush1.msra.mxu0 %v5385
        %5387 = vmatprep.subr.mxu0 0.0
        %v5388 = vand.u32 %v4205, 4294901760
        %v5389 = vsub.f32 %v4205, %v5388
        %5390 = vmatpush1.msra.mxu0 %v5389
        %5391 = vmatprep.subr.mxu0 0.0
        %v5392 = vand.u32 %v4204, 4294901760
        %v5393 = vsub.f32 %v4204, %v5392
        %5394 = vmatpush1.msra.mxu0 %v5393
        %5395 = vmatprep.subr.mxu0 0.0
        %v5396 = vand.u32 %v4203, 4294901760
        %v5397 = vsub.f32 %v4203, %v5396
        %5398 = vmatpush1.msra.mxu0 %v5397
        %5399 = vmatprep.subr.mxu0 0.0
        %v5400 = vand.u32 %v4202, 4294901760
        %v5401 = vsub.f32 %v4202, %v5400
        %5402 = vmatpush1.msra.mxu0 %v5401
        %5403 = vmatprep.subr.mxu0 0.0
        %v5404 = vand.u32 %v4201, 4294901760
        %v5405 = vsub.f32 %v4201, %v5404
        %5406 = vmatpush1.msra.mxu0 %v5405
        %5407 = vmatprep.subr.mxu0 0.0
        %v5408 = vand.u32 %v4200, 4294901760
        %v5409 = vsub.f32 %v4200, %v5408
        %5410 = vmatpush1.msra.mxu0 %v5409
        %5411 = vmatprep.subr.mxu0 0.0
        %v5412 = vand.u32 %v4199, 4294901760
        %v5413 = vsub.f32 %v4199, %v5412
        %5414 = vmatpush1.msra.mxu0 %v5413
        %5415 = vmatprep.subr.mxu0 0.0
        %v5416 = vand.u32 %v4198, 4294901760
        %v5417 = vsub.f32 %v4198, %v5416
        %5418 = vmatpush1.msra.mxu0 %v5417
        %5419 = vmatprep.subr.mxu0 0.0
        %v5420 = vand.u32 %v4197, 4294901760
        %v5421 = vsub.f32 %v4197, %v5420
        %5422 = vmatpush1.msra.mxu0 %v5421
        %5423 = vmatprep.subr.mxu0 0.0
        %v5424 = vand.u32 %v4196, 4294901760
        %v5425 = vsub.f32 %v4196, %v5424
        %5426 = vmatpush1.msra.mxu0 %v5425
        %5427 = vmatprep.subr.mxu0 0.0
        %v5428 = vand.u32 %v4195, 4294901760
        %v5429 = vsub.f32 %v4195, %v5428
        %5430 = vmatpush1.msra.mxu0 %v5429
        %5431 = vmatprep.subr.mxu0 0.0
        %v5432 = vand.u32 %v4194, 4294901760
        %v5433 = vsub.f32 %v4194, %v5432
        %5434 = vmatpush1.msra.mxu0 %v5433
        %5435 = vmatprep.subr.mxu0 0.0
        %v5436 = vand.u32 %v4193, 4294901760
        %v5437 = vsub.f32 %v4193, %v5436
        %5438 = vmatpush1.msra.mxu0 %v5437
        %5439 = vmatprep.subr.mxu0 0.0
        %v5440 = vand.u32 %v4192, 4294901760
        %v5441 = vsub.f32 %v4192, %v5440
        %5442 = vmatpush1.msra.mxu0 %v5441
        %5443 = vmatprep.subr.mxu0 0.0
        %v5444 = vand.u32 %v4191, 4294901760
        %v5445 = vsub.f32 %v4191, %v5444
        %5446 = vmatpush1.msra.mxu0 %v5445
        %5447 = vmatprep.subr.mxu0 0.0
        %5448 = vmatpush2.msra.mxu0 0.0
        %5449 = vmatprep.subr.mxu0 0.0
        %5450 = vmatpush2.msra.mxu0 0.0
        %5451 = vmatprep.subr.mxu0 0.0
        %5452 = vmatpush2.msra.mxu0 0.0
        %5453 = vmatprep.subr.mxu0 0.0
        %5454 = vmatpush2.msra.mxu0 0.0
        %5455 = vmatprep.subr.mxu0 0.0
        %5456 = vmatpush2.msra.mxu0 0.0
        %5457 = vmatprep.subr.mxu0 0.0
        %5458 = vmatpush2.msra.mxu0 0.0
        %5459 = vmatprep.subr.mxu0 0.0
        %5460 = vmatpush2.msra.mxu0 0.0
        %5461 = vmatprep.subr.mxu0 0.0
        %5462 = vmatpush2.msra.mxu0 0.0
        %5463 = vmatprep.subr.mxu0 0.0
        %5464 = vmatpush2.msra.mxu0 0.0
        %5465 = vmatprep.subr.mxu0 0.0
        %5466 = vmatpush2.msra.mxu0 0.0
        %5467 = vmatprep.subr.mxu0 0.0
        %5468 = vmatpush2.msra.mxu0 0.0
        %5469 = vmatprep.subr.mxu0 0.0
        %5470 = vmatpush2.msra.mxu0 0.0
        %5471 = vmatprep.subr.mxu0 0.0
        %5472 = vmatpush2.msra.mxu0 0.0
        %5473 = vmatprep.subr.mxu0 0.0
        %5474 = vmatpush2.msra.mxu0 0.0
        %5475 = vmatprep.subr.mxu0 0.0
        %5476 = vmatpush2.msra.mxu0 0.0
        %5477 = vmatprep.subr.mxu0 0.0
        %5478 = vmatpush2.msra.mxu0 0.0
        %5479 = vmatprep.mubr.f32.mxu0 0.0
        %v5480 = vand.u32 %v4150, 4294901760
        %v5481 = vsub.f32 %v4150, %v5480
        %5482 = vmatmul.mubr.f32.gmra.mxu0 %v5481
        %v5483 = vpop.f32.mrf.mxu0
        %v5484 = vadd.f32 %v5374, %v5483
        %v5485 = vpop.f32.mrf.mxu0
        %5486 = vmatprep.mubr.f32.mxu0 0.0
        %v5487 = vand.u32 %v4156, 4294901760
        %v5488 = vsub.f32 %v4156, %v5487
        %5489 = vmatmul.mubr.f32.gmra.mxu0 %v5488
        %v5490 = vpop.f32.mrf.mxu0
        %v5491 = vadd.f32 %v5380, %v5490
        %v5492 = vpop.f32.mrf.mxu0
        %5493 = vdwg.mxu0
        %5494 = vmatprep.subr.mxu0 0.0
        %v5495 = vand.u32 %v4206, 4294901760
        %5496 = vmatpush1.msra.mxu0 %v5495
        %5497 = vmatprep.subr.mxu0 0.0
        %v5498 = vand.u32 %v4205, 4294901760
        %5499 = vmatpush1.msra.mxu0 %v5498
        %5500 = vmatprep.subr.mxu0 0.0
        %v5501 = vand.u32 %v4204, 4294901760
        %5502 = vmatpush1.msra.mxu0 %v5501
        %5503 = vmatprep.subr.mxu0 0.0
        %v5504 = vand.u32 %v4203, 4294901760
        %5505 = vmatpush1.msra.mxu0 %v5504
        %5506 = vmatprep.subr.mxu0 0.0
        %v5507 = vand.u32 %v4202, 4294901760
        %5508 = vmatpush1.msra.mxu0 %v5507
        %5509 = vmatprep.subr.mxu0 0.0
        %v5510 = vand.u32 %v4201, 4294901760
        %5511 = vmatpush1.msra.mxu0 %v5510
        %5512 = vmatprep.subr.mxu0 0.0
        %v5513 = vand.u32 %v4200, 4294901760
        %5514 = vmatpush1.msra.mxu0 %v5513
        %5515 = vmatprep.subr.mxu0 0.0
        %v5516 = vand.u32 %v4199, 4294901760
        %5517 = vmatpush1.msra.mxu0 %v5516
        %5518 = vmatprep.subr.mxu0 0.0
        %v5519 = vand.u32 %v4198, 4294901760
        %5520 = vmatpush1.msra.mxu0 %v5519
        %5521 = vmatprep.subr.mxu0 0.0
        %v5522 = vand.u32 %v4197, 4294901760
        %5523 = vmatpush1.msra.mxu0 %v5522
        %5524 = vmatprep.subr.mxu0 0.0
        %v5525 = vand.u32 %v4196, 4294901760
        %5526 = vmatpush1.msra.mxu0 %v5525
        %5527 = vmatprep.subr.mxu0 0.0
        %v5528 = vand.u32 %v4195, 4294901760
        %5529 = vmatpush1.msra.mxu0 %v5528
        %5530 = vmatprep.subr.mxu0 0.0
        %v5531 = vand.u32 %v4194, 4294901760
        %5532 = vmatpush1.msra.mxu0 %v5531
        %5533 = vmatprep.subr.mxu0 0.0
        %v5534 = vand.u32 %v4193, 4294901760
        %5535 = vmatpush1.msra.mxu0 %v5534
        %5536 = vmatprep.subr.mxu0 0.0
        %v5537 = vand.u32 %v4192, 4294901760
        %5538 = vmatpush1.msra.mxu0 %v5537
        %5539 = vmatprep.subr.mxu0 0.0
        %v5540 = vand.u32 %v4191, 4294901760
        %5541 = vmatpush1.msra.mxu0 %v5540
        %5542 = vmatprep.subr.mxu0 0.0
        %5543 = vmatpush2.msra.mxu0 0.0
        %5544 = vmatprep.subr.mxu0 0.0
        %5545 = vmatpush2.msra.mxu0 0.0
        %5546 = vmatprep.subr.mxu0 0.0
        %5547 = vmatpush2.msra.mxu0 0.0
        %5548 = vmatprep.subr.mxu0 0.0
        %5549 = vmatpush2.msra.mxu0 0.0
        %5550 = vmatprep.subr.mxu0 0.0
        %5551 = vmatpush2.msra.mxu0 0.0
        %5552 = vmatprep.subr.mxu0 0.0
        %5553 = vmatpush2.msra.mxu0 0.0
        %5554 = vmatprep.subr.mxu0 0.0
        %5555 = vmatpush2.msra.mxu0 0.0
        %5556 = vmatprep.subr.mxu0 0.0
        %5557 = vmatpush2.msra.mxu0 0.0
        %5558 = vmatprep.subr.mxu0 0.0
        %5559 = vmatpush2.msra.mxu0 0.0
        %5560 = vmatprep.subr.mxu0 0.0
        %5561 = vmatpush2.msra.mxu0 0.0
        %5562 = vmatprep.subr.mxu0 0.0
        %5563 = vmatpush2.msra.mxu0 0.0
        %5564 = vmatprep.subr.mxu0 0.0
        %5565 = vmatpush2.msra.mxu0 0.0
        %5566 = vmatprep.subr.mxu0 0.0
        %5567 = vmatpush2.msra.mxu0 0.0
        %5568 = vmatprep.subr.mxu0 0.0
        %5569 = vmatpush2.msra.mxu0 0.0
        %5570 = vmatprep.subr.mxu0 0.0
        %5571 = vmatpush2.msra.mxu0 0.0
        %5572 = vmatprep.subr.mxu0 0.0
        %5573 = vmatpush2.msra.mxu0 0.0
        %5574 = vmatprep.mubr.f32.mxu0 0.0
        %v5575 = vand.u32 %v4150, 4294901760
        %v5576 = vsub.f32 %v4150, %v5575
        %v5577 = vand.u32 %v5576, 4294901760
        %5578 = vmatmul.mubr.f32.gmra.mxu0 %v5577
        %v5579 = vpop.f32.mrf.mxu0
        %v5580 = vadd.f32 %v5484, %v5579
        %v5581 = vpop.f32.mrf.mxu0
        %5582 = vmatprep.mubr.f32.mxu0 0.0
        %v5583 = vand.u32 %v4156, 4294901760
        %v5584 = vsub.f32 %v4156, %v5583
        %v5585 = vand.u32 %v5584, 4294901760
        %5586 = vmatmul.mubr.f32.gmra.mxu0 %v5585
        %v5587 = vpop.f32.mrf.mxu0
        %v5588 = vadd.f32 %v5491, %v5587
        %v5589 = vpop.f32.mrf.mxu0
        %5590 = vdwg.mxu0
        %5591 = vmatprep.subr.mxu0 0.0
        %v5592 = vand.u32 %v4206, 4294901760
        %v5593 = vsub.f32 %v4206, %v5592
        %v5594 = vand.u32 %v5593, 4294901760
        %5595 = vmatpush1.msra.mxu0 %v5594
        %5596 = vmatprep.subr.mxu0 0.0
        %v5597 = vand.u32 %v4205, 4294901760
        %v5598 = vsub.f32 %v4205, %v5597
        %v5599 = vand.u32 %v5598, 4294901760
        %5600 = vmatpush1.msra.mxu0 %v5599
        %5601 = vmatprep.subr.mxu0 0.0
        %v5602 = vand.u32 %v4204, 4294901760
        %v5603 = vsub.f32 %v4204, %v5602
        %v5604 = vand.u32 %v5603, 4294901760
        %5605 = vmatpush1.msra.mxu0 %v5604
        %5606 = vmatprep.subr.mxu0 0.0
        %v5607 = vand.u32 %v4203, 4294901760
        %v5608 = vsub.f32 %v4203, %v5607
        %v5609 = vand.u32 %v5608, 4294901760
        %5610 = vmatpush1.msra.mxu0 %v5609
        %5611 = vmatprep.subr.mxu0 0.0
        %v5612 = vand.u32 %v4202, 4294901760
        %v5613 = vsub.f32 %v4202, %v5612
        %v5614 = vand.u32 %v5613, 4294901760
        %5615 = vmatpush1.msra.mxu0 %v5614
        %5616 = vmatprep.subr.mxu0 0.0
        %v5617 = vand.u32 %v4201, 4294901760
        %v5618 = vsub.f32 %v4201, %v5617
        %v5619 = vand.u32 %v5618, 4294901760
        %5620 = vmatpush1.msra.mxu0 %v5619
        %5621 = vmatprep.subr.mxu0 0.0
        %v5622 = vand.u32 %v4200, 4294901760
        %v5623 = vsub.f32 %v4200, %v5622
        %v5624 = vand.u32 %v5623, 4294901760
        %5625 = vmatpush1.msra.mxu0 %v5624
        %5626 = vmatprep.subr.mxu0 0.0
        %v5627 = vand.u32 %v4199, 4294901760
        %v5628 = vsub.f32 %v4199, %v5627
        %v5629 = vand.u32 %v5628, 4294901760
        %5630 = vmatpush1.msra.mxu0 %v5629
        %5631 = vmatprep.subr.mxu0 0.0
        %v5632 = vand.u32 %v4198, 4294901760
        %v5633 = vsub.f32 %v4198, %v5632
        %v5634 = vand.u32 %v5633, 4294901760
        %5635 = vmatpush1.msra.mxu0 %v5634
        %5636 = vmatprep.subr.mxu0 0.0
        %v5637 = vand.u32 %v4197, 4294901760
        %v5638 = vsub.f32 %v4197, %v5637
        %v5639 = vand.u32 %v5638, 4294901760
        %5640 = vmatpush1.msra.mxu0 %v5639
        %5641 = vmatprep.subr.mxu0 0.0
        %v5642 = vand.u32 %v4196, 4294901760
        %v5643 = vsub.f32 %v4196, %v5642
        %v5644 = vand.u32 %v5643, 4294901760
        %5645 = vmatpush1.msra.mxu0 %v5644
        %5646 = vmatprep.subr.mxu0 0.0
        %v5647 = vand.u32 %v4195, 4294901760
        %v5648 = vsub.f32 %v4195, %v5647
        %v5649 = vand.u32 %v5648, 4294901760
        %5650 = vmatpush1.msra.mxu0 %v5649
        %5651 = vmatprep.subr.mxu0 0.0
        %v5652 = vand.u32 %v4194, 4294901760
        %v5653 = vsub.f32 %v4194, %v5652
        %v5654 = vand.u32 %v5653, 4294901760
        %5655 = vmatpush1.msra.mxu0 %v5654
        %5656 = vmatprep.subr.mxu0 0.0
        %v5657 = vand.u32 %v4193, 4294901760
        %v5658 = vsub.f32 %v4193, %v5657
        %v5659 = vand.u32 %v5658, 4294901760
        %5660 = vmatpush1.msra.mxu0 %v5659
        %5661 = vmatprep.subr.mxu0 0.0
        %v5662 = vand.u32 %v4192, 4294901760
        %v5663 = vsub.f32 %v4192, %v5662
        %v5664 = vand.u32 %v5663, 4294901760
        %5665 = vmatpush1.msra.mxu0 %v5664
        %5666 = vmatprep.subr.mxu0 0.0
        %v5667 = vand.u32 %v4191, 4294901760
        %v5668 = vsub.f32 %v4191, %v5667
        %v5669 = vand.u32 %v5668, 4294901760
        %5670 = vmatpush1.msra.mxu0 %v5669
        %5671 = vmatprep.subr.mxu0 0.0
        %5672 = vmatpush2.msra.mxu0 0.0
        %5673 = vmatprep.subr.mxu0 0.0
        %5674 = vmatpush2.msra.mxu0 0.0
        %5675 = vmatprep.subr.mxu0 0.0
        %5676 = vmatpush2.msra.mxu0 0.0
        %5677 = vmatprep.subr.mxu0 0.0
        %5678 = vmatpush2.msra.mxu0 0.0
        %5679 = vmatprep.subr.mxu0 0.0
        %5680 = vmatpush2.msra.mxu0 0.0
        %5681 = vmatprep.subr.mxu0 0.0
        %5682 = vmatpush2.msra.mxu0 0.0
        %5683 = vmatprep.subr.mxu0 0.0
        %5684 = vmatpush2.msra.mxu0 0.0
        %5685 = vmatprep.subr.mxu0 0.0
        %5686 = vmatpush2.msra.mxu0 0.0
        %5687 = vmatprep.subr.mxu0 0.0
        %5688 = vmatpush2.msra.mxu0 0.0
        %5689 = vmatprep.subr.mxu0 0.0
        %5690 = vmatpush2.msra.mxu0 0.0
        %5691 = vmatprep.subr.mxu0 0.0
        %5692 = vmatpush2.msra.mxu0 0.0
        %5693 = vmatprep.subr.mxu0 0.0
        %5694 = vmatpush2.msra.mxu0 0.0
        %5695 = vmatprep.subr.mxu0 0.0
        %5696 = vmatpush2.msra.mxu0 0.0
        %5697 = vmatprep.subr.mxu0 0.0
        %5698 = vmatpush2.msra.mxu0 0.0
        %5699 = vmatprep.subr.mxu0 0.0
        %5700 = vmatpush2.msra.mxu0 0.0
        %5701 = vmatprep.subr.mxu0 0.0
        %5702 = vmatpush2.msra.mxu0 0.0
        %5703 = vmatprep.mubr.f32.mxu0 0.0
        %v5704 = vand.u32 %v4150, 4294901760
        %5705 = vmatmul.mubr.f32.gmra.mxu0 %v5704
        %v5706 = vpop.f32.mrf.mxu0
        %v5707 = vadd.f32 %v5580, %v5706
        %v5708 = vpop.f32.mrf.mxu0
        %5709 = vmatprep.mubr.f32.mxu0 0.0
        %v5710 = vand.u32 %v4156, 4294901760
        %5711 = vmatmul.mubr.f32.gmra.mxu0 %v5710
        %v5712 = vpop.f32.mrf.mxu0
        %v5713 = vadd.f32 %v5588, %v5712
        %v5714 = vpop.f32.mrf.mxu0
        %5715 = vdwg.mxu0
        %5716 = vmatprep.subr.mxu0 0.0
        %v5717 = vand.u32 %v4206, 4294901760
        %5718 = vmatpush1.msra.mxu0 %v5717
        %5719 = vmatprep.subr.mxu0 0.0
        %v5720 = vand.u32 %v4205, 4294901760
        %5721 = vmatpush1.msra.mxu0 %v5720
        %5722 = vmatprep.subr.mxu0 0.0
        %v5723 = vand.u32 %v4204, 4294901760
        %5724 = vmatpush1.msra.mxu0 %v5723
        %5725 = vmatprep.subr.mxu0 0.0
        %v5726 = vand.u32 %v4203, 4294901760
        %5727 = vmatpush1.msra.mxu0 %v5726
        %5728 = vmatprep.subr.mxu0 0.0
        %v5729 = vand.u32 %v4202, 4294901760
        %5730 = vmatpush1.msra.mxu0 %v5729
        %5731 = vmatprep.subr.mxu0 0.0
        %v5732 = vand.u32 %v4201, 4294901760
        %5733 = vmatpush1.msra.mxu0 %v5732
        %5734 = vmatprep.subr.mxu0 0.0
        %v5735 = vand.u32 %v4200, 4294901760
        %5736 = vmatpush1.msra.mxu0 %v5735
        %5737 = vmatprep.subr.mxu0 0.0
        %v5738 = vand.u32 %v4199, 4294901760
        %5739 = vmatpush1.msra.mxu0 %v5738
        %5740 = vmatprep.subr.mxu0 0.0
        %v5741 = vand.u32 %v4198, 4294901760
        %5742 = vmatpush1.msra.mxu0 %v5741
        %5743 = vmatprep.subr.mxu0 0.0
        %v5744 = vand.u32 %v4197, 4294901760
        %5745 = vmatpush1.msra.mxu0 %v5744
        %5746 = vmatprep.subr.mxu0 0.0
        %v5747 = vand.u32 %v4196, 4294901760
        %5748 = vmatpush1.msra.mxu0 %v5747
        %5749 = vmatprep.subr.mxu0 0.0
        %v5750 = vand.u32 %v4195, 4294901760
        %5751 = vmatpush1.msra.mxu0 %v5750
        %5752 = vmatprep.subr.mxu0 0.0
        %v5753 = vand.u32 %v4194, 4294901760
        %5754 = vmatpush1.msra.mxu0 %v5753
        %5755 = vmatprep.subr.mxu0 0.0
        %v5756 = vand.u32 %v4193, 4294901760
        %5757 = vmatpush1.msra.mxu0 %v5756
        %5758 = vmatprep.subr.mxu0 0.0
        %v5759 = vand.u32 %v4192, 4294901760
        %5760 = vmatpush1.msra.mxu0 %v5759
        %5761 = vmatprep.subr.mxu0 0.0
        %v5762 = vand.u32 %v4191, 4294901760
        %5763 = vmatpush1.msra.mxu0 %v5762
        %5764 = vmatprep.subr.mxu0 0.0
        %5765 = vmatpush2.msra.mxu0 0.0
        %5766 = vmatprep.subr.mxu0 0.0
        %5767 = vmatpush2.msra.mxu0 0.0
        %5768 = vmatprep.subr.mxu0 0.0
        %5769 = vmatpush2.msra.mxu0 0.0
        %5770 = vmatprep.subr.mxu0 0.0
        %5771 = vmatpush2.msra.mxu0 0.0
        %5772 = vmatprep.subr.mxu0 0.0
        %5773 = vmatpush2.msra.mxu0 0.0
        %5774 = vmatprep.subr.mxu0 0.0
        %5775 = vmatpush2.msra.mxu0 0.0
        %5776 = vmatprep.subr.mxu0 0.0
        %5777 = vmatpush2.msra.mxu0 0.0
        %5778 = vmatprep.subr.mxu0 0.0
        %5779 = vmatpush2.msra.mxu0 0.0
        %5780 = vmatprep.subr.mxu0 0.0
        %5781 = vmatpush2.msra.mxu0 0.0
        %5782 = vmatprep.subr.mxu0 0.0
        %5783 = vmatpush2.msra.mxu0 0.0
        %5784 = vmatprep.subr.mxu0 0.0
        %5785 = vmatpush2.msra.mxu0 0.0
        %5786 = vmatprep.subr.mxu0 0.0
        %5787 = vmatpush2.msra.mxu0 0.0
        %5788 = vmatprep.subr.mxu0 0.0
        %5789 = vmatpush2.msra.mxu0 0.0
        %5790 = vmatprep.subr.mxu0 0.0
        %5791 = vmatpush2.msra.mxu0 0.0
        %5792 = vmatprep.subr.mxu0 0.0
        %5793 = vmatpush2.msra.mxu0 0.0
        %5794 = vmatprep.subr.mxu0 0.0
        %5795 = vmatpush2.msra.mxu0 0.0
        %5796 = vmatprep.mubr.f32.mxu0 0.0
        %v5797 = vand.u32 %v4150, 4294901760
        %5798 = vmatmul.mubr.f32.gmra.mxu0 %v5797
        %v5799 = vpop.f32.mrf.mxu0
        %v5800 = vadd.f32 %v5707, %v5799
        %v5801 = vpop.f32.mrf.mxu0
        %5802 = vmatprep.mubr.f32.mxu0 0.0
        %v5803 = vand.u32 %v4156, 4294901760
        %5804 = vmatmul.mubr.f32.gmra.mxu0 %v5803
        %v5805 = vpop.f32.mrf.mxu0
        %v5806 = vadd.f32 %v5713, %v5805
        %v5807 = vpop.f32.mrf.mxu0
        %5808 = vdwg.mxu0
        %5809 = vst [vmem:[%s325] sm:$0xff] %v5800
        %5810 = vst [vmem:[%s325 + $0x8] sm:$0xff] %v5806
        %s5811 = sand.u32 %s185, 1
        %s5812 = scalar_lea.sflag [#allocation4], %s5811
        %s5813 = sand.u32 %s185, 1
        %s5814 = smul.addr %s5813, 16
        %s5815 = scalar_lea.vmem [#allocation8], %s5814
        // Predicated region
        $region61: #{tpu_custom_call.1} parent=47 // pred_check
          %p5816 = pneg %p195
        $region62: #{tpu_custom_call.1} parent=47 // pred_check_branch
          %5818 = sbr.rel (%p5816) target = $region64
        $region63: #{tpu_custom_call.1} parent=47 // pred_region
          %s5820 = ssub.s32 256, 256
          %5821 = vsyncadd %s5812, %s5820
          %s5822 = smul.addr %s25, 2
          %s5823 = smul.addr %s5822, 128
          %s5824 = scalar_lea.hbm %s7, %s5823
          %s5825 = sshll.u32 %s5815, 4
          %s5826 = int_to_ptr.vmem [resolvable:$true] %s5825
          %5831 = dma.vmem_to_hbm [thread:$0]  %s5826, 256, %s5824, %s5812, 128, 128, 8
        $region64: #{tpu_custom_call.1} parent=47 // pred_fallthru
          _
      $region48: #{tpu_custom_call.1} parent=5 // pred_fallthru
        _
      %p5832 = scmp.le.s32.totalorder 2, %s20
      // Predicated region
      $region65: #{tpu_custom_call.1} parent=5 // pred_check
        %p5833 = pneg %p5832
      $region66: #{tpu_custom_call.1} parent=5 // pred_check_branch
        %5835 = sbr.rel (%p5833) target = $region68
      $region67: #{tpu_custom_call.1} parent=5 // pred_region
        %s5836 = ssub.s32 %s20, 2
        // Predicated region
        $region69: #{tpu_custom_call.1} parent=67 // pred_check
          %p5837 = pneg %p201
        $region70: #{tpu_custom_call.1} parent=67 // pred_check_branch
          %5839 = sbr.rel (%p5837) target = $region72
        $region71: #{tpu_custom_call.1} parent=67 // pred_region
          %s5840 = sand.u32 %s186, 1
          %s5841 = scalar_lea.sflag [#allocation4], %s5840
          %s5842 = sand.u32 %s186, 1
          %s5843 = smul.addr %s5842, 16
          %s5844 = scalar_lea.vmem [#allocation8], %s5843
          %5845 = dma.done %s5841, 256
        $region72: #{tpu_custom_call.1} parent=67 // pred_fallthru
          _
      $region68: #{tpu_custom_call.1} parent=5 // pred_fallthru
        _
    $region6: #{tpu_custom_call.1} parent=1 // loop_footer
      %s24 = sadd.s32 1, %s20
    $region7: #{tpu_custom_call.1} parent=1 // loop_footer_branch
      %19 = sbr.rel target = $region3
    $region8: #{tpu_custom_call.1} parent=1 // loop_exit
      _
    %5846 = vsyncpa [#allocation3], 1
    %s5847 = scalar_lea.sflag [#allocation3], 1
    %5848 = vsyncpa %s5847, 1
    %5849 = vsyncpa [#allocation6], 1
    %5850 = vsyncpa [#allocation4], 1
    %s5851 = scalar_lea.sflag [#allocation4], 1
    %5852 = vsyncpa %s5851, 1

</llo_original>
